<compile_context>
chip_gen: v7x
topology: tpu7x:2x2x1
jax: 0.10.0
libtpu: 0.0.40
codegen_flags: <defaults>
</compile_context>

<pallas_src>
import functools

import jax
import jax.numpy as jnp
from jax.experimental import pallas as pl
from jax.experimental.pallas import tpu as pltpu

CP = 128       # lane-dense pad width for every channel dimension
NC_PAD = 128   # padded head-logit width (sliced back to nc outside the kernel)


# ----------------------------------------------------------------------------
# Pallas kernels
# ----------------------------------------------------------------------------

def _mm_affine_act_kernel(x_ref, w_ref, s_ref, b_ref, o_ref, *, act):
    """o = act((x @ w) * scale + bias); bf16 MXU operands, f32 accumulate."""
    y = jnp.dot(x_ref[...].astype(jnp.bfloat16), w_ref[...],
                preferred_element_type=jnp.float32)
    y = y * s_ref[...] + b_ref[...]
    if act == "relu":
        y = jnp.maximum(y, 0.0)
    o_ref[...] = y


def matmul_affine_act(x, w, scale, bias, act="none", tm_max=256):
    """Row-tiled fused matmul + BN-fold affine + activation."""
    M, K = x.shape
    K2, N = w.shape
    assert K == K2, (K, K2)
    tm = M if (M <= tm_max or M % 8 != 0) else tm_max
    grid = (pl.cdiv(M, tm),)
    return pl.pallas_call(
        functools.partial(_mm_affine_act_kernel, act=act),
        out_shape=jax.ShapeDtypeStruct((M, N), jnp.float32),
        grid=grid,
        in_specs=[
            pl.BlockSpec((tm, K), lambda i: (i, 0)),
            pl.BlockSpec((K, N), lambda i: (0, 0)),
            pl.BlockSpec((1, N), lambda i: (0, 0)),
            pl.BlockSpec((1, N), lambda i: (0, 0)),
        ],
        out_specs=pl.BlockSpec((tm, N), lambda i: (i, 0)),
        compiler_params=pltpu.CompilerParams(dimension_semantics=("parallel",)),
    )(x, w, scale, bias)


def _tail_identity_kernel(h_ref, g_ref, wc_ref, sc_ref, bc_ref, r_ref, o_ref):
    """out = relu((h * gate) @ Wc * sc + bc + resid)   (identity skip path)."""
    hg = h_ref[...] * g_ref[...]
    y = jnp.dot(hg.astype(jnp.bfloat16), wc_ref[...],
                preferred_element_type=jnp.float32)
    y = y * sc_ref[...] + bc_ref[...]
    o_ref[...] = jnp.maximum(y + r_ref[...], 0.0)


def _tail_proj_kernel(h_ref, g_ref, wc_ref, sc_ref, bc_ref,
                      xr_ref, wp_ref, sp_ref, bp_ref, o_ref):
    """out = relu((h*gate) @ Wc * sc + bc + (xres @ Wp * sp + bp))."""
    hg = h_ref[...] * g_ref[...]
    y = jnp.dot(hg.astype(jnp.bfloat16), wc_ref[...],
                preferred_element_type=jnp.float32)
    y = y * sc_ref[...] + bc_ref[...]
    r = jnp.dot(xr_ref[...].astype(jnp.bfloat16), wp_ref[...],
                preferred_element_type=jnp.float32)
    r = r * sp_ref[...] + bp_ref[...]
    o_ref[...] = jnp.maximum(y + r, 0.0)


def fused_tail_identity(h3, gate3, wc, sc, bc, resid3):
    Nb, HW, C = h3.shape
    Co = wc.shape[1]
    return pl.pallas_call(
        _tail_identity_kernel,
        out_shape=jax.ShapeDtypeStruct((Nb, HW, Co), jnp.float32),
        grid=(Nb,),
        in_specs=[
            pl.BlockSpec((None, HW, C), lambda n: (n, 0, 0)),
            pl.BlockSpec((None, 1, C), lambda n: (n, 0, 0)),
            pl.BlockSpec((C, Co), lambda n: (0, 0)),
            pl.BlockSpec((1, Co), lambda n: (0, 0)),
            pl.BlockSpec((1, Co), lambda n: (0, 0)),
            pl.BlockSpec((None, HW, Co), lambda n: (n, 0, 0)),
        ],
        out_specs=pl.BlockSpec((None, HW, Co), lambda n: (n, 0, 0)),
        compiler_params=pltpu.CompilerParams(dimension_semantics=("parallel",)),
    )(h3, gate3, wc, sc, bc, resid3)


def fused_tail_proj(h3, gate3, wc, sc, bc, xres3, wp, sp, bp):
    Nb, HW, C = h3.shape
    Co = wc.shape[1]
    Ci = xres3.shape[2]
    return pl.pallas_call(
        _tail_proj_kernel,
        out_shape=jax.ShapeDtypeStruct((Nb, HW, Co), jnp.float32),
        grid=(Nb,),
        in_specs=[
            pl.BlockSpec((None, HW, C), lambda n: (n, 0, 0)),
            pl.BlockSpec((None, 1, C), lambda n: (n, 0, 0)),
            pl.BlockSpec((C, Co), lambda n: (0, 0)),
            pl.BlockSpec((1, Co), lambda n: (0, 0)),
            pl.BlockSpec((1, Co), lambda n: (0, 0)),
            pl.BlockSpec((None, HW, Ci), lambda n: (n, 0, 0)),
            pl.BlockSpec((Ci, Co), lambda n: (0, 0)),
            pl.BlockSpec((1, Co), lambda n: (0, 0)),
            pl.BlockSpec((1, Co), lambda n: (0, 0)),
        ],
        out_specs=pl.BlockSpec((None, HW, Co), lambda n: (n, 0, 0)),
        compiler_params=pltpu.CompilerParams(dimension_semantics=("parallel",)),
    )(h3, gate3, wc, sc, bc, xres3, wp, sp, bp)


def _se_gate_kernel(h_ref, w1_ref, b1_ref, w2_ref, b2_ref, o_ref):
    """gate = sigmoid(relu(mean_hw(h) @ w1 + b1) @ w2 + b2)."""
    pooled = jnp.mean(h_ref[...], axis=1)                       # (Nb, C)
    t = jnp.dot(pooled.astype(jnp.bfloat16), w1_ref[...],
                preferred_element_type=jnp.float32)
    t = jnp.maximum(t + b1_ref[...], 0.0)
    g = jnp.dot(t.astype(jnp.bfloat16), w2_ref[...],
                preferred_element_type=jnp.float32)
    o_ref[...] = jax.nn.sigmoid(g + b2_ref[...])


def se_gate(h3, w1, b1, w2, b2):
    Nb, HW, C = h3.shape
    Cse = w1.shape[1]
    return pl.pallas_call(
        _se_gate_kernel,
        out_shape=jax.ShapeDtypeStruct((Nb, C), jnp.float32),
        grid=(1,),
        in_specs=[
            pl.BlockSpec((Nb, HW, C), lambda i: (0, 0, 0)),
            pl.BlockSpec((C, Cse), lambda i: (0, 0)),
            pl.BlockSpec((1, Cse), lambda i: (0, 0)),
            pl.BlockSpec((Cse, C), lambda i: (0, 0)),
            pl.BlockSpec((1, C), lambda i: (0, 0)),
        ],
        out_specs=pl.BlockSpec((Nb, C), lambda i: (0, 0)),
    )(h3, w1, b1, w2, b2)


def _head_kernel(x_ref, w_ref, b_ref, o_ref):
    """logits = mean_hw(x) @ w + b  (global avg pool fused with the FC)."""
    pooled = jnp.mean(x_ref[...], axis=1)                       # (Nb, C)
    y = jnp.dot(pooled.astype(jnp.bfloat16), w_ref[...],
                preferred_element_type=jnp.float32)
    o_ref[...] = y + b_ref[...]


def head_fc(x3, w, b):
    Nb, HW, C = x3.shape
    NCp = w.shape[1]
    return pl.pallas_call(
        _head_kernel,
        out_shape=jax.ShapeDtypeStruct((Nb, NCp), jnp.float32),
        grid=(1,),
        in_specs=[
            pl.BlockSpec((Nb, HW, C), lambda i: (0, 0, 0)),
            pl.BlockSpec((C, NCp), lambda i: (0, 0)),
            pl.BlockSpec((1, NCp), lambda i: (0, 0)),
        ],
        out_specs=pl.BlockSpec((Nb, NCp), lambda i: (0, 0)),
    )(x3, w, b)


# ----------------------------------------------------------------------------
# XLA glue: im2col patches (3x3 convs only; 1x1 convs need no patches)
# ----------------------------------------------------------------------------

def _extract_patches(x, kh, kw, stride, padding):
    """x NHWC -> (N, Ho, Wo, kh*kw*C) patches (ordering: ki, kj, c)."""
    N, H, W, C = x.shape
    xp = jnp.pad(x, ((0, 0), (padding, padding), (padding, padding), (0, 0)))
    Ho = (H + 2 * padding - kh) // stride + 1
    Wo = (W + 2 * padding - kw) // stride + 1
    cols = []
    for i in range(kh):
        for j in range(kw):
            cols.append(
                xp[:, i:i + stride * (Ho - 1) + 1:stride,
                       j:j + stride * (Wo - 1) + 1:stride, :]
            )
    return jnp.concatenate(cols, axis=-1), Ho, Wo


def conv_1x1(x, cw, act):
    Nb, H, W, C = x.shape
    y = matmul_affine_act(x.reshape(Nb * H * W, C), cw["w"], cw["s"], cw["b"], act)
    return y.reshape(Nb, H, W, -1)


def conv_3x3(x, cw, stride, act):
    Nb = x.shape[0]
    patches, Ho, Wo = _extract_patches(x, 3, 3, stride, 1)
    patches = patches.astype(jnp.bfloat16)          # halve HBM bytes into the kernel
    y = matmul_affine_act(patches.reshape(Nb * Ho * Wo, -1),
                          cw["w"], cw["s"], cw["b"], act)
    return y.reshape(Nb, Ho, Wo, -1)


# ----------------------------------------------------------------------------
# One-time parameter preparation: pack/pad/fold into kernel-ready layouts
# ----------------------------------------------------------------------------

def _pack_conv(w, groups, cin_pad, cout_pad):
    """PyTorch (Cout, Cin_g, kh, kw) -> dense bf16 (kh*kw*cin_pad, cout_pad),
    block-diagonal over groups, zero elsewhere (lane-dense, group-packed)."""
    Cout, Cin_g, kh, kw = w.shape
    cout_g = Cout // groups
    Wk = jnp.zeros((kh, kw, cin_pad, cout_pad), jnp.float32)
    for g in range(groups):
        wg = jnp.transpose(w[g * cout_g:(g + 1) * cout_g], (2, 3, 1, 0))
        Wk = Wk.at[:, :, g * Cin_g:(g + 1) * Cin_g,
                         g * cout_g:(g + 1) * cout_g].set(wg)
    return Wk.reshape(kh * kw * cin_pad, cout_pad).astype(jnp.bfloat16)


def _pad_vec(v, n, fill=0.0):
    v = v.astype(jnp.float32)
    return jnp.concatenate(
        [v, jnp.full((n - v.shape[0],), fill, jnp.float32)]).reshape(1, n)


def _fold_bn(bn, cout_pad, eps=1e-5):
    scale = bn["gamma"] / jnp.sqrt(bn["var"] + eps)
    bias = bn["beta"] - bn["mean"] * scale
    return _pad_vec(scale, cout_pad, 1.0), _pad_vec(bias, cout_pad, 0.0)


def prepare_params(params, cfg):
    prep = {}
    s, b = _fold_bn(params["stem"]["bn"], CP)
    prep["stem"] = {"w": _pack_conv(params["stem"]["w"], 1, 3, CP), "s": s, "b": b}
    stages = []
    for blocks in params["stages"]:
        pblocks = []
        for p in blocks:
            q = {"stride": p["stride"]}
            sa, ba = _fold_bn(p["a_bn"], CP)
            q["a"] = {"w": _pack_conv(p["a_w"], 1, CP, CP), "s": sa, "b": ba}
            sb_, bb = _fold_bn(p["b_bn"], CP)
            q["b"] = {"w": _pack_conv(p["b_w"], p["groups"], CP, CP),
                      "s": sb_, "b": bb}
            sc, bc = _fold_bn(p["c_bn"], CP)
            q["c"] = {"w": _pack_conv(p["c_w"], 1, CP, CP), "s": sc, "b": bc}
            if "se" in p:
                q["se"] = {"w1": _pack_conv(p["se"]["w1"], 1, CP, CP),
                           "b1": _pad_vec(p["se"]["b1"], CP),
                           "w2": _pack_conv(p["se"]["w2"], 1, CP, CP),
                           "b2": _pad_vec(p["se"]["b2"], CP)}
            if "proj_w" in p:
                sp, bp = _fold_bn(p["proj_bn"], CP)
                q["proj"] = {"w": _pack_conv(p["proj_w"], 1, CP, CP),
                             "s": sp, "b": bp}
            pblocks.append(q)
        stages.append(pblocks)
    prep["stages"] = stages
    hw = params["head"]["w"]                      # (nc, C)
    nc, C = hw.shape
    W = jnp.zeros((CP, NC_PAD), jnp.float32).at[:C, :nc].set(hw.T)
    prep["head"] = {"w": W.astype(jnp.bfloat16),
                    "b": _pad_vec(params["head"]["b"], NC_PAD),
                    "nc": nc}
    return prep


# ----------------------------------------------------------------------------
# AnyNet forward
# ----------------------------------------------------------------------------

def res_bottleneck_block(x, q):
    Nb, H, W, C = x.shape
    h = conv_1x1(x, q["a"], act="relu")
    h = conv_3x3(h, q["b"], q["stride"], act="relu")
    _, Ho, Wo, Cb = h.shape
    h3 = h.reshape(Nb, Ho * Wo, Cb)
    if "se" in q:
        gate = se_gate(h3, q["se"]["w1"], q["se"]["b1"],
                       q["se"]["w2"], q["se"]["b2"])
    else:
        gate = jnp.ones((Nb, Cb), jnp.float32)
    gate3 = gate.reshape(Nb, 1, Cb)
    if "proj" in q:
        s = q["stride"]
        xres3 = x[:, ::s, ::s, :].reshape(Nb, Ho * Wo, C)
        out = fused_tail_proj(h3, gate3, q["c"]["w"], q["c"]["s"], q["c"]["b"],
                              xres3, q["proj"]["w"], q["proj"]["s"], q["proj"]["b"])
    else:
        resid3 = x.reshape(Nb, Ho * Wo, C)
        out = fused_tail_identity(h3, gate3, q["c"]["w"], q["c"]["s"], q["c"]["b"],
                                  resid3)
    return out.reshape(Nb, Ho, Wo, -1)


def anynet_forward(prep, x_nchw):
    """Classification-task AnyNet forward. Returns logits (N, nc)."""
    x = jnp.transpose(x_nchw.astype(jnp.float32), (0, 2, 3, 1))   # NCHW -> NHWC
    x = conv_3x3(x, prep["stem"], stride=2, act="relu")           # stem 3x3 s2
    for blocks in prep["stages"]:
        for q in blocks:
            x = res_bottleneck_block(x, q)
    Nb, H, W, C = x.shape
    logits_p = head_fc(x.reshape(Nb, H * W, C), prep["head"]["w"], prep["head"]["b"])
    return logits_p[:, :prep["head"]["nc"]]


# ----------------------------------------------------------------------------
# Deterministic parameter construction (matches the module's __init__ shapes;
# conv/linear weights ~ N(0, 0.01^2), biases zero, BN gamma=1/beta=0/mean=0/
# var=1 i.e. initialize_from_cfg(model, None)).
# ----------------------------------------------------------------------------

def init_params(key, cfg):
    keys = iter(jax.random.split(key, 512))

    def conv_w(shape):
        return 0.01 * jax.random.normal(next(keys), shape, dtype=jnp.float32)

    def bn(c):
        return {"gamma": jnp.ones((c,), jnp.float32),
                "beta": jnp.zeros((c,), jnp.float32),
                "mean": jnp.zeros((c,), jnp.float32),
                "var": jnp.ones((c,), jnp.float32)}

    params = {"stem": {"w": conv_w((cfg["stem_w"], 3, 3, 3)), "bn": bn(cfg["stem_w"])}}
    stages = []
    prev_w = cfg["stem_w"]
    for d, w, s, bm, gw in zip(cfg["ds"], cfg["ws"], cfg["ss"], cfg["bms"], cfg["gws"]):
        blocks = []
        for i in range(d):
            b_stride = s if i == 0 else 1
            b_w_in = prev_w if i == 0 else w
            w_b = int(round(w * bm))
            num_gs = w_b // gw
            p = {"a_w": conv_w((w_b, b_w_in, 1, 1)), "a_bn": bn(w_b),
                 "b_w": conv_w((w_b, w_b // num_gs, 3, 3)), "b_bn": bn(w_b),
                 "c_w": conv_w((w, w_b, 1, 1)), "c_bn": bn(w),
                 "stride": b_stride, "groups": num_gs}
            if cfg["se_r"]:
                w_se = int(round(b_w_in * cfg["se_r"]))
                p["se"] = {"w1": conv_w((w_se, w_b, 1, 1)),
                           "b1": jnp.zeros((w_se,), jnp.float32),
                           "w2": conv_w((w_b, w_se, 1, 1)),
                           "b2": jnp.zeros((w_b,), jnp.float32)}
            if b_w_in != w or b_stride != 1:
                p["proj_w"] = conv_w((w, b_w_in, 1, 1))
                p["proj_bn"] = bn(w)
            blocks.append(p)
        stages.append(blocks)
        prev_w = w
    params["stages"] = stages
    params["head"] = {"w": conv_w((cfg["nc"], prev_w)),
                      "b": jnp.zeros((cfg["nc"],), jnp.float32)}
    return params


# ----------------------------------------------------------------------------
# main
# ----------------------------------------------------------------------------

if __name__ == "__main__":
    # Small AnyNet config (classification task).  NOTE: self.frozen_layers /
    # self.out_layers / train-mode BN stats are training-time bookkeeping of
    # the nn.Module and do not affect the eval forward pass reproduced here.
    cfg = dict(
        stem_w=8,
        ds=[1, 1],
        ws=[8, 16],
        ss=[1, 2],
        bms=[1.0, 1.0],
        gws=[4, 4],
        se_r=0.25,
        nc=10,
    )

    key = jax.random.PRNGKey(0)
    k_params, k_input = jax.random.split(key)
    raw_params = init_params(k_params, cfg)
    prep = prepare_params(raw_params, cfg)          # one-time pack/pad/fold

    x = jax.random.normal(k_input, (2, 3, 16, 16), dtype=jnp.float32)  # NCHW

    fwd = jax.jit(lambda xin: anynet_forward(prep, xin))
    logits = fwd(x)
    logits = jax.block_until_ready(logits)

    assert logits.shape == (2, cfg["nc"]), logits.shape
    assert bool(jnp.all(jnp.isfinite(logits)))
    print("KERNEL_OK")
</pallas_src>

<mosaic_0001>
module attributes {stable_mosaic.version = 11 : i64} {
  func.func @_mm_affine_act_kernel(%arg0: i32, %arg1: memref<128x27xbf16, #tpu.memory_space<vmem>>, %arg2: memref<27x128xbf16, #tpu.memory_space<vmem>>, %arg3: memref<1x128xf32, #tpu.memory_space<vmem>>, %arg4: memref<1x128xf32, #tpu.memory_space<vmem>>, %arg5: memref<128x128xf32, #tpu.memory_space<vmem>>) attributes {dimension_semantics = [#tpu.dimension_semantics<parallel>], iteration_bounds = array<i64: 1>, scalar_prefetch = 0 : i64, scratch_operands = 0 : i64, tpu.core_type = #tpu.core_type<tc>, window_params = [{transform_indices = @transform_0, window_bounds = array<i64: 128, 27>}, {pipeline_mode = #tpu.pipeline_mode<synchronous>, transform_indices = @transform_1, window_bounds = array<i64: 27, 128>}, {pipeline_mode = #tpu.pipeline_mode<synchronous>, transform_indices = @transform_2, window_bounds = array<i64: 1, 128>}, {pipeline_mode = #tpu.pipeline_mode<synchronous>, transform_indices = @transform_3, window_bounds = array<i64: 1, 128>}, {transform_indices = @transform_4, window_bounds = array<i64: 128, 128>}]} {
    %c0 = arith.constant 0 : index
    %c0_0 = arith.constant 0 : index
    %0 = vector.load %arg1[%c0, %c0_0] : memref<128x27xbf16, #tpu.memory_space<vmem>>, vector<128x27xbf16>
    %c0_1 = arith.constant 0 : index
    %c0_2 = arith.constant 0 : index
    %1 = vector.load %arg2[%c0_1, %c0_2] : memref<27x128xbf16, #tpu.memory_space<vmem>>, vector<27x128xbf16>
    %cst = arith.constant dense<0.000000e+00> : vector<128x128xf32>
    %2 = tpu.matmul %0, %1, %cst {dimension_numbers = #tpu.dot_dimension_numbers<[1], [0], [0], [1], [0, 0, 1, 1], [], []>} : vector<128x27xbf16>, vector<27x128xbf16>, vector<128x128xf32> -> vector<128x128xf32>
    %c0_3 = arith.constant 0 : index
    %c0_4 = arith.constant 0 : index
    %3 = vector.load %arg3[%c0_3, %c0_4] : memref<1x128xf32, #tpu.memory_space<vmem>>, vector<1x128xf32>
    %4 = vector.broadcast %3 : vector<1x128xf32> to vector<128x128xf32>
    %5 = arith.mulf %2, %4 : vector<128x128xf32>
    %c0_5 = arith.constant 0 : index
    %c0_6 = arith.constant 0 : index
    %6 = vector.load %arg4[%c0_5, %c0_6] : memref<1x128xf32, #tpu.memory_space<vmem>>, vector<1x128xf32>
    %7 = vector.broadcast %6 : vector<1x128xf32> to vector<128x128xf32>
    %8 = arith.addf %5, %7 : vector<128x128xf32>
    %cst_7 = arith.constant 0.000000e+00 : f32
    %9 = vector.broadcast %cst_7 : f32 to vector<128x128xf32>
    %10 = arith.maximumf %8, %9 : vector<128x128xf32>
    %c0_8 = arith.constant 0 : index
    %c0_9 = arith.constant 0 : index
    %11 = vector.load %arg5[%c0_8, %c0_9] : memref<128x128xf32, #tpu.memory_space<vmem>>, vector<128x128xf32>
    tpu.vector_store %arg5[%c0_8, %c0_9], %10 {strides = array<i32>} : memref<128x128xf32, #tpu.memory_space<vmem>>, vector<128x128xf32>,
    return
  }
  func.func @transform_0(%arg0: i32) -> (i32, i32) {
    %c0_i32 = arith.constant 0 : i32
    %c0_i32_0 = arith.constant 0 : i32
    return %arg0, %c0_i32 : i32, i32
  }
  func.func @transform_1(%arg0: i32) -> (i32, i32) {
    %c0_i32 = arith.constant 0 : i32
    %c0_i32_0 = arith.constant 0 : i32
    %c0_i32_1 = arith.constant 0 : i32
    return %c0_i32, %c0_i32_0 : i32, i32
  }
  func.func @transform_2(%arg0: i32) -> (i32, i32) {
    %c0_i32 = arith.constant 0 : i32
    %c0_i32_0 = arith.constant 0 : i32
    %c0_i32_1 = arith.constant 0 : i32
    return %c0_i32, %c0_i32_0 : i32, i32
  }
  func.func @transform_3(%arg0: i32) -> (i32, i32) {
    %c0_i32 = arith.constant 0 : i32
    %c0_i32_0 = arith.constant 0 : i32
    %c0_i32_1 = arith.constant 0 : i32
    return %c0_i32, %c0_i32_0 : i32, i32
  }
  func.func @transform_4(%arg0: i32) -> (i32, i32) {
    %c0_i32 = arith.constant 0 : i32
    %c0_i32_0 = arith.constant 0 : i32
    return %arg0, %c0_i32 : i32, i32
  }
}

module attributes {stable_mosaic.version = 11 : i64} {
  func.func @_mm_affine_act_kernel(%arg0: i32, %arg1: memref<128x128xf32, #tpu.memory_space<vmem>>, %arg2: memref<128x128xbf16, #tpu.memory_space<vmem>>, %arg3: memref<1x128xf32, #tpu.memory_space<vmem>>, %arg4: memref<1x128xf32, #tpu.memory_space<vmem>>, %arg5: memref<128x128xf32, #tpu.memory_space<vmem>>) attributes {dimension_semantics = [#tpu.dimension_semantics<parallel>], iteration_bounds = array<i64: 1>, scalar_prefetch = 0 : i64, scratch_operands = 0 : i64, tpu.core_type = #tpu.core_type<tc>, window_params = [{transform_indices = @transform_0, window_bounds = array<i64: 128, 128>}, {pipeline_mode = #tpu.pipeline_mode<synchronous>, transform_indices = @transform_1, window_bounds = array<i64: 128, 128>}, {pipeline_mode = #tpu.pipeline_mode<synchronous>, transform_indices = @transform_2, window_bounds = array<i64: 1, 128>}, {pipeline_mode = #tpu.pipeline_mode<synchronous>, transform_indices = @transform_3, window_bounds = array<i64: 1, 128>}, {transform_indices = @transform_4, window_bounds = array<i64: 128, 128>}]} {
    %c0 = arith.constant 0 : index
    %c0_0 = arith.constant 0 : index
    %0 = vector.load %arg1[%c0, %c0_0] : memref<128x128xf32, #tpu.memory_space<vmem>>, vector<128x128xf32>
    %1 = arith.truncf %0 : vector<128x128xf32> to vector<128x128xbf16>
    %c0_1 = arith.constant 0 : index
    %c0_2 = arith.constant 0 : index
    %2 = vector.load %arg2[%c0_1, %c0_2] : memref<128x128xbf16, #tpu.memory_space<vmem>>, vector<128x128xbf16>
    %cst = arith.constant dense<0.000000e+00> : vector<128x128xf32>
    %3 = tpu.matmul %1, %2, %cst {dimension_numbers = #tpu.dot_dimension_numbers<[1], [0], [0], [1], [0, 0, 1, 1], [], []>} : vector<128x128xbf16>, vector<128x128xbf16>, vector<128x128xf32> -> vector<128x128xf32>
    %c0_3 = arith.constant 0 : index
    %c0_4 = arith.constant 0 : index
    %4 = vector.load %arg3[%c0_3, %c0_4] : memref<1x128xf32, #tpu.memory_space<vmem>>, vector<1x128xf32>
    %5 = vector.broadcast %4 : vector<1x128xf32> to vector<128x128xf32>
    %6 = arith.mulf %3, %5 : vector<128x128xf32>
    %c0_5 = arith.constant 0 : index
    %c0_6 = arith.constant 0 : index
    %7 = vector.load %arg4[%c0_5, %c0_6] : memref<1x128xf32, #tpu.memory_space<vmem>>, vector<1x128xf32>
    %8 = vector.broadcast %7 : vector<1x128xf32> to vector<128x128xf32>
    %9 = arith.addf %6, %8 : vector<128x128xf32>
    %cst_7 = arith.constant 0.000000e+00 : f32
    %10 = vector.broadcast %cst_7 : f32 to vector<128x128xf32>
    %11 = arith.maximumf %9, %10 : vector<128x128xf32>
    %c0_8 = arith.constant 0 : index
    %c0_9 = arith.constant 0 : index
    %12 = vector.load %arg5[%c0_8, %c0_9] : memref<128x128xf32, #tpu.memory_space<vmem>>, vector<128x128xf32>
    tpu.vector_store %arg5[%c0_8, %c0_9], %11 {strides = array<i32>} : memref<128x128xf32, #tpu.memory_space<vmem>>, vector<128x128xf32>,
    return
  }
  func.func @transform_0(%arg0: i32) -> (i32, i32) {
    %c0_i32 = arith.constant 0 : i32
    %c0_i32_0 = arith.constant 0 : i32
    return %arg0, %c0_i32 : i32, i32
  }
  func.func @transform_1(%arg0: i32) -> (i32, i32) {
    %c0_i32 = arith.constant 0 : i32
    %c0_i32_0 = arith.constant 0 : i32
    %c0_i32_1 = arith.constant 0 : i32
    return %c0_i32, %c0_i32_0 : i32, i32
  }
  func.func @transform_2(%arg0: i32) -> (i32, i32) {
    %c0_i32 = arith.constant 0 : i32
    %c0_i32_0 = arith.constant 0 : i32
    %c0_i32_1 = arith.constant 0 : i32
    return %c0_i32, %c0_i32_0 : i32, i32
  }
  func.func @transform_3(%arg0: i32) -> (i32, i32) {
    %c0_i32 = arith.constant 0 : i32
    %c0_i32_0 = arith.constant 0 : i32
    %c0_i32_1 = arith.constant 0 : i32
    return %c0_i32, %c0_i32_0 : i32, i32
  }
  func.func @transform_4(%arg0: i32) -> (i32, i32) {
    %c0_i32 = arith.constant 0 : i32
    %c0_i32_0 = arith.constant 0 : i32
    return %arg0, %c0_i32 : i32, i32
  }
}

module attributes {stable_mosaic.version = 11 : i64} {
  func.func @_mm_affine_act_kernel(%arg0: i32, %arg1: memref<128x1152xbf16, #tpu.memory_space<vmem>>, %arg2: memref<1152x128xbf16, #tpu.memory_space<vmem>>, %arg3: memref<1x128xf32, #tpu.memory_space<vmem>>, %arg4: memref<1x128xf32, #tpu.memory_space<vmem>>, %arg5: memref<128x128xf32, #tpu.memory_space<vmem>>) attributes {dimension_semantics = [#tpu.dimension_semantics<parallel>], iteration_bounds = array<i64: 1>, scalar_prefetch = 0 : i64, scratch_operands = 0 : i64, tpu.core_type = #tpu.core_type<tc>, window_params = [{transform_indices = @transform_0, window_bounds = array<i64: 128, 1152>}, {pipeline_mode = #tpu.pipeline_mode<synchronous>, transform_indices = @transform_1, window_bounds = array<i64: 1152, 128>}, {pipeline_mode = #tpu.pipeline_mode<synchronous>, transform_indices = @transform_2, window_bounds = array<i64: 1, 128>}, {pipeline_mode = #tpu.pipeline_mode<synchronous>, transform_indices = @transform_3, window_bounds = array<i64: 1, 128>}, {transform_indices = @transform_4, window_bounds = array<i64: 128, 128>}]} {
    %c0 = arith.constant 0 : index
    %c0_0 = arith.constant 0 : index
    %0 = vector.load %arg1[%c0, %c0_0] : memref<128x1152xbf16, #tpu.memory_space<vmem>>, vector<128x1152xbf16>
    %c0_1 = arith.constant 0 : index
    %c0_2 = arith.constant 0 : index
    %1 = vector.load %arg2[%c0_1, %c0_2] : memref<1152x128xbf16, #tpu.memory_space<vmem>>, vector<1152x128xbf16>
    %cst = arith.constant dense<0.000000e+00> : vector<128x128xf32>
    %2 = tpu.matmul %0, %1, %cst {dimension_numbers = #tpu.dot_dimension_numbers<[1], [0], [0], [1], [0, 0, 1, 1], [], []>} : vector<128x1152xbf16>, vector<1152x128xbf16>, vector<128x128xf32> -> vector<128x128xf32>
    %c0_3 = arith.constant 0 : index
    %c0_4 = arith.constant 0 : index
    %3 = vector.load %arg3[%c0_3, %c0_4] : memref<1x128xf32, #tpu.memory_space<vmem>>, vector<1x128xf32>
    %4 = vector.broadcast %3 : vector<1x128xf32> to vector<128x128xf32>
    %5 = arith.mulf %2, %4 : vector<128x128xf32>
    %c0_5 = arith.constant 0 : index
    %c0_6 = arith.constant 0 : index
    %6 = vector.load %arg4[%c0_5, %c0_6] : memref<1x128xf32, #tpu.memory_space<vmem>>, vector<1x128xf32>
    %7 = vector.broadcast %6 : vector<1x128xf32> to vector<128x128xf32>
    %8 = arith.addf %5, %7 : vector<128x128xf32>
    %cst_7 = arith.constant 0.000000e+00 : f32
    %9 = vector.broadcast %cst_7 : f32 to vector<128x128xf32>
    %10 = arith.maximumf %8, %9 : vector<128x128xf32>
    %c0_8 = arith.constant 0 : index
    %c0_9 = arith.constant 0 : index
    %11 = vector.load %arg5[%c0_8, %c0_9] : memref<128x128xf32, #tpu.memory_space<vmem>>, vector<128x128xf32>
    tpu.vector_store %arg5[%c0_8, %c0_9], %10 {strides = array<i32>} : memref<128x128xf32, #tpu.memory_space<vmem>>, vector<128x128xf32>,
    return
  }
  func.func @transform_0(%arg0: i32) -> (i32, i32) {
    %c0_i32 = arith.constant 0 : i32
    %c0_i32_0 = arith.constant 0 : i32
    return %arg0, %c0_i32 : i32, i32
  }
  func.func @transform_1(%arg0: i32) -> (i32, i32) {
    %c0_i32 = arith.constant 0 : i32
    %c0_i32_0 = arith.constant 0 : i32
    %c0_i32_1 = arith.constant 0 : i32
    return %c0_i32, %c0_i32_0 : i32, i32
  }
  func.func @transform_2(%arg0: i32) -> (i32, i32) {
    %c0_i32 = arith.constant 0 : i32
    %c0_i32_0 = arith.constant 0 : i32
    %c0_i32_1 = arith.constant 0 : i32
    return %c0_i32, %c0_i32_0 : i32, i32
  }
  func.func @transform_3(%arg0: i32) -> (i32, i32) {
    %c0_i32 = arith.constant 0 : i32
    %c0_i32_0 = arith.constant 0 : i32
    %c0_i32_1 = arith.constant 0 : i32
    return %c0_i32, %c0_i32_0 : i32, i32
  }
  func.func @transform_4(%arg0: i32) -> (i32, i32) {
    %c0_i32 = arith.constant 0 : i32
    %c0_i32_0 = arith.constant 0 : i32
    return %arg0, %c0_i32 : i32, i32
  }
}

module attributes {stable_mosaic.version = 11 : i64} {
  func.func @_se_gate_kernel(%arg0: i32, %arg1: memref<2x64x128xf32, #tpu.memory_space<vmem>>, %arg2: memref<128x128xbf16, #tpu.memory_space<vmem>>, %arg3: memref<1x128xf32, #tpu.memory_space<vmem>>, %arg4: memref<128x128xbf16, #tpu.memory_space<vmem>>, %arg5: memref<1x128xf32, #tpu.memory_space<vmem>>, %arg6: memref<2x128xf32, #tpu.memory_space<vmem>>) attributes {dimension_semantics = [#tpu.dimension_semantics<arbitrary>], iteration_bounds = array<i64: 1>, scalar_prefetch = 0 : i64, scratch_operands = 0 : i64, tpu.core_type = #tpu.core_type<tc>, window_params = [{pipeline_mode = #tpu.pipeline_mode<synchronous>, transform_indices = @transform_0, window_bounds = array<i64: 2, 64, 128>}, {pipeline_mode = #tpu.pipeline_mode<synchronous>, transform_indices = @transform_1, window_bounds = array<i64: 128, 128>}, {pipeline_mode = #tpu.pipeline_mode<synchronous>, transform_indices = @transform_2, window_bounds = array<i64: 1, 128>}, {pipeline_mode = #tpu.pipeline_mode<synchronous>, transform_indices = @transform_3, window_bounds = array<i64: 128, 128>}, {pipeline_mode = #tpu.pipeline_mode<synchronous>, transform_indices = @transform_4, window_bounds = array<i64: 1, 128>}, {pipeline_mode = #tpu.pipeline_mode<synchronous>, transform_indices = @transform_5, window_bounds = array<i64: 2, 128>}]} {
    %c0 = arith.constant 0 : index
    %c0_0 = arith.constant 0 : index
    %c0_1 = arith.constant 0 : index
    %0 = vector.load %arg1[%c0, %c0_0, %c0_1] : memref<2x64x128xf32, #tpu.memory_space<vmem>>, vector<2x64x128xf32>
    %cst = arith.constant dense<0.000000e+00> : vector<2x128xf32>
    %1 = vector.multi_reduction <add>, %0, %cst [1] : vector<2x64x128xf32> to vector<2x128xf32>
    %cst_2 = arith.constant 6.400000e+01 : f32
    %2 = vector.broadcast %cst_2 : f32 to vector<2x128xf32>
    %3 = arith.divf %1, %2 : vector<2x128xf32>
    %4 = arith.truncf %3 : vector<2x128xf32> to vector<2x128xbf16>
    %c0_3 = arith.constant 0 : index
    %c0_4 = arith.constant 0 : index
    %5 = vector.load %arg2[%c0_3, %c0_4] : memref<128x128xbf16, #tpu.memory_space<vmem>>, vector<128x128xbf16>
    %cst_5 = arith.constant dense<0.000000e+00> : vector<2x128xf32>
    %6 = tpu.matmul %4, %5, %cst_5 {dimension_numbers = #tpu.dot_dimension_numbers<[1], [0], [0], [1], [0, 0, 1, 1], [], []>} : vector<2x128xbf16>, vector<128x128xbf16>, vector<2x128xf32> -> vector<2x128xf32>
    %c0_6 = arith.constant 0 : index
    %c0_7 = arith.constant 0 : index
    %7 = vector.load %arg3[%c0_6, %c0_7] : memref<1x128xf32, #tpu.memory_space<vmem>>, vector<1x128xf32>
    %8 = vector.broadcast %7 : vector<1x128xf32> to vector<2x128xf32>
    %9 = arith.addf %6, %8 : vector<2x128xf32>
    %cst_8 = arith.constant 0.000000e+00 : f32
    %10 = vector.broadcast %cst_8 : f32 to vector<2x128xf32>
    %11 = arith.maximumf %9, %10 : vector<2x128xf32>
    %12 = arith.truncf %11 : vector<2x128xf32> to vector<2x128xbf16>
    %c0_9 = arith.constant 0 : index
    %c0_10 = arith.constant 0 : index
    %13 = vector.load %arg4[%c0_9, %c0_10] : memref<128x128xbf16, #tpu.memory_space<vmem>>, vector<128x128xbf16>
    %cst_11 = arith.constant dense<0.000000e+00> : vector<2x128xf32>
    %14 = tpu.matmul %12, %13, %cst_11 {dimension_numbers = #tpu.dot_dimension_numbers<[1], [0], [0], [1], [0, 0, 1, 1], [], []>} : vector<2x128xbf16>, vector<128x128xbf16>, vector<2x128xf32> -> vector<2x128xf32>
    %c0_12 = arith.constant 0 : index
    %c0_13 = arith.constant 0 : index
    %15 = vector.load %arg5[%c0_12, %c0_13] : memref<1x128xf32, #tpu.memory_space<vmem>>, vector<1x128xf32>
    %16 = vector.broadcast %15 : vector<1x128xf32> to vector<2x128xf32>
    %17 = arith.addf %14, %16 : vector<2x128xf32>
    %18 = arith.negf %17 : vector<2x128xf32>
    %19 = math.exp %18 : vector<2x128xf32>
    %cst_14 = arith.constant 1.000000e+00 : f32
    %20 = vector.broadcast %cst_14 : f32 to vector<2x128xf32>
    %21 = arith.addf %20, %19 : vector<2x128xf32>
    %22 = arith.divf %20, %21 : vector<2x128xf32>
    %c0_15 = arith.constant 0 : index
    %c0_16 = arith.constant 0 : index
    %23 = vector.load %arg6[%c0_15, %c0_16] : memref<2x128xf32, #tpu.memory_space<vmem>>, vector<2x128xf32>
    tpu.vector_store %arg6[%c0_15, %c0_16], %22 {strides = array<i32>} : memref<2x128xf32, #tpu.memory_space<vmem>>, vector<2x128xf32>,
    return
  }
  func.func @transform_0(%arg0: i32) -> (i32, i32, i32) {
    %c0_i32 = arith.constant 0 : i32
    %c0_i32_0 = arith.constant 0 : i32
    %c0_i32_1 = arith.constant 0 : i32
    %c0_i32_2 = arith.constant 0 : i32
    return %c0_i32, %c0_i32_0, %c0_i32_1 : i32, i32, i32
  }
  func.func @transform_1(%arg0: i32) -> (i32, i32) {
    %c0_i32 = arith.constant 0 : i32
    %c0_i32_0 = arith.constant 0 : i32
    %c0_i32_1 = arith.constant 0 : i32
    return %c0_i32, %c0_i32_0 : i32, i32
  }
  func.func @transform_2(%arg0: i32) -> (i32, i32) {
    %c0_i32 = arith.constant 0 : i32
    %c0_i32_0 = arith.constant 0 : i32
    %c0_i32_1 = arith.constant 0 : i32
    return %c0_i32, %c0_i32_0 : i32, i32
  }
  func.func @transform_3(%arg0: i32) -> (i32, i32) {
    %c0_i32 = arith.constant 0 : i32
    %c0_i32_0 = arith.constant 0 : i32
    %c0_i32_1 = arith.constant 0 : i32
    return %c0_i32, %c0_i32_0 : i32, i32
  }
  func.func @transform_4(%arg0: i32) -> (i32, i32) {
    %c0_i32 = arith.constant 0 : i32
    %c0_i32_0 = arith.constant 0 : i32
    %c0_i32_1 = arith.constant 0 : i32
    return %c0_i32, %c0_i32_0 : i32, i32
  }
  func.func @transform_5(%arg0: i32) -> (i32, i32) {
    %c0_i32 = arith.constant 0 : i32
    %c0_i32_0 = arith.constant 0 : i32
    %c0_i32_1 = arith.constant 0 : i32
    return %c0_i32, %c0_i32_0 : i32, i32
  }
}

module attributes {stable_mosaic.version = 11 : i64} {
  func.func @_tail_identity_kernel(%arg0: i32, %arg1: memref<1x64x128xf32, #tpu.memory_space<vmem>>, %arg2: memref<1x1x128xf32, #tpu.memory_space<vmem>>, %arg3: memref<128x128xbf16, #tpu.memory_space<vmem>>, %arg4: memref<1x128xf32, #tpu.memory_space<vmem>>, %arg5: memref<1x128xf32, #tpu.memory_space<vmem>>, %arg6: memref<1x64x128xf32, #tpu.memory_space<vmem>>, %arg7: memref<1x64x128xf32, #tpu.memory_space<vmem>>) attributes {dimension_semantics = [#tpu.dimension_semantics<parallel>], iteration_bounds = array<i64: 2>, scalar_prefetch = 0 : i64, scratch_operands = 0 : i64, tpu.core_type = #tpu.core_type<tc>, window_params = [{transform_indices = @transform_0, window_bounds = array<i64: 1, 64, 128>}, {transform_indices = @transform_1, window_bounds = array<i64: 1, 1, 128>}, {pipeline_mode = #tpu.pipeline_mode<synchronous>, transform_indices = @transform_2, window_bounds = array<i64: 128, 128>}, {pipeline_mode = #tpu.pipeline_mode<synchronous>, transform_indices = @transform_3, window_bounds = array<i64: 1, 128>}, {pipeline_mode = #tpu.pipeline_mode<synchronous>, transform_indices = @transform_4, window_bounds = array<i64: 1, 128>}, {transform_indices = @transform_5, window_bounds = array<i64: 1, 64, 128>}, {transform_indices = @transform_6, window_bounds = array<i64: 1, 64, 128>}]} {
    %c0 = arith.constant 0 : index
    %c0_0 = arith.constant 0 : index
    %c0_1 = arith.constant 0 : index
    %0 = vector.load %arg1[%c0, %c0_0, %c0_1] : memref<1x64x128xf32, #tpu.memory_space<vmem>>, vector<1x64x128xf32>
    %1 = vector.shape_cast %0 : vector<1x64x128xf32> to vector<64x128xf32>
    %c0_2 = arith.constant 0 : index
    %c0_3 = arith.constant 0 : index
    %c0_4 = arith.constant 0 : index
    %2 = vector.load %arg2[%c0_2, %c0_3, %c0_4] : memref<1x1x128xf32, #tpu.memory_space<vmem>>, vector<1x1x128xf32>
    %3 = vector.shape_cast %2 : vector<1x1x128xf32> to vector<1x128xf32>
    %4 = vector.broadcast %3 : vector<1x128xf32> to vector<64x128xf32>
    %5 = arith.mulf %1, %4 : vector<64x128xf32>
    %6 = arith.truncf %5 : vector<64x128xf32> to vector<64x128xbf16>
    %c0_5 = arith.constant 0 : index
    %c0_6 = arith.constant 0 : index
    %7 = vector.load %arg3[%c0_5, %c0_6] : memref<128x128xbf16, #tpu.memory_space<vmem>>, vector<128x128xbf16>
    %cst = arith.constant dense<0.000000e+00> : vector<64x128xf32>
    %8 = tpu.matmul %6, %7, %cst {dimension_numbers = #tpu.dot_dimension_numbers<[1], [0], [0], [1], [0, 0, 1, 1], [], []>} : vector<64x128xbf16>, vector<128x128xbf16>, vector<64x128xf32> -> vector<64x128xf32>
    %c0_7 = arith.constant 0 : index
    %c0_8 = arith.constant 0 : index
    %9 = vector.load %arg4[%c0_7, %c0_8] : memref<1x128xf32, #tpu.memory_space<vmem>>, vector<1x128xf32>
    %10 = vector.broadcast %9 : vector<1x128xf32> to vector<64x128xf32>
    %11 = arith.mulf %8, %10 : vector<64x128xf32>
    %c0_9 = arith.constant 0 : index
    %c0_10 = arith.constant 0 : index
    %12 = vector.load %arg5[%c0_9, %c0_10] : memref<1x128xf32, #tpu.memory_space<vmem>>, vector<1x128xf32>
    %13 = vector.broadcast %12 : vector<1x128xf32> to vector<64x128xf32>
    %14 = arith.addf %11, %13 : vector<64x128xf32>
    %c0_11 = arith.constant 0 : index
    %c0_12 = arith.constant 0 : index
    %c0_13 = arith.constant 0 : index
    %15 = vector.load %arg6[%c0_11, %c0_12, %c0_13] : memref<1x64x128xf32, #tpu.memory_space<vmem>>, vector<1x64x128xf32>
    %16 = vector.shape_cast %15 : vector<1x64x128xf32> to vector<64x128xf32>
    %17 = arith.addf %14, %16 : vector<64x128xf32>
    %cst_14 = arith.constant 0.000000e+00 : f32
    %18 = vector.broadcast %cst_14 : f32 to vector<64x128xf32>
    %19 = arith.maximumf %17, %18 : vector<64x128xf32>
    %c0_15 = arith.constant 0 : index
    %c0_16 = arith.constant 0 : index
    %c0_17 = arith.constant 0 : index
    %20 = vector.load %arg7[%c0_15, %c0_16, %c0_17] : memref<1x64x128xf32, #tpu.memory_space<vmem>>, vector<1x64x128xf32>
    %21 = vector.shape_cast %20 : vector<1x64x128xf32> to vector<64x128xf32>
    %22 = vector.shape_cast %19 : vector<64x128xf32> to vector<1x64x128xf32>
    tpu.vector_store %arg7[%c0_15, %c0_16, %c0_17], %22 {strides = array<i32>} : memref<1x64x128xf32, #tpu.memory_space<vmem>>, vector<1x64x128xf32>,
    return
  }
  func.func @transform_0(%arg0: i32) -> (i32, i32, i32) {
    %c0_i32 = arith.constant 0 : i32
    %c0_i32_0 = arith.constant 0 : i32
    %c0_i32_1 = arith.constant 0 : i32
    return %arg0, %c0_i32, %c0_i32_0 : i32, i32, i32
  }
  func.func @transform_1(%arg0: i32) -> (i32, i32, i32) {
    %c0_i32 = arith.constant 0 : i32
    %c0_i32_0 = arith.constant 0 : i32
    %c0_i32_1 = arith.constant 0 : i32
    return %arg0, %c0_i32, %c0_i32_0 : i32, i32, i32
  }
  func.func @transform_2(%arg0: i32) -> (i32, i32) {
    %c0_i32 = arith.constant 0 : i32
    %c0_i32_0 = arith.constant 0 : i32
    %c0_i32_1 = arith.constant 0 : i32
    return %c0_i32, %c0_i32_0 : i32, i32
  }
  func.func @transform_3(%arg0: i32) -> (i32, i32) {
    %c0_i32 = arith.constant 0 : i32
    %c0_i32_0 = arith.constant 0 : i32
    %c0_i32_1 = arith.constant 0 : i32
    return %c0_i32, %c0_i32_0 : i32, i32
  }
  func.func @transform_4(%arg0: i32) -> (i32, i32) {
    %c0_i32 = arith.constant 0 : i32
    %c0_i32_0 = arith.constant 0 : i32
    %c0_i32_1 = arith.constant 0 : i32
    return %c0_i32, %c0_i32_0 : i32, i32
  }
  func.func @transform_5(%arg0: i32) -> (i32, i32, i32) {
    %c0_i32 = arith.constant 0 : i32
    %c0_i32_0 = arith.constant 0 : i32
    %c0_i32_1 = arith.constant 0 : i32
    return %arg0, %c0_i32, %c0_i32_0 : i32, i32, i32
  }
  func.func @transform_6(%arg0: i32) -> (i32, i32, i32) {
    %c0_i32 = arith.constant 0 : i32
    %c0_i32_0 = arith.constant 0 : i32
    %c0_i32_1 = arith.constant 0 : i32
    return %arg0, %c0_i32, %c0_i32_0 : i32, i32, i32
  }
}

module attributes {stable_mosaic.version = 11 : i64} {
  func.func @_mm_affine_act_kernel(%arg0: i32, %arg1: memref<32x1152xbf16, #tpu.memory_space<vmem>>, %arg2: memref<1152x128xbf16, #tpu.memory_space<vmem>>, %arg3: memref<1x128xf32, #tpu.memory_space<vmem>>, %arg4: memref<1x128xf32, #tpu.memory_space<vmem>>, %arg5: memref<32x128xf32, #tpu.memory_space<vmem>>) attributes {dimension_semantics = [#tpu.dimension_semantics<parallel>], iteration_bounds = array<i64: 1>, scalar_prefetch = 0 : i64, scratch_operands = 0 : i64, tpu.core_type = #tpu.core_type<tc>, window_params = [{transform_indices = @transform_0, window_bounds = array<i64: 32, 1152>}, {pipeline_mode = #tpu.pipeline_mode<synchronous>, transform_indices = @transform_1, window_bounds = array<i64: 1152, 128>}, {pipeline_mode = #tpu.pipeline_mode<synchronous>, transform_indices = @transform_2, window_bounds = array<i64: 1, 128>}, {pipeline_mode = #tpu.pipeline_mode<synchronous>, transform_indices = @transform_3, window_bounds = array<i64: 1, 128>}, {transform_indices = @transform_4, window_bounds = array<i64: 32, 128>}]} {
    %c0 = arith.constant 0 : index
    %c0_0 = arith.constant 0 : index
    %0 = vector.load %arg1[%c0, %c0_0] : memref<32x1152xbf16, #tpu.memory_space<vmem>>, vector<32x1152xbf16>
    %c0_1 = arith.constant 0 : index
    %c0_2 = arith.constant 0 : index
    %1 = vector.load %arg2[%c0_1, %c0_2] : memref<1152x128xbf16, #tpu.memory_space<vmem>>, vector<1152x128xbf16>
    %cst = arith.constant dense<0.000000e+00> : vector<32x128xf32>
    %2 = tpu.matmul %0, %1, %cst {dimension_numbers = #tpu.dot_dimension_numbers<[1], [0], [0], [1], [0, 0, 1, 1], [], []>} : vector<32x1152xbf16>, vector<1152x128xbf16>, vector<32x128xf32> -> vector<32x128xf32>
    %c0_3 = arith.constant 0 : index
    %c0_4 = arith.constant 0 : index
    %3 = vector.load %arg3[%c0_3, %c0_4] : memref<1x128xf32, #tpu.memory_space<vmem>>, vector<1x128xf32>
    %4 = vector.broadcast %3 : vector<1x128xf32> to vector<32x128xf32>
    %5 = arith.mulf %2, %4 : vector<32x128xf32>
    %c0_5 = arith.constant 0 : index
    %c0_6 = arith.constant 0 : index
    %6 = vector.load %arg4[%c0_5, %c0_6] : memref<1x128xf32, #tpu.memory_space<vmem>>, vector<1x128xf32>
    %7 = vector.broadcast %6 : vector<1x128xf32> to vector<32x128xf32>
    %8 = arith.addf %5, %7 : vector<32x128xf32>
    %cst_7 = arith.constant 0.000000e+00 : f32
    %9 = vector.broadcast %cst_7 : f32 to vector<32x128xf32>
    %10 = arith.maximumf %8, %9 : vector<32x128xf32>
    %c0_8 = arith.constant 0 : index
    %c0_9 = arith.constant 0 : index
    %11 = vector.load %arg5[%c0_8, %c0_9] : memref<32x128xf32, #tpu.memory_space<vmem>>, vector<32x128xf32>
    tpu.vector_store %arg5[%c0_8, %c0_9], %10 {strides = array<i32>} : memref<32x128xf32, #tpu.memory_space<vmem>>, vector<32x128xf32>,
    return
  }
  func.func @transform_0(%arg0: i32) -> (i32, i32) {
    %c0_i32 = arith.constant 0 : i32
    %c0_i32_0 = arith.constant 0 : i32
    return %arg0, %c0_i32 : i32, i32
  }
  func.func @transform_1(%arg0: i32) -> (i32, i32) {
    %c0_i32 = arith.constant 0 : i32
    %c0_i32_0 = arith.constant 0 : i32
    %c0_i32_1 = arith.constant 0 : i32
    return %c0_i32, %c0_i32_0 : i32, i32
  }
  func.func @transform_2(%arg0: i32) -> (i32, i32) {
    %c0_i32 = arith.constant 0 : i32
    %c0_i32_0 = arith.constant 0 : i32
    %c0_i32_1 = arith.constant 0 : i32
    return %c0_i32, %c0_i32_0 : i32, i32
  }
  func.func @transform_3(%arg0: i32) -> (i32, i32) {
    %c0_i32 = arith.constant 0 : i32
    %c0_i32_0 = arith.constant 0 : i32
    %c0_i32_1 = arith.constant 0 : i32
    return %c0_i32, %c0_i32_0 : i32, i32
  }
  func.func @transform_4(%arg0: i32) -> (i32, i32) {
    %c0_i32 = arith.constant 0 : i32
    %c0_i32_0 = arith.constant 0 : i32
    return %arg0, %c0_i32 : i32, i32
  }
}

module attributes {stable_mosaic.version = 11 : i64} {
  func.func @_se_gate_kernel(%arg0: i32, %arg1: memref<2x16x128xf32, #tpu.memory_space<vmem>>, %arg2: memref<128x128xbf16, #tpu.memory_space<vmem>>, %arg3: memref<1x128xf32, #tpu.memory_space<vmem>>, %arg4: memref<128x128xbf16, #tpu.memory_space<vmem>>, %arg5: memref<1x128xf32, #tpu.memory_space<vmem>>, %arg6: memref<2x128xf32, #tpu.memory_space<vmem>>) attributes {dimension_semantics = [#tpu.dimension_semantics<arbitrary>], iteration_bounds = array<i64: 1>, scalar_prefetch = 0 : i64, scratch_operands = 0 : i64, tpu.core_type = #tpu.core_type<tc>, window_params = [{pipeline_mode = #tpu.pipeline_mode<synchronous>, transform_indices = @transform_0, window_bounds = array<i64: 2, 16, 128>}, {pipeline_mode = #tpu.pipeline_mode<synchronous>, transform_indices = @transform_1, window_bounds = array<i64: 128, 128>}, {pipeline_mode = #tpu.pipeline_mode<synchronous>, transform_indices = @transform_2, window_bounds = array<i64: 1, 128>}, {pipeline_mode = #tpu.pipeline_mode<synchronous>, transform_indices = @transform_3, window_bounds = array<i64: 128, 128>}, {pipeline_mode = #tpu.pipeline_mode<synchronous>, transform_indices = @transform_4, window_bounds = array<i64: 1, 128>}, {pipeline_mode = #tpu.pipeline_mode<synchronous>, transform_indices = @transform_5, window_bounds = array<i64: 2, 128>}]} {
    %c0 = arith.constant 0 : index
    %c0_0 = arith.constant 0 : index
    %c0_1 = arith.constant 0 : index
    %0 = vector.load %arg1[%c0, %c0_0, %c0_1] : memref<2x16x128xf32, #tpu.memory_space<vmem>>, vector<2x16x128xf32>
    %cst = arith.constant dense<0.000000e+00> : vector<2x128xf32>
    %1 = vector.multi_reduction <add>, %0, %cst [1] : vector<2x16x128xf32> to vector<2x128xf32>
    %cst_2 = arith.constant 1.600000e+01 : f32
    %2 = vector.broadcast %cst_2 : f32 to vector<2x128xf32>
    %3 = arith.divf %1, %2 : vector<2x128xf32>
    %4 = arith.truncf %3 : vector<2x128xf32> to vector<2x128xbf16>
    %c0_3 = arith.constant 0 : index
    %c0_4 = arith.constant 0 : index
    %5 = vector.load %arg2[%c0_3, %c0_4] : memref<128x128xbf16, #tpu.memory_space<vmem>>, vector<128x128xbf16>
    %cst_5 = arith.constant dense<0.000000e+00> : vector<2x128xf32>
    %6 = tpu.matmul %4, %5, %cst_5 {dimension_numbers = #tpu.dot_dimension_numbers<[1], [0], [0], [1], [0, 0, 1, 1], [], []>} : vector<2x128xbf16>, vector<128x128xbf16>, vector<2x128xf32> -> vector<2x128xf32>
    %c0_6 = arith.constant 0 : index
    %c0_7 = arith.constant 0 : index
    %7 = vector.load %arg3[%c0_6, %c0_7] : memref<1x128xf32, #tpu.memory_space<vmem>>, vector<1x128xf32>
    %8 = vector.broadcast %7 : vector<1x128xf32> to vector<2x128xf32>
    %9 = arith.addf %6, %8 : vector<2x128xf32>
    %cst_8 = arith.constant 0.000000e+00 : f32
    %10 = vector.broadcast %cst_8 : f32 to vector<2x128xf32>
    %11 = arith.maximumf %9, %10 : vector<2x128xf32>
    %12 = arith.truncf %11 : vector<2x128xf32> to vector<2x128xbf16>
    %c0_9 = arith.constant 0 : index
    %c0_10 = arith.constant 0 : index
    %13 = vector.load %arg4[%c0_9, %c0_10] : memref<128x128xbf16, #tpu.memory_space<vmem>>, vector<128x128xbf16>
    %cst_11 = arith.constant dense<0.000000e+00> : vector<2x128xf32>
    %14 = tpu.matmul %12, %13, %cst_11 {dimension_numbers = #tpu.dot_dimension_numbers<[1], [0], [0], [1], [0, 0, 1, 1], [], []>} : vector<2x128xbf16>, vector<128x128xbf16>, vector<2x128xf32> -> vector<2x128xf32>
    %c0_12 = arith.constant 0 : index
    %c0_13 = arith.constant 0 : index
    %15 = vector.load %arg5[%c0_12, %c0_13] : memref<1x128xf32, #tpu.memory_space<vmem>>, vector<1x128xf32>
    %16 = vector.broadcast %15 : vector<1x128xf32> to vector<2x128xf32>
    %17 = arith.addf %14, %16 : vector<2x128xf32>
    %18 = arith.negf %17 : vector<2x128xf32>
    %19 = math.exp %18 : vector<2x128xf32>
    %cst_14 = arith.constant 1.000000e+00 : f32
    %20 = vector.broadcast %cst_14 : f32 to vector<2x128xf32>
    %21 = arith.addf %20, %19 : vector<2x128xf32>
    %22 = arith.divf %20, %21 : vector<2x128xf32>
    %c0_15 = arith.constant 0 : index
    %c0_16 = arith.constant 0 : index
    %23 = vector.load %arg6[%c0_15, %c0_16] : memref<2x128xf32, #tpu.memory_space<vmem>>, vector<2x128xf32>
    tpu.vector_store %arg6[%c0_15, %c0_16], %22 {strides = array<i32>} : memref<2x128xf32, #tpu.memory_space<vmem>>, vector<2x128xf32>,
    return
  }
  func.func @transform_0(%arg0: i32) -> (i32, i32, i32) {
    %c0_i32 = arith.constant 0 : i32
    %c0_i32_0 = arith.constant 0 : i32
    %c0_i32_1 = arith.constant 0 : i32
    %c0_i32_2 = arith.constant 0 : i32
    return %c0_i32, %c0_i32_0, %c0_i32_1 : i32, i32, i32
  }
  func.func @transform_1(%arg0: i32) -> (i32, i32) {
    %c0_i32 = arith.constant 0 : i32
    %c0_i32_0 = arith.constant 0 : i32
    %c0_i32_1 = arith.constant 0 : i32
    return %c0_i32, %c0_i32_0 : i32, i32
  }
  func.func @transform_2(%arg0: i32) -> (i32, i32) {
    %c0_i32 = arith.constant 0 : i32
    %c0_i32_0 = arith.constant 0 : i32
    %c0_i32_1 = arith.constant 0 : i32
    return %c0_i32, %c0_i32_0 : i32, i32
  }
  func.func @transform_3(%arg0: i32) -> (i32, i32) {
    %c0_i32 = arith.constant 0 : i32
    %c0_i32_0 = arith.constant 0 : i32
    %c0_i32_1 = arith.constant 0 : i32
    return %c0_i32, %c0_i32_0 : i32, i32
  }
  func.func @transform_4(%arg0: i32) -> (i32, i32) {
    %c0_i32 = arith.constant 0 : i32
    %c0_i32_0 = arith.constant 0 : i32
    %c0_i32_1 = arith.constant 0 : i32
    return %c0_i32, %c0_i32_0 : i32, i32
  }
  func.func @transform_5(%arg0: i32) -> (i32, i32) {
    %c0_i32 = arith.constant 0 : i32
    %c0_i32_0 = arith.constant 0 : i32
    %c0_i32_1 = arith.constant 0 : i32
    return %c0_i32, %c0_i32_0 : i32, i32
  }
}

module attributes {stable_mosaic.version = 11 : i64} {
  func.func @_tail_proj_kernel(%arg0: i32, %arg1: memref<1x16x128xf32, #tpu.memory_space<vmem>>, %arg2: memref<1x1x128xf32, #tpu.memory_space<vmem>>, %arg3: memref<128x128xbf16, #tpu.memory_space<vmem>>, %arg4: memref<1x128xf32, #tpu.memory_space<vmem>>, %arg5: memref<1x128xf32, #tpu.memory_space<vmem>>, %arg6: memref<1x16x128xf32, #tpu.memory_space<vmem>>, %arg7: memref<128x128xbf16, #tpu.memory_space<vmem>>, %arg8: memref<1x128xf32, #tpu.memory_space<vmem>>, %arg9: memref<1x128xf32, #tpu.memory_space<vmem>>, %arg10: memref<1x16x128xf32, #tpu.memory_space<vmem>>) attributes {dimension_semantics = [#tpu.dimension_semantics<parallel>], iteration_bounds = array<i64: 2>, scalar_prefetch = 0 : i64, scratch_operands = 0 : i64, tpu.core_type = #tpu.core_type<tc>, window_params = [{transform_indices = @transform_0, window_bounds = array<i64: 1, 16, 128>}, {transform_indices = @transform_1, window_bounds = array<i64: 1, 1, 128>}, {pipeline_mode = #tpu.pipeline_mode<synchronous>, transform_indices = @transform_2, window_bounds = array<i64: 128, 128>}, {pipeline_mode = #tpu.pipeline_mode<synchronous>, transform_indices = @transform_3, window_bounds = array<i64: 1, 128>}, {pipeline_mode = #tpu.pipeline_mode<synchronous>, transform_indices = @transform_4, window_bounds = array<i64: 1, 128>}, {transform_indices = @transform_5, window_bounds = array<i64: 1, 16, 128>}, {pipeline_mode = #tpu.pipeline_mode<synchronous>, transform_indices = @transform_6, window_bounds = array<i64: 128, 128>}, {pipeline_mode = #tpu.pipeline_mode<synchronous>, transform_indices = @transform_7, window_bounds = array<i64: 1, 128>}, {pipeline_mode = #tpu.pipeline_mode<synchronous>, transform_indices = @transform_8, window_bounds = array<i64: 1, 128>}, {transform_indices = @transform_9, window_bounds = array<i64: 1, 16, 128>}]} {
    %c0 = arith.constant 0 : index
    %c0_0 = arith.constant 0 : index
    %c0_1 = arith.constant 0 : index
    %0 = vector.load %arg1[%c0, %c0_0, %c0_1] : memref<1x16x128xf32, #tpu.memory_space<vmem>>, vector<1x16x128xf32>
    %1 = vector.shape_cast %0 : vector<1x16x128xf32> to vector<16x128xf32>
    %c0_2 = arith.constant 0 : index
    %c0_3 = arith.constant 0 : index
    %c0_4 = arith.constant 0 : index
    %2 = vector.load %arg2[%c0_2, %c0_3, %c0_4] : memref<1x1x128xf32, #tpu.memory_space<vmem>>, vector<1x1x128xf32>
    %3 = vector.shape_cast %2 : vector<1x1x128xf32> to vector<1x128xf32>
    %4 = vector.broadcast %3 : vector<1x128xf32> to vector<16x128xf32>
    %5 = arith.mulf %1, %4 : vector<16x128xf32>
    %6 = arith.truncf %5 : vector<16x128xf32> to vector<16x128xbf16>
    %c0_5 = arith.constant 0 : index
    %c0_6 = arith.constant 0 : index
    %7 = vector.load %arg3[%c0_5, %c0_6] : memref<128x128xbf16, #tpu.memory_space<vmem>>, vector<128x128xbf16>
    %cst = arith.constant dense<0.000000e+00> : vector<16x128xf32>
    %8 = tpu.matmul %6, %7, %cst {dimension_numbers = #tpu.dot_dimension_numbers<[1], [0], [0], [1], [0, 0, 1, 1], [], []>} : vector<16x128xbf16>, vector<128x128xbf16>, vector<16x128xf32> -> vector<16x128xf32>
    %c0_7 = arith.constant 0 : index
    %c0_8 = arith.constant 0 : index
    %9 = vector.load %arg4[%c0_7, %c0_8] : memref<1x128xf32, #tpu.memory_space<vmem>>, vector<1x128xf32>
    %10 = vector.broadcast %9 : vector<1x128xf32> to vector<16x128xf32>
    %11 = arith.mulf %8, %10 : vector<16x128xf32>
    %c0_9 = arith.constant 0 : index
    %c0_10 = arith.constant 0 : index
    %12 = vector.load %arg5[%c0_9, %c0_10] : memref<1x128xf32, #tpu.memory_space<vmem>>, vector<1x128xf32>
    %13 = vector.broadcast %12 : vector<1x128xf32> to vector<16x128xf32>
    %14 = arith.addf %11, %13 : vector<16x128xf32>
    %c0_11 = arith.constant 0 : index
    %c0_12 = arith.constant 0 : index
    %c0_13 = arith.constant 0 : index
    %15 = vector.load %arg6[%c0_11, %c0_12, %c0_13] : memref<1x16x128xf32, #tpu.memory_space<vmem>>, vector<1x16x128xf32>
    %16 = vector.shape_cast %15 : vector<1x16x128xf32> to vector<16x128xf32>
    %17 = arith.truncf %16 : vector<16x128xf32> to vector<16x128xbf16>
    %c0_14 = arith.constant 0 : index
    %c0_15 = arith.constant 0 : index
    %18 = vector.load %arg7[%c0_14, %c0_15] : memref<128x128xbf16, #tpu.memory_space<vmem>>, vector<128x128xbf16>
    %cst_16 = arith.constant dense<0.000000e+00> : vector<16x128xf32>
    %19 = tpu.matmul %17, %18, %cst_16 {dimension_numbers = #tpu.dot_dimension_numbers<[1], [0], [0], [1], [0, 0, 1, 1], [], []>} : vector<16x128xbf16>, vector<128x128xbf16>, vector<16x128xf32> -> vector<16x128xf32>
    %c0_17 = arith.constant 0 : index
    %c0_18 = arith.constant 0 : index
    %20 = vector.load %arg8[%c0_17, %c0_18] : memref<1x128xf32, #tpu.memory_space<vmem>>, vector<1x128xf32>
    %21 = vector.broadcast %20 : vector<1x128xf32> to vector<16x128xf32>
    %22 = arith.mulf %19, %21 : vector<16x128xf32>
    %c0_19 = arith.constant 0 : index
    %c0_20 = arith.constant 0 : index
    %23 = vector.load %arg9[%c0_19, %c0_20] : memref<1x128xf32, #tpu.memory_space<vmem>>, vector<1x128xf32>
    %24 = vector.broadcast %23 : vector<1x128xf32> to vector<16x128xf32>
    %25 = arith.addf %22, %24 : vector<16x128xf32>
    %26 = arith.addf %14, %25 : vector<16x128xf32>
    %cst_21 = arith.constant 0.000000e+00 : f32
    %27 = vector.broadcast %cst_21 : f32 to vector<16x128xf32>
    %28 = arith.maximumf %26, %27 : vector<16x128xf32>
    %c0_22 = arith.constant 0 : index
    %c0_23 = arith.constant 0 : index
    %c0_24 = arith.constant 0 : index
    %29 = vector.load %arg10[%c0_22, %c0_23, %c0_24] : memref<1x16x128xf32, #tpu.memory_space<vmem>>, vector<1x16x128xf32>
    %30 = vector.shape_cast %29 : vector<1x16x128xf32> to vector<16x128xf32>
    %31 = vector.shape_cast %28 : vector<16x128xf32> to vector<1x16x128xf32>
    tpu.vector_store %arg10[%c0_22, %c0_23, %c0_24], %31 {strides = array<i32>} : memref<1x16x128xf32, #tpu.memory_space<vmem>>, vector<1x16x128xf32>,
    return
  }
  func.func @transform_0(%arg0: i32) -> (i32, i32, i32) {
    %c0_i32 = arith.constant 0 : i32
    %c0_i32_0 = arith.constant 0 : i32
    %c0_i32_1 = arith.constant 0 : i32
    return %arg0, %c0_i32, %c0_i32_0 : i32, i32, i32
  }
  func.func @transform_1(%arg0: i32) -> (i32, i32, i32) {
    %c0_i32 = arith.constant 0 : i32
    %c0_i32_0 = arith.constant 0 : i32
    %c0_i32_1 = arith.constant 0 : i32
    return %arg0, %c0_i32, %c0_i32_0 : i32, i32, i32
  }
  func.func @transform_2(%arg0: i32) -> (i32, i32) {
    %c0_i32 = arith.constant 0 : i32
    %c0_i32_0 = arith.constant 0 : i32
    %c0_i32_1 = arith.constant 0 : i32
    return %c0_i32, %c0_i32_0 : i32, i32
  }
  func.func @transform_3(%arg0: i32) -> (i32, i32) {
    %c0_i32 = arith.constant 0 : i32
    %c0_i32_0 = arith.constant 0 : i32
    %c0_i32_1 = arith.constant 0 : i32
    return %c0_i32, %c0_i32_0 : i32, i32
  }
  func.func @transform_4(%arg0: i32) -> (i32, i32) {
    %c0_i32 = arith.constant 0 : i32
    %c0_i32_0 = arith.constant 0 : i32
    %c0_i32_1 = arith.constant 0 : i32
    return %c0_i32, %c0_i32_0 : i32, i32
  }
  func.func @transform_5(%arg0: i32) -> (i32, i32, i32) {
    %c0_i32 = arith.constant 0 : i32
    %c0_i32_0 = arith.constant 0 : i32
    %c0_i32_1 = arith.constant 0 : i32
    return %arg0, %c0_i32, %c0_i32_0 : i32, i32, i32
  }
  func.func @transform_6(%arg0: i32) -> (i32, i32) {
    %c0_i32 = arith.constant 0 : i32
    %c0_i32_0 = arith.constant 0 : i32
    %c0_i32_1 = arith.constant 0 : i32
    return %c0_i32, %c0_i32_0 : i32, i32
  }
  func.func @transform_7(%arg0: i32) -> (i32, i32) {
    %c0_i32 = arith.constant 0 : i32
    %c0_i32_0 = arith.constant 0 : i32
    %c0_i32_1 = arith.constant 0 : i32
    return %c0_i32, %c0_i32_0 : i32, i32
  }
  func.func @transform_8(%arg0: i32) -> (i32, i32) {
    %c0_i32 = arith.constant 0 : i32
    %c0_i32_0 = arith.constant 0 : i32
    %c0_i32_1 = arith.constant 0 : i32
    return %c0_i32, %c0_i32_0 : i32, i32
  }
  func.func @transform_9(%arg0: i32) -> (i32, i32, i32) {
    %c0_i32 = arith.constant 0 : i32
    %c0_i32_0 = arith.constant 0 : i32
    %c0_i32_1 = arith.constant 0 : i32
    return %arg0, %c0_i32, %c0_i32_0 : i32, i32, i32
  }
}

module attributes {stable_mosaic.version = 11 : i64} {
  func.func @_head_kernel(%arg0: i32, %arg1: memref<2x16x128xf32, #tpu.memory_space<vmem>>, %arg2: memref<128x128xbf16, #tpu.memory_space<vmem>>, %arg3: memref<1x128xf32, #tpu.memory_space<vmem>>, %arg4: memref<2x128xf32, #tpu.memory_space<vmem>>) attributes {dimension_semantics = [#tpu.dimension_semantics<arbitrary>], iteration_bounds = array<i64: 1>, scalar_prefetch = 0 : i64, scratch_operands = 0 : i64, tpu.core_type = #tpu.core_type<tc>, window_params = [{pipeline_mode = #tpu.pipeline_mode<synchronous>, transform_indices = @transform_0, window_bounds = array<i64: 2, 16, 128>}, {pipeline_mode = #tpu.pipeline_mode<synchronous>, transform_indices = @transform_1, window_bounds = array<i64: 128, 128>}, {pipeline_mode = #tpu.pipeline_mode<synchronous>, transform_indices = @transform_2, window_bounds = array<i64: 1, 128>}, {pipeline_mode = #tpu.pipeline_mode<synchronous>, transform_indices = @transform_3, window_bounds = array<i64: 2, 128>}]} {
    %c0 = arith.constant 0 : index
    %c0_0 = arith.constant 0 : index
    %c0_1 = arith.constant 0 : index
    %0 = vector.load %arg1[%c0, %c0_0, %c0_1] : memref<2x16x128xf32, #tpu.memory_space<vmem>>, vector<2x16x128xf32>
    %cst = arith.constant dense<0.000000e+00> : vector<2x128xf32>
    %1 = vector.multi_reduction <add>, %0, %cst [1] : vector<2x16x128xf32> to vector<2x128xf32>
    %cst_2 = arith.constant 1.600000e+01 : f32
    %2 = vector.broadcast %cst_2 : f32 to vector<2x128xf32>
    %3 = arith.divf %1, %2 : vector<2x128xf32>
    %4 = arith.truncf %3 : vector<2x128xf32> to vector<2x128xbf16>
    %c0_3 = arith.constant 0 : index
    %c0_4 = arith.constant 0 : index
    %5 = vector.load %arg2[%c0_3, %c0_4] : memref<128x128xbf16, #tpu.memory_space<vmem>>, vector<128x128xbf16>
    %cst_5 = arith.constant dense<0.000000e+00> : vector<2x128xf32>
    %6 = tpu.matmul %4, %5, %cst_5 {dimension_numbers = #tpu.dot_dimension_numbers<[1], [0], [0], [1], [0, 0, 1, 1], [], []>} : vector<2x128xbf16>, vector<128x128xbf16>, vector<2x128xf32> -> vector<2x128xf32>
    %c0_6 = arith.constant 0 : index
    %c0_7 = arith.constant 0 : index
    %7 = vector.load %arg3[%c0_6, %c0_7] : memref<1x128xf32, #tpu.memory_space<vmem>>, vector<1x128xf32>
    %8 = vector.broadcast %7 : vector<1x128xf32> to vector<2x128xf32>
    %9 = arith.addf %6, %8 : vector<2x128xf32>
    %c0_8 = arith.constant 0 : index
    %c0_9 = arith.constant 0 : index
    %10 = vector.load %arg4[%c0_8, %c0_9] : memref<2x128xf32, #tpu.memory_space<vmem>>, vector<2x128xf32>
    tpu.vector_store %arg4[%c0_8, %c0_9], %9 {strides = array<i32>} : memref<2x128xf32, #tpu.memory_space<vmem>>, vector<2x128xf32>,
    return
  }
  func.func @transform_0(%arg0: i32) -> (i32, i32, i32) {
    %c0_i32 = arith.constant 0 : i32
    %c0_i32_0 = arith.constant 0 : i32
    %c0_i32_1 = arith.constant 0 : i32
    %c0_i32_2 = arith.constant 0 : i32
    return %c0_i32, %c0_i32_0, %c0_i32_1 : i32, i32, i32
  }
  func.func @transform_1(%arg0: i32) -> (i32, i32) {
    %c0_i32 = arith.constant 0 : i32
    %c0_i32_0 = arith.constant 0 : i32
    %c0_i32_1 = arith.constant 0 : i32
    return %c0_i32, %c0_i32_0 : i32, i32
  }
  func.func @transform_2(%arg0: i32) -> (i32, i32) {
    %c0_i32 = arith.constant 0 : i32
    %c0_i32_0 = arith.constant 0 : i32
    %c0_i32_1 = arith.constant 0 : i32
    return %c0_i32, %c0_i32_0 : i32, i32
  }
  func.func @transform_3(%arg0: i32) -> (i32, i32) {
    %c0_i32 = arith.constant 0 : i32
    %c0_i32_0 = arith.constant 0 : i32
    %c0_i32_1 = arith.constant 0 : i32
    return %c0_i32, %c0_i32_0 : i32, i32
  }
}

</mosaic_0001>

<llo_original>
// kernel: _lambda_.10
$region0: #{_lambda_.10}
  #allocation0 [shape = 'u32[]', space=smem, size = 0x4, offset = 0x4, fixed_abs, tag = 'smem constant byte address 0x4 - core index']
  #allocation1 [shape = 'u32[144,128]{1,0:T(1,128)}', space=vmem, size = 0x12000, scoped, tag = 'internal scratch']
  %s0 = inlined_call_operand.vmem [shape: bf16[128,27], index: 0, kind: input, shape index: {}]
  %s1 = inlined_call_operand.vmem [shape: bf16[27,128], index: 1, kind: input, shape index: {}]
  %s2 = inlined_call_operand.vmem [shape: f32[1,128], index: 2, kind: input, shape index: {}]
  %s3 = inlined_call_operand.vmem [shape: f32[1,128], index: 3, kind: input, shape index: {}]
  %s4 = inlined_call_operand.vmem [shape: f32[128,128], index: 4, kind: output, shape index: {}]
  %s5 = sld [smem:[#allocation0]]
  $region26: #{_lambda_.10} parent=0
    _
  %s7 = ssub.s32 1, %s5
  %s8 = scalar_select 0, %s7, %s5
  // Predicated region
  $region2: #{_lambda_.10} parent=0 // pred_check
    _
  $region3: #{_lambda_.10} parent=0 // pred_check_branch
    %10 = sbr.rel (0) target = $region5
  $region4: #{_lambda_.10} parent=0 // pred_region
    _
  $region5: #{_lambda_.10} parent=0 // pred_fallthru
    _
  // Predicated region
  $region6: #{_lambda_.10} parent=0 // pred_check
    _
  $region7: #{_lambda_.10} parent=0 // pred_check_branch
    %12 = sbr.rel (0) target = $region9
  $region8: #{_lambda_.10} parent=0 // pred_region
    _
  $region9: #{_lambda_.10} parent=0 // pred_fallthru
    _
  // Predicated region
  $region10: #{_lambda_.10} parent=0 // pred_check
    _
  $region11: #{_lambda_.10} parent=0 // pred_check_branch
    %14 = sbr.rel (0) target = $region13
  $region12: #{_lambda_.10} parent=0 // pred_region
    _
  $region13: #{_lambda_.10} parent=0 // pred_fallthru
    _
  // Predicated region
  $region14: #{_lambda_.10} parent=0 // pred_check
    _
  $region15: #{_lambda_.10} parent=0 // pred_check_branch
    %16 = sbr.rel (0) target = $region17
  $region16: #{_lambda_.10} parent=0 // pred_region
    _
  $region17: #{_lambda_.10} parent=0 // pred_fallthru
    _
  %v18 = vld [vmem:[%s0] sm:$0xf]
  %v19 = vld [vmem:[%s0 + $0x4] sm:$0xf]
  %v20 = vld [vmem:[%s0 + $0x8] sm:$0xf]
  %v21 = vld [vmem:[%s0 + $0xc] sm:$0xf]
  %v22 = vld [vmem:[%s0 + $0x10] sm:$0xf]
  %v23 = vld [vmem:[%s0 + $0x14] sm:$0xf]
  %v24 = vld [vmem:[%s0 + $0x18] sm:$0xf]
  %v25 = vld [vmem:[%s0 + $0x1c] sm:$0xf]
  %v26 = vld [vmem:[%s0 + $0x20] sm:$0xf]
  %v27 = vld [vmem:[%s0 + $0x24] sm:$0xf]
  %v28 = vld [vmem:[%s0 + $0x28] sm:$0xf]
  %v29 = vld [vmem:[%s0 + $0x2c] sm:$0xf]
  %v30 = vld [vmem:[%s0 + $0x30] sm:$0xf]
  %v31 = vld [vmem:[%s0 + $0x34] sm:$0xf]
  %v32 = vld [vmem:[%s0 + $0x38] sm:$0xf]
  %v33 = vld [vmem:[%s0 + $0x3c] sm:$0xf]
  %v34 = vld [vmem:[%s1] sm:$0xf]
  %v35 = vld [vmem:[%s1 + $0x4] sm:$0xf]
  %v36 = vld [vmem:[%s1 + $0x8] sm:$0xf]
  %v37 = vld [vmem:[%s1 + $0xc] sm:$0x3]
  %v54 = vunpack.c.l.b16 %v18
  %v55 = vunpack.c.l.b16 %v19
  %v56 = vunpack.c.l.b16 %v20
  %v57 = vunpack.c.l.b16 %v21
  %v58 = vunpack.c.l.b16 %v22
  %v59 = vunpack.c.l.b16 %v23
  %v60 = vunpack.c.l.b16 %v24
  %v61 = vunpack.c.l.b16 %v25
  %v62 = vunpack.c.l.b16 %v26
  %v63 = vunpack.c.l.b16 %v27
  %v64 = vunpack.c.l.b16 %v28
  %v65 = vunpack.c.l.b16 %v29
  %v66 = vunpack.c.l.b16 %v30
  %v67 = vunpack.c.l.b16 %v31
  %v68 = vunpack.c.l.b16 %v32
  %v69 = vunpack.c.l.b16 %v33
  %v70 = vpack.c.b16 %v55, %v54
  %v71 = vpack.c.b16 %v57, %v56
  %v72 = vpack.c.b16 %v59, %v58
  %v73 = vpack.c.b16 %v61, %v60
  %v74 = vpack.c.b16 %v63, %v62
  %v75 = vpack.c.b16 %v65, %v64
  %v76 = vpack.c.b16 %v67, %v66
  %v77 = vpack.c.b16 %v69, %v68
  %v82 = vunpack.c.l.b16 %v34
  %v83 = vunpack.c.l.b16 %v35
  %v84 = vunpack.c.l.b16 %v36
  %v85 = vunpack.c.l.b16 %v37
  %v86 = vpack.c.b16 %v83, %v82
  %v87 = vpack.c.b16 %v85, %v84
  %vm89 = vcmask 220160
  %v91 = vsel %vm89, %v70, 0
  %v94 = vsel %vm89, %v71, 0
  %v97 = vsel %vm89, %v72, 0
  %v100 = vsel %vm89, %v73, 0
  %v103 = vsel %vm89, %v74, 0
  %v106 = vsel %vm89, %v75, 0
  %v109 = vsel %vm89, %v76, 0
  %v112 = vsel %vm89, %v77, 0
  %vm114 = vcmask 1044480
  %vm115 = vcmask 1045504
  %v116 = vsel %vm114, 4294967295, 65535
  %v117 = vsel %vm115, %v116, 0
  %v119 = vand.u32 %v87, %v117
  %121 = vmatprep.subr.bf16.mxu0 0
  %122 = vmatpush1.bf16.msra.mxu0 %v86
  %123 = vmatprep.subr.bf16.mxu0 0
  %124 = vmatpush1.bf16.msra.mxu0 %v119
  %125 = vmatprep.subr.bf16.mxu0 0
  %126 = vmatpush1.bf16.msra.mxu0 0
  %127 = vmatprep.subr.bf16.mxu0 0
  %128 = vmatpush1.bf16.msra.mxu0 0
  %129 = vmatprep.subr.bf16.mxu0 0
  %130 = vmatpush1.bf16.msra.mxu0 0
  %131 = vmatprep.subr.bf16.mxu0 0
  %132 = vmatpush1.bf16.msra.mxu0 0
  %133 = vmatprep.subr.bf16.mxu0 0
  %134 = vmatpush1.bf16.msra.mxu0 0
  %135 = vmatprep.subr.bf16.mxu0 0
  %136 = vmatpush1.bf16.msra.mxu0 0
  %137 = vmatprep.subr.bf16.mxu0 0
  %138 = vmatpush1.bf16.msra.mxu0 0
  %139 = vmatprep.subr.bf16.mxu0 0
  %140 = vmatpush1.bf16.msra.mxu0 0
  %141 = vmatprep.subr.bf16.mxu0 0
  %142 = vmatpush1.bf16.msra.mxu0 0
  %143 = vmatprep.subr.bf16.mxu0 0
  %144 = vmatpush1.bf16.msra.mxu0 0
  %145 = vmatprep.subr.bf16.mxu0 0
  %146 = vmatpush1.bf16.msra.mxu0 0
  %147 = vmatprep.subr.bf16.mxu0 0
  %148 = vmatpush1.bf16.msra.mxu0 0
  %149 = vmatprep.subr.bf16.mxu0 0
  %150 = vmatpush1.bf16.msra.mxu0 0
  %151 = vmatprep.subr.bf16.mxu0 0
  %152 = vmatpush1.bf16.msra.mxu0 0
  %153 = vmatprep.mubr.bf16.mxu0 0
  %154 = vmatmul.mubr.bf16.gmra.mrb[0].mxu0 %v91
  %v155 = vpop.f32.mrb[0].mxu0
  %v156 = vadd.f32 0.0, %v155
  %v157 = vpop.f32.mrb[0].mxu0
  %v158 = vpop.f32.mrb[0].mxu0
  %v159 = vadd.f32 0.0, %v158
  %v160 = vpop.f32.mrb[0].mxu0
  %161 = vmatprep.mubr.bf16.mxu0 0
  %162 = vmatmul.mubr.bf16.gmra.mrb[0].mxu0 %v94
  %v163 = vpop.f32.mrb[0].mxu0
  %v164 = vadd.f32 0.0, %v163
  %v165 = vpop.f32.mrb[0].mxu0
  %v166 = vpop.f32.mrb[0].mxu0
  %v167 = vadd.f32 0.0, %v166
  %v168 = vpop.f32.mrb[0].mxu0
  %169 = vmatprep.mubr.bf16.mxu0 0
  %170 = vmatmul.mubr.bf16.gmra.mrb[0].mxu0 %v97
  %v171 = vpop.f32.mrb[0].mxu0
  %v172 = vadd.f32 0.0, %v171
  %v173 = vpop.f32.mrb[0].mxu0
  %v174 = vpop.f32.mrb[0].mxu0
  %v175 = vadd.f32 0.0, %v174
  %v176 = vpop.f32.mrb[0].mxu0
  %177 = vmatprep.mubr.bf16.mxu0 0
  %178 = vmatmul.mubr.bf16.gmra.mrb[0].mxu0 %v100
  %v179 = vpop.f32.mrb[0].mxu0
  %v180 = vadd.f32 0.0, %v179
  %v181 = vpop.f32.mrb[0].mxu0
  %v182 = vpop.f32.mrb[0].mxu0
  %v183 = vadd.f32 0.0, %v182
  %v184 = vpop.f32.mrb[0].mxu0
  %185 = vmatprep.mubr.bf16.mxu0 0
  %186 = vmatmul.mubr.bf16.gmra.mrb[0].mxu0 %v103
  %v187 = vpop.f32.mrb[0].mxu0
  %v188 = vadd.f32 0.0, %v187
  %v189 = vpop.f32.mrb[0].mxu0
  %v190 = vpop.f32.mrb[0].mxu0
  %v191 = vadd.f32 0.0, %v190
  %v192 = vpop.f32.mrb[0].mxu0
  %193 = vmatprep.mubr.bf16.mxu0 0
  %194 = vmatmul.mubr.bf16.gmra.mrb[0].mxu0 %v106
  %v195 = vpop.f32.mrb[0].mxu0
  %v196 = vadd.f32 0.0, %v195
  %v197 = vpop.f32.mrb[0].mxu0
  %v198 = vpop.f32.mrb[0].mxu0
  %v199 = vadd.f32 0.0, %v198
  %v200 = vpop.f32.mrb[0].mxu0
  %201 = vmatprep.mubr.bf16.mxu0 0
  %202 = vmatmul.mubr.bf16.gmra.mrb[0].mxu0 %v109
  %v203 = vpop.f32.mrb[0].mxu0
  %v204 = vadd.f32 0.0, %v203
  %v205 = vpop.f32.mrb[0].mxu0
  %v206 = vpop.f32.mrb[0].mxu0
  %v207 = vadd.f32 0.0, %v206
  %v208 = vpop.f32.mrb[0].mxu0
  %209 = vmatprep.mubr.bf16.mxu0 0
  %210 = vmatmul.mubr.bf16.gmra.mrb[0].mxu0 %v112
  %v211 = vpop.f32.mrb[0].mxu0
  %v212 = vadd.f32 0.0, %v211
  %v213 = vpop.f32.mrb[0].mxu0
  %v214 = vpop.f32.mrb[0].mxu0
  %v215 = vadd.f32 0.0, %v214
  %v216 = vpop.f32.mrb[0].mxu0
  %217 = vdwg.mxu0
  %v218 = vld [vmem:[%s2] sm:$0x1]
  %v220 = vlaneseq
  %v221 = vshrl.u32 %v220, 7
  %v222 = vsub.s32 0, %v221
  %v223 = vrot.slane %v218, %v222
  %v225 = vmul.f32 %v156, %v223
  %v226 = vmul.f32 %v159, %v223
  %v227 = vmul.f32 %v164, %v223
  %v228 = vmul.f32 %v167, %v223
  %v229 = vmul.f32 %v172, %v223
  %v230 = vmul.f32 %v175, %v223
  %v231 = vmul.f32 %v180, %v223
  %v232 = vmul.f32 %v183, %v223
  %v233 = vmul.f32 %v188, %v223
  %v234 = vmul.f32 %v191, %v223
  %v235 = vmul.f32 %v196, %v223
  %v236 = vmul.f32 %v199, %v223
  %v237 = vmul.f32 %v204, %v223
  %v238 = vmul.f32 %v207, %v223
  %v239 = vmul.f32 %v212, %v223
  %v240 = vmul.f32 %v215, %v223
  %v241 = vld [vmem:[%s3] sm:$0x1]
  %v243 = vlaneseq
  %v244 = vshrl.u32 %v243, 7
  %v245 = vsub.s32 0, %v244
  %v246 = vrot.slane %v241, %v245
  %v248 = vadd.f32 %v225, %v246
  %v249 = vadd.f32 %v226, %v246
  %v250 = vadd.f32 %v227, %v246
  %v251 = vadd.f32 %v228, %v246
  %v252 = vadd.f32 %v229, %v246
  %v253 = vadd.f32 %v230, %v246
  %v254 = vadd.f32 %v231, %v246
  %v255 = vadd.f32 %v232, %v246
  %v256 = vadd.f32 %v233, %v246
  %v257 = vadd.f32 %v234, %v246
  %v258 = vadd.f32 %v235, %v246
  %v259 = vadd.f32 %v236, %v246
  %v260 = vadd.f32 %v237, %v246
  %v261 = vadd.f32 %v238, %v246
  %v262 = vadd.f32 %v239, %v246
  %v263 = vadd.f32 %v240, %v246
  %v264 = vmax.f32 %v248, 0.0
  %v265 = vmax.f32 %v249, 0.0
  %v266 = vmax.f32 %v250, 0.0
  %v267 = vmax.f32 %v251, 0.0
  %v268 = vmax.f32 %v252, 0.0
  %v269 = vmax.f32 %v253, 0.0
  %v270 = vmax.f32 %v254, 0.0
  %v271 = vmax.f32 %v255, 0.0
  %v272 = vmax.f32 %v256, 0.0
  %v273 = vmax.f32 %v257, 0.0
  %v274 = vmax.f32 %v258, 0.0
  %v275 = vmax.f32 %v259, 0.0
  %v276 = vmax.f32 %v260, 0.0
  %v277 = vmax.f32 %v261, 0.0
  %v278 = vmax.f32 %v262, 0.0
  %v279 = vmax.f32 %v263, 0.0
  %280 = vst [vmem:[%s4] sm:$0xff] %v264
  %281 = vst [vmem:[%s4 + $0x8] sm:$0xff] %v265
  %282 = vst [vmem:[%s4 + $0x10] sm:$0xff] %v266
  %283 = vst [vmem:[%s4 + $0x18] sm:$0xff] %v267
  %284 = vst [vmem:[%s4 + $0x20] sm:$0xff] %v268
  %285 = vst [vmem:[%s4 + $0x28] sm:$0xff] %v269
  %286 = vst [vmem:[%s4 + $0x30] sm:$0xff] %v270
  %287 = vst [vmem:[%s4 + $0x38] sm:$0xff] %v271
  %288 = vst [vmem:[%s4 + $0x40] sm:$0xff] %v272
  %289 = vst [vmem:[%s4 + $0x48] sm:$0xff] %v273
  %290 = vst [vmem:[%s4 + $0x50] sm:$0xff] %v274
  %291 = vst [vmem:[%s4 + $0x58] sm:$0xff] %v275
  %292 = vst [vmem:[%s4 + $0x60] sm:$0xff] %v276
  %293 = vst [vmem:[%s4 + $0x68] sm:$0xff] %v277
  %294 = vst [vmem:[%s4 + $0x70] sm:$0xff] %v278
  %295 = vst [vmem:[%s4 + $0x78] sm:$0xff] %v279
  // Predicated region
  $region18: #{_lambda_.10} parent=0 // pred_check
    _
  $region19: #{_lambda_.10} parent=0 // pred_check_branch
    %297 = sbr.rel (0) target = $region21
  $region20: #{_lambda_.10} parent=0 // pred_region
    _
  $region21: #{_lambda_.10} parent=0 // pred_fallthru
    _
  // Predicated region
  $region22: #{_lambda_.10} parent=0 // pred_check
    _
  $region23: #{_lambda_.10} parent=0 // pred_check_branch
    %299 = sbr.rel (0) target = $region25
  $region24: #{_lambda_.10} parent=0 // pred_region
    _
  $region25: #{_lambda_.10} parent=0 // pred_fallthru
    _

// kernel: _lambda_.11
$region0: #{_lambda_.11}
  #allocation0 [shape = 'u32[]', space=smem, size = 0x4, offset = 0x4, fixed_abs, tag = 'smem constant byte address 0x4 - core index']
  #allocation1 [shape = 'u32[144,128]{1,0:T(1,128)}', space=vmem, size = 0x12000, scoped, tag = 'internal scratch']
  %s0 = inlined_call_operand.vmem [shape: f32[128,128], index: 0, kind: input, shape index: {}]
  %s1 = inlined_call_operand.vmem [shape: bf16[128,128], index: 1, kind: input, shape index: {}]
  %s2 = inlined_call_operand.vmem [shape: f32[1,128], index: 2, kind: input, shape index: {}]
  %s3 = inlined_call_operand.vmem [shape: f32[1,128], index: 3, kind: input, shape index: {}]
  %s4 = inlined_call_operand.vmem [shape: f32[128,128], index: 4, kind: output, shape index: {}]
  %s5 = sld [smem:[#allocation0]]
  $region26: #{_lambda_.11} parent=0
    _
  %s7 = ssub.s32 1, %s5
  %s8 = scalar_select 0, %s7, %s5
  // Predicated region
  $region2: #{_lambda_.11} parent=0 // pred_check
    _
  $region3: #{_lambda_.11} parent=0 // pred_check_branch
    %10 = sbr.rel (0) target = $region5
  $region4: #{_lambda_.11} parent=0 // pred_region
    _
  $region5: #{_lambda_.11} parent=0 // pred_fallthru
    _
  // Predicated region
  $region6: #{_lambda_.11} parent=0 // pred_check
    _
  $region7: #{_lambda_.11} parent=0 // pred_check_branch
    %12 = sbr.rel (0) target = $region9
  $region8: #{_lambda_.11} parent=0 // pred_region
    _
  $region9: #{_lambda_.11} parent=0 // pred_fallthru
    _
  // Predicated region
  $region10: #{_lambda_.11} parent=0 // pred_check
    _
  $region11: #{_lambda_.11} parent=0 // pred_check_branch
    %14 = sbr.rel (0) target = $region13
  $region12: #{_lambda_.11} parent=0 // pred_region
    _
  $region13: #{_lambda_.11} parent=0 // pred_fallthru
    _
  // Predicated region
  $region14: #{_lambda_.11} parent=0 // pred_check
    _
  $region15: #{_lambda_.11} parent=0 // pred_check_branch
    %16 = sbr.rel (0) target = $region17
  $region16: #{_lambda_.11} parent=0 // pred_region
    _
  $region17: #{_lambda_.11} parent=0 // pred_fallthru
    _
  %v18 = vld [vmem:[%s0] sm:$0xff]
  %v19 = vld [vmem:[%s0 + $0x8] sm:$0xff]
  %v20 = vld [vmem:[%s0 + $0x10] sm:$0xff]
  %v21 = vld [vmem:[%s0 + $0x18] sm:$0xff]
  %v22 = vld [vmem:[%s0 + $0x20] sm:$0xff]
  %v23 = vld [vmem:[%s0 + $0x28] sm:$0xff]
  %v24 = vld [vmem:[%s0 + $0x30] sm:$0xff]
  %v25 = vld [vmem:[%s0 + $0x38] sm:$0xff]
  %v26 = vld [vmem:[%s0 + $0x40] sm:$0xff]
  %v27 = vld [vmem:[%s0 + $0x48] sm:$0xff]
  %v28 = vld [vmem:[%s0 + $0x50] sm:$0xff]
  %v29 = vld [vmem:[%s0 + $0x58] sm:$0xff]
  %v30 = vld [vmem:[%s0 + $0x60] sm:$0xff]
  %v31 = vld [vmem:[%s0 + $0x68] sm:$0xff]
  %v32 = vld [vmem:[%s0 + $0x70] sm:$0xff]
  %v33 = vld [vmem:[%s0 + $0x78] sm:$0xff]
  %v34 = vpack.c.bf16 %v19, %v18
  %v35 = vpack.c.bf16 %v21, %v20
  %v36 = vpack.c.bf16 %v23, %v22
  %v37 = vpack.c.bf16 %v25, %v24
  %v38 = vpack.c.bf16 %v27, %v26
  %v39 = vpack.c.bf16 %v29, %v28
  %v40 = vpack.c.bf16 %v31, %v30
  %v41 = vpack.c.bf16 %v33, %v32
  %v42 = vld [vmem:[%s1] sm:$0xf]
  %v43 = vld [vmem:[%s1 + $0x4] sm:$0xf]
  %v44 = vld [vmem:[%s1 + $0x8] sm:$0xf]
  %v45 = vld [vmem:[%s1 + $0xc] sm:$0xf]
  %v46 = vld [vmem:[%s1 + $0x10] sm:$0xf]
  %v47 = vld [vmem:[%s1 + $0x14] sm:$0xf]
  %v48 = vld [vmem:[%s1 + $0x18] sm:$0xf]
  %v49 = vld [vmem:[%s1 + $0x1c] sm:$0xf]
  %v50 = vld [vmem:[%s1 + $0x20] sm:$0xf]
  %v51 = vld [vmem:[%s1 + $0x24] sm:$0xf]
  %v52 = vld [vmem:[%s1 + $0x28] sm:$0xf]
  %v53 = vld [vmem:[%s1 + $0x2c] sm:$0xf]
  %v54 = vld [vmem:[%s1 + $0x30] sm:$0xf]
  %v55 = vld [vmem:[%s1 + $0x34] sm:$0xf]
  %v56 = vld [vmem:[%s1 + $0x38] sm:$0xf]
  %v57 = vld [vmem:[%s1 + $0x3c] sm:$0xf]
  %v74 = vunpack.c.l.b16 %v42
  %v75 = vunpack.c.l.b16 %v43
  %v76 = vunpack.c.l.b16 %v44
  %v77 = vunpack.c.l.b16 %v45
  %v78 = vunpack.c.l.b16 %v46
  %v79 = vunpack.c.l.b16 %v47
  %v80 = vunpack.c.l.b16 %v48
  %v81 = vunpack.c.l.b16 %v49
  %v82 = vunpack.c.l.b16 %v50
  %v83 = vunpack.c.l.b16 %v51
  %v84 = vunpack.c.l.b16 %v52
  %v85 = vunpack.c.l.b16 %v53
  %v86 = vunpack.c.l.b16 %v54
  %v87 = vunpack.c.l.b16 %v55
  %v88 = vunpack.c.l.b16 %v56
  %v89 = vunpack.c.l.b16 %v57
  %v90 = vpack.c.b16 %v75, %v74
  %v91 = vpack.c.b16 %v77, %v76
  %v92 = vpack.c.b16 %v79, %v78
  %v93 = vpack.c.b16 %v81, %v80
  %v94 = vpack.c.b16 %v83, %v82
  %v95 = vpack.c.b16 %v85, %v84
  %v96 = vpack.c.b16 %v87, %v86
  %v97 = vpack.c.b16 %v89, %v88
  %106 = vmatprep.subr.bf16.mxu0 0
  %107 = vmatpush1.bf16.msra.mxu0 %v90
  %108 = vmatprep.subr.bf16.mxu0 0
  %109 = vmatpush1.bf16.msra.mxu0 %v91
  %110 = vmatprep.subr.bf16.mxu0 0
  %111 = vmatpush1.bf16.msra.mxu0 %v92
  %112 = vmatprep.subr.bf16.mxu0 0
  %113 = vmatpush1.bf16.msra.mxu0 %v93
  %114 = vmatprep.subr.bf16.mxu0 0
  %115 = vmatpush1.bf16.msra.mxu0 %v94
  %116 = vmatprep.subr.bf16.mxu0 0
  %117 = vmatpush1.bf16.msra.mxu0 %v95
  %118 = vmatprep.subr.bf16.mxu0 0
  %119 = vmatpush1.bf16.msra.mxu0 %v96
  %120 = vmatprep.subr.bf16.mxu0 0
  %121 = vmatpush1.bf16.msra.mxu0 %v97
  %122 = vmatprep.subr.bf16.mxu0 0
  %123 = vmatpush1.bf16.msra.mxu0 0
  %124 = vmatprep.subr.bf16.mxu0 0
  %125 = vmatpush1.bf16.msra.mxu0 0
  %126 = vmatprep.subr.bf16.mxu0 0
  %127 = vmatpush1.bf16.msra.mxu0 0
  %128 = vmatprep.subr.bf16.mxu0 0
  %129 = vmatpush1.bf16.msra.mxu0 0
  %130 = vmatprep.subr.bf16.mxu0 0
  %131 = vmatpush1.bf16.msra.mxu0 0
  %132 = vmatprep.subr.bf16.mxu0 0
  %133 = vmatpush1.bf16.msra.mxu0 0
  %134 = vmatprep.subr.bf16.mxu0 0
  %135 = vmatpush1.bf16.msra.mxu0 0
  %136 = vmatprep.subr.bf16.mxu0 0
  %137 = vmatpush1.bf16.msra.mxu0 0
  %138 = vmatprep.mubr.bf16.mxu0 0
  %139 = vmatmul.mubr.bf16.gmra.mrb[0].mxu0 %v34
  %v140 = vpop.f32.mrb[0].mxu0
  %v141 = vadd.f32 0.0, %v140
  %v142 = vpop.f32.mrb[0].mxu0
  %v143 = vpop.f32.mrb[0].mxu0
  %v144 = vadd.f32 0.0, %v143
  %v145 = vpop.f32.mrb[0].mxu0
  %146 = vmatprep.mubr.bf16.mxu0 0
  %147 = vmatmul.mubr.bf16.gmra.mrb[0].mxu0 %v35
  %v148 = vpop.f32.mrb[0].mxu0
  %v149 = vadd.f32 0.0, %v148
  %v150 = vpop.f32.mrb[0].mxu0
  %v151 = vpop.f32.mrb[0].mxu0
  %v152 = vadd.f32 0.0, %v151
  %v153 = vpop.f32.mrb[0].mxu0
  %154 = vmatprep.mubr.bf16.mxu0 0
  %155 = vmatmul.mubr.bf16.gmra.mrb[0].mxu0 %v36
  %v156 = vpop.f32.mrb[0].mxu0
  %v157 = vadd.f32 0.0, %v156
  %v158 = vpop.f32.mrb[0].mxu0
  %v159 = vpop.f32.mrb[0].mxu0
  %v160 = vadd.f32 0.0, %v159
  %v161 = vpop.f32.mrb[0].mxu0
  %162 = vmatprep.mubr.bf16.mxu0 0
  %163 = vmatmul.mubr.bf16.gmra.mrb[0].mxu0 %v37
  %v164 = vpop.f32.mrb[0].mxu0
  %v165 = vadd.f32 0.0, %v164
  %v166 = vpop.f32.mrb[0].mxu0
  %v167 = vpop.f32.mrb[0].mxu0
  %v168 = vadd.f32 0.0, %v167
  %v169 = vpop.f32.mrb[0].mxu0
  %170 = vmatprep.mubr.bf16.mxu0 0
  %171 = vmatmul.mubr.bf16.gmra.mrb[0].mxu0 %v38
  %v172 = vpop.f32.mrb[0].mxu0
  %v173 = vadd.f32 0.0, %v172
  %v174 = vpop.f32.mrb[0].mxu0
  %v175 = vpop.f32.mrb[0].mxu0
  %v176 = vadd.f32 0.0, %v175
  %v177 = vpop.f32.mrb[0].mxu0
  %178 = vmatprep.mubr.bf16.mxu0 0
  %179 = vmatmul.mubr.bf16.gmra.mrb[0].mxu0 %v39
  %v180 = vpop.f32.mrb[0].mxu0
  %v181 = vadd.f32 0.0, %v180
  %v182 = vpop.f32.mrb[0].mxu0
  %v183 = vpop.f32.mrb[0].mxu0
  %v184 = vadd.f32 0.0, %v183
  %v185 = vpop.f32.mrb[0].mxu0
  %186 = vmatprep.mubr.bf16.mxu0 0
  %187 = vmatmul.mubr.bf16.gmra.mrb[0].mxu0 %v40
  %v188 = vpop.f32.mrb[0].mxu0
  %v189 = vadd.f32 0.0, %v188
  %v190 = vpop.f32.mrb[0].mxu0
  %v191 = vpop.f32.mrb[0].mxu0
  %v192 = vadd.f32 0.0, %v191
  %v193 = vpop.f32.mrb[0].mxu0
  %194 = vmatprep.mubr.bf16.mxu0 0
  %195 = vmatmul.mubr.bf16.gmra.mrb[0].mxu0 %v41
  %v196 = vpop.f32.mrb[0].mxu0
  %v197 = vadd.f32 0.0, %v196
  %v198 = vpop.f32.mrb[0].mxu0
  %v199 = vpop.f32.mrb[0].mxu0
  %v200 = vadd.f32 0.0, %v199
  %v201 = vpop.f32.mrb[0].mxu0
  %202 = vdwg.mxu0
  %v203 = vld [vmem:[%s2] sm:$0x1]
  %v205 = vlaneseq
  %v206 = vshrl.u32 %v205, 7
  %v207 = vsub.s32 0, %v206
  %v208 = vrot.slane %v203, %v207
  %v210 = vmul.f32 %v141, %v208
  %v211 = vmul.f32 %v144, %v208
  %v212 = vmul.f32 %v149, %v208
  %v213 = vmul.f32 %v152, %v208
  %v214 = vmul.f32 %v157, %v208
  %v215 = vmul.f32 %v160, %v208
  %v216 = vmul.f32 %v165, %v208
  %v217 = vmul.f32 %v168, %v208
  %v218 = vmul.f32 %v173, %v208
  %v219 = vmul.f32 %v176, %v208
  %v220 = vmul.f32 %v181, %v208
  %v221 = vmul.f32 %v184, %v208
  %v222 = vmul.f32 %v189, %v208
  %v223 = vmul.f32 %v192, %v208
  %v224 = vmul.f32 %v197, %v208
  %v225 = vmul.f32 %v200, %v208
  %v226 = vld [vmem:[%s3] sm:$0x1]
  %v228 = vlaneseq
  %v229 = vshrl.u32 %v228, 7
  %v230 = vsub.s32 0, %v229
  %v231 = vrot.slane %v226, %v230
  %v233 = vadd.f32 %v210, %v231
  %v234 = vadd.f32 %v211, %v231
  %v235 = vadd.f32 %v212, %v231
  %v236 = vadd.f32 %v213, %v231
  %v237 = vadd.f32 %v214, %v231
  %v238 = vadd.f32 %v215, %v231
  %v239 = vadd.f32 %v216, %v231
  %v240 = vadd.f32 %v217, %v231
  %v241 = vadd.f32 %v218, %v231
  %v242 = vadd.f32 %v219, %v231
  %v243 = vadd.f32 %v220, %v231
  %v244 = vadd.f32 %v221, %v231
  %v245 = vadd.f32 %v222, %v231
  %v246 = vadd.f32 %v223, %v231
  %v247 = vadd.f32 %v224, %v231
  %v248 = vadd.f32 %v225, %v231
  %v249 = vmax.f32 %v233, 0.0
  %v250 = vmax.f32 %v234, 0.0
  %v251 = vmax.f32 %v235, 0.0
  %v252 = vmax.f32 %v236, 0.0
  %v253 = vmax.f32 %v237, 0.0
  %v254 = vmax.f32 %v238, 0.0
  %v255 = vmax.f32 %v239, 0.0
  %v256 = vmax.f32 %v240, 0.0
  %v257 = vmax.f32 %v241, 0.0
  %v258 = vmax.f32 %v242, 0.0
  %v259 = vmax.f32 %v243, 0.0
  %v260 = vmax.f32 %v244, 0.0
  %v261 = vmax.f32 %v245, 0.0
  %v262 = vmax.f32 %v246, 0.0
  %v263 = vmax.f32 %v247, 0.0
  %v264 = vmax.f32 %v248, 0.0
  %265 = vst [vmem:[%s4] sm:$0xff] %v249
  %266 = vst [vmem:[%s4 + $0x8] sm:$0xff] %v250
  %267 = vst [vmem:[%s4 + $0x10] sm:$0xff] %v251
  %268 = vst [vmem:[%s4 + $0x18] sm:$0xff] %v252
  %269 = vst [vmem:[%s4 + $0x20] sm:$0xff] %v253
  %270 = vst [vmem:[%s4 + $0x28] sm:$0xff] %v254
  %271 = vst [vmem:[%s4 + $0x30] sm:$0xff] %v255
  %272 = vst [vmem:[%s4 + $0x38] sm:$0xff] %v256
  %273 = vst [vmem:[%s4 + $0x40] sm:$0xff] %v257
  %274 = vst [vmem:[%s4 + $0x48] sm:$0xff] %v258
  %275 = vst [vmem:[%s4 + $0x50] sm:$0xff] %v259
  %276 = vst [vmem:[%s4 + $0x58] sm:$0xff] %v260
  %277 = vst [vmem:[%s4 + $0x60] sm:$0xff] %v261
  %278 = vst [vmem:[%s4 + $0x68] sm:$0xff] %v262
  %279 = vst [vmem:[%s4 + $0x70] sm:$0xff] %v263
  %280 = vst [vmem:[%s4 + $0x78] sm:$0xff] %v264
  // Predicated region
  $region18: #{_lambda_.11} parent=0 // pred_check
    _
  $region19: #{_lambda_.11} parent=0 // pred_check_branch
    %282 = sbr.rel (0) target = $region21
  $region20: #{_lambda_.11} parent=0 // pred_region
    _
  $region21: #{_lambda_.11} parent=0 // pred_fallthru
    _
  // Predicated region
  $region22: #{_lambda_.11} parent=0 // pred_check
    _
  $region23: #{_lambda_.11} parent=0 // pred_check_branch
    %284 = sbr.rel (0) target = $region25
  $region24: #{_lambda_.11} parent=0 // pred_region
    _
  $region25: #{_lambda_.11} parent=0 // pred_fallthru
    _

// kernel: _lambda_.13
$region0: #{_lambda_.13}
  #allocation0 [shape = 'u32[]', space=smem, size = 0x4, offset = 0x4, fixed_abs, tag = 'smem constant byte address 0x4 - core index']
  #allocation1 [shape = 'u32[144,128]{1,0:T(1,128)}', space=vmem, size = 0x12000, scoped, tag = 'internal scratch']
  %s0 = inlined_call_operand.vmem [shape: f32[2,64,128], index: 0, kind: input, shape index: {}]
  %s1 = inlined_call_operand.vmem [shape: bf16[128,128], index: 1, kind: input, shape index: {}]
  %s2 = inlined_call_operand.vmem [shape: f32[1,128], index: 2, kind: input, shape index: {}, may-alias: {2,4}]
  %s3 = inlined_call_operand.vmem [shape: bf16[128,128], index: 3, kind: input, shape index: {}]
  %s4 = inlined_call_operand.vmem [shape: f32[1,128], index: 4, kind: input, shape index: {}, may-alias: {2,4}]
  %s5 = inlined_call_operand.vmem [shape: f32[2,128], index: 5, kind: output, shape index: {}]
  %s6 = sld [smem:[#allocation0]]
  $region30: #{_lambda_.13} parent=0
    _
  %s8 = ssub.s32 1, %s6
  %s9 = scalar_select 0, %s8, %s6
  // Predicated region
  $region2: #{_lambda_.13} parent=0 // pred_check
    _
  $region3: #{_lambda_.13} parent=0 // pred_check_branch
    %11 = sbr.rel (0) target = $region5
  $region4: #{_lambda_.13} parent=0 // pred_region
    _
  $region5: #{_lambda_.13} parent=0 // pred_fallthru
    _
  // Predicated region
  $region6: #{_lambda_.13} parent=0 // pred_check
    _
  $region7: #{_lambda_.13} parent=0 // pred_check_branch
    %13 = sbr.rel (0) target = $region9
  $region8: #{_lambda_.13} parent=0 // pred_region
    _
  $region9: #{_lambda_.13} parent=0 // pred_fallthru
    _
  // Predicated region
  $region10: #{_lambda_.13} parent=0 // pred_check
    _
  $region11: #{_lambda_.13} parent=0 // pred_check_branch
    %15 = sbr.rel (0) target = $region13
  $region12: #{_lambda_.13} parent=0 // pred_region
    _
  $region13: #{_lambda_.13} parent=0 // pred_fallthru
    _
  // Predicated region
  $region14: #{_lambda_.13} parent=0 // pred_check
    _
  $region15: #{_lambda_.13} parent=0 // pred_check_branch
    %17 = sbr.rel (0) target = $region17
  $region16: #{_lambda_.13} parent=0 // pred_region
    _
  $region17: #{_lambda_.13} parent=0 // pred_fallthru
    _
  // Predicated region
  $region18: #{_lambda_.13} parent=0 // pred_check
    _
  $region19: #{_lambda_.13} parent=0 // pred_check_branch
    %19 = sbr.rel (0) target = $region21
  $region20: #{_lambda_.13} parent=0 // pred_region
    _
  $region21: #{_lambda_.13} parent=0 // pred_fallthru
    _
  %v21 = vld [vmem:[%s0] sm:$0xff]
  %v22 = vld [vmem:[%s0 + $0x8] sm:$0xff]
  %v23 = vld [vmem:[%s0 + $0x10] sm:$0xff]
  %v24 = vld [vmem:[%s0 + $0x18] sm:$0xff]
  %v25 = vld [vmem:[%s0 + $0x20] sm:$0xff]
  %v26 = vld [vmem:[%s0 + $0x28] sm:$0xff]
  %v27 = vld [vmem:[%s0 + $0x30] sm:$0xff]
  %v28 = vld [vmem:[%s0 + $0x38] sm:$0xff]
  %v29 = vld [vmem:[%s0 + $0x40] sm:$0xff]
  %v30 = vld [vmem:[%s0 + $0x48] sm:$0xff]
  %v31 = vld [vmem:[%s0 + $0x50] sm:$0xff]
  %v32 = vld [vmem:[%s0 + $0x58] sm:$0xff]
  %v33 = vld [vmem:[%s0 + $0x60] sm:$0xff]
  %v34 = vld [vmem:[%s0 + $0x68] sm:$0xff]
  %v35 = vld [vmem:[%s0 + $0x70] sm:$0xff]
  %v36 = vld [vmem:[%s0 + $0x78] sm:$0xff]
  %v37 = vadd.f32 %v21, %v22
  %v38 = vadd.f32 %v37, %v23
  %v39 = vadd.f32 %v38, %v24
  %v40 = vadd.f32 %v39, %v25
  %v41 = vadd.f32 %v40, %v26
  %v42 = vadd.f32 %v41, %v27
  %v43 = vadd.f32 %v42, %v28
  %v44 = vrot.slane %v43, 4
  %v45 = vadd.f32 %v43, %v44
  %v46 = vrot.slane %v45, 2
  %v47 = vadd.f32 %v45, %v46
  %v48 = vrot.slane %v47, 1
  %v49 = vadd.f32 %v47, %v48
  %v50 = vadd.f32 %v29, %v30
  %v51 = vadd.f32 %v50, %v31
  %v52 = vadd.f32 %v51, %v32
  %v53 = vadd.f32 %v52, %v33
  %v54 = vadd.f32 %v53, %v34
  %v55 = vadd.f32 %v54, %v35
  %v56 = vadd.f32 %v55, %v36
  %v57 = vrot.slane %v56, 4
  %v58 = vadd.f32 %v56, %v57
  %v59 = vrot.slane %v58, 2
  %v60 = vadd.f32 %v58, %v59
  %v61 = vrot.slane %v60, 1
  %v62 = vadd.f32 %v60, %v61
  %v63 = vrcp.pop 64.0
  %v64 = vmul.f32 %v49, %v63
  %v65 = vmul.f32 %v62, %v63
  %v66 = vpack.c.bf16 %v64, %v64
  %v67 = vpack.c.bf16 %v65, %v65
  %v68 = vld [vmem:[%s1] sm:$0xf]
  %v69 = vld [vmem:[%s1 + $0x4] sm:$0xf]
  %v70 = vld [vmem:[%s1 + $0x8] sm:$0xf]
  %v71 = vld [vmem:[%s1 + $0xc] sm:$0xf]
  %v72 = vld [vmem:[%s1 + $0x10] sm:$0xf]
  %v73 = vld [vmem:[%s1 + $0x14] sm:$0xf]
  %v74 = vld [vmem:[%s1 + $0x18] sm:$0xf]
  %v75 = vld [vmem:[%s1 + $0x1c] sm:$0xf]
  %v76 = vld [vmem:[%s1 + $0x20] sm:$0xf]
  %v77 = vld [vmem:[%s1 + $0x24] sm:$0xf]
  %v78 = vld [vmem:[%s1 + $0x28] sm:$0xf]
  %v79 = vld [vmem:[%s1 + $0x2c] sm:$0xf]
  %v80 = vld [vmem:[%s1 + $0x30] sm:$0xf]
  %v81 = vld [vmem:[%s1 + $0x34] sm:$0xf]
  %v82 = vld [vmem:[%s1 + $0x38] sm:$0xf]
  %v83 = vld [vmem:[%s1 + $0x3c] sm:$0xf]
  %v84 = vld [vmem:[%s2] sm:$0x1]
  %v86 = vlaneseq
  %v87 = vshrl.u32 %v86, 7
  %v88 = vsub.s32 0, %v87
  %v89 = vrot.slane %v84, %v88
  %v93 = vunpack.c.l.b16 %v66
  %v94 = vunpack.c.l.b16 %v67
  %vm95 = vcmask 1041409
  %v96 = vsel %vm95, %v94, %v93
  %v97 = vpack.c.b16 %v96, %v96
  %v115 = vunpack.c.l.b16 %v68
  %v116 = vunpack.c.l.b16 %v69
  %v117 = vunpack.c.l.b16 %v70
  %v118 = vunpack.c.l.b16 %v71
  %v119 = vunpack.c.l.b16 %v72
  %v120 = vunpack.c.l.b16 %v73
  %v121 = vunpack.c.l.b16 %v74
  %v122 = vunpack.c.l.b16 %v75
  %v123 = vunpack.c.l.b16 %v76
  %v124 = vunpack.c.l.b16 %v77
  %v125 = vunpack.c.l.b16 %v78
  %v126 = vunpack.c.l.b16 %v79
  %v127 = vunpack.c.l.b16 %v80
  %v128 = vunpack.c.l.b16 %v81
  %v129 = vunpack.c.l.b16 %v82
  %v130 = vunpack.c.l.b16 %v83
  %v131 = vpack.c.b16 %v116, %v115
  %v132 = vpack.c.b16 %v118, %v117
  %v133 = vpack.c.b16 %v120, %v119
  %v134 = vpack.c.b16 %v122, %v121
  %v135 = vpack.c.b16 %v124, %v123
  %v136 = vpack.c.b16 %v126, %v125
  %v137 = vpack.c.b16 %v128, %v127
  %v138 = vpack.c.b16 %v130, %v129
  %147 = vmatprep.subr.bf16.mxu0 0
  %148 = vmatpush1.bf16.msra.mxu0 %v131
  %149 = vmatprep.subr.bf16.mxu0 0
  %150 = vmatpush1.bf16.msra.mxu0 %v132
  %151 = vmatprep.subr.bf16.mxu0 0
  %152 = vmatpush1.bf16.msra.mxu0 %v133
  %153 = vmatprep.subr.bf16.mxu0 0
  %154 = vmatpush1.bf16.msra.mxu0 %v134
  %155 = vmatprep.subr.bf16.mxu0 0
  %156 = vmatpush1.bf16.msra.mxu0 %v135
  %157 = vmatprep.subr.bf16.mxu0 0
  %158 = vmatpush1.bf16.msra.mxu0 %v136
  %159 = vmatprep.subr.bf16.mxu0 0
  %160 = vmatpush1.bf16.msra.mxu0 %v137
  %161 = vmatprep.subr.bf16.mxu0 0
  %162 = vmatpush1.bf16.msra.mxu0 %v138
  %163 = vmatprep.subr.bf16.mxu0 0
  %164 = vmatpush1.bf16.msra.mxu0 0
  %165 = vmatprep.subr.bf16.mxu0 0
  %166 = vmatpush1.bf16.msra.mxu0 0
  %167 = vmatprep.subr.bf16.mxu0 0
  %168 = vmatpush1.bf16.msra.mxu0 0
  %169 = vmatprep.subr.bf16.mxu0 0
  %170 = vmatpush1.bf16.msra.mxu0 0
  %171 = vmatprep.subr.bf16.mxu0 0
  %172 = vmatpush1.bf16.msra.mxu0 0
  %173 = vmatprep.subr.bf16.mxu0 0
  %174 = vmatpush1.bf16.msra.mxu0 0
  %175 = vmatprep.subr.bf16.mxu0 0
  %176 = vmatpush1.bf16.msra.mxu0 0
  %177 = vmatprep.subr.bf16.mxu0 0
  %178 = vmatpush1.bf16.msra.mxu0 0
  %179 = vmatprep.mubr.bf16.mxu0 0
  %180 = vmatmul.mubr.bf16.gmra.mrb[0].mxu0 %v97
  %v181 = vpop.f32.mrb[0].mxu0
  %v182 = vadd.f32 %v89, %v181
  %v183 = vpop.f32.mrb[0].mxu0
  %v184 = vpop.f32.mrb[0].mxu0
  %v185 = vpop.f32.mrb[0].mxu0
  %186 = vdwg.mxu0
  %v187 = vmax.f32 %v182, 0.0
  %v188 = vpack.c.bf16 %v187, %v187
  %v189 = vld [vmem:[%s3] sm:$0xf]
  %v190 = vld [vmem:[%s3 + $0x4] sm:$0xf]
  %v191 = vld [vmem:[%s3 + $0x8] sm:$0xf]
  %v192 = vld [vmem:[%s3 + $0xc] sm:$0xf]
  %v193 = vld [vmem:[%s3 + $0x10] sm:$0xf]
  %v194 = vld [vmem:[%s3 + $0x14] sm:$0xf]
  %v195 = vld [vmem:[%s3 + $0x18] sm:$0xf]
  %v196 = vld [vmem:[%s3 + $0x1c] sm:$0xf]
  %v197 = vld [vmem:[%s3 + $0x20] sm:$0xf]
  %v198 = vld [vmem:[%s3 + $0x24] sm:$0xf]
  %v199 = vld [vmem:[%s3 + $0x28] sm:$0xf]
  %v200 = vld [vmem:[%s3 + $0x2c] sm:$0xf]
  %v201 = vld [vmem:[%s3 + $0x30] sm:$0xf]
  %v202 = vld [vmem:[%s3 + $0x34] sm:$0xf]
  %v203 = vld [vmem:[%s3 + $0x38] sm:$0xf]
  %v204 = vld [vmem:[%s3 + $0x3c] sm:$0xf]
  %v205 = vld [vmem:[%s4] sm:$0x1]
  %v207 = vlaneseq
  %v208 = vshrl.u32 %v207, 7
  %v209 = vsub.s32 0, %v208
  %v210 = vrot.slane %v205, %v209
  %v228 = vunpack.c.l.b16 %v189
  %v229 = vunpack.c.l.b16 %v190
  %v230 = vunpack.c.l.b16 %v191
  %v231 = vunpack.c.l.b16 %v192
  %v232 = vunpack.c.l.b16 %v193
  %v233 = vunpack.c.l.b16 %v194
  %v234 = vunpack.c.l.b16 %v195
  %v235 = vunpack.c.l.b16 %v196
  %v236 = vunpack.c.l.b16 %v197
  %v237 = vunpack.c.l.b16 %v198
  %v238 = vunpack.c.l.b16 %v199
  %v239 = vunpack.c.l.b16 %v200
  %v240 = vunpack.c.l.b16 %v201
  %v241 = vunpack.c.l.b16 %v202
  %v242 = vunpack.c.l.b16 %v203
  %v243 = vunpack.c.l.b16 %v204
  %v244 = vpack.c.b16 %v229, %v228
  %v245 = vpack.c.b16 %v231, %v230
  %v246 = vpack.c.b16 %v233, %v232
  %v247 = vpack.c.b16 %v235, %v234
  %v248 = vpack.c.b16 %v237, %v236
  %v249 = vpack.c.b16 %v239, %v238
  %v250 = vpack.c.b16 %v241, %v240
  %v251 = vpack.c.b16 %v243, %v242
  %260 = vmatprep.subr.bf16.mxu0 0
  %261 = vmatpush1.bf16.msra.mxu0 %v244
  %262 = vmatprep.subr.bf16.mxu0 0
  %263 = vmatpush1.bf16.msra.mxu0 %v245
  %264 = vmatprep.subr.bf16.mxu0 0
  %265 = vmatpush1.bf16.msra.mxu0 %v246
  %266 = vmatprep.subr.bf16.mxu0 0
  %267 = vmatpush1.bf16.msra.mxu0 %v247
  %268 = vmatprep.subr.bf16.mxu0 0
  %269 = vmatpush1.bf16.msra.mxu0 %v248
  %270 = vmatprep.subr.bf16.mxu0 0
  %271 = vmatpush1.bf16.msra.mxu0 %v249
  %272 = vmatprep.subr.bf16.mxu0 0
  %273 = vmatpush1.bf16.msra.mxu0 %v250
  %274 = vmatprep.subr.bf16.mxu0 0
  %275 = vmatpush1.bf16.msra.mxu0 %v251
  %276 = vmatprep.subr.bf16.mxu0 0
  %277 = vmatpush1.bf16.msra.mxu0 0
  %278 = vmatprep.subr.bf16.mxu0 0
  %279 = vmatpush1.bf16.msra.mxu0 0
  %280 = vmatprep.subr.bf16.mxu0 0
  %281 = vmatpush1.bf16.msra.mxu0 0
  %282 = vmatprep.subr.bf16.mxu0 0
  %283 = vmatpush1.bf16.msra.mxu0 0
  %284 = vmatprep.subr.bf16.mxu0 0
  %285 = vmatpush1.bf16.msra.mxu0 0
  %286 = vmatprep.subr.bf16.mxu0 0
  %287 = vmatpush1.bf16.msra.mxu0 0
  %288 = vmatprep.subr.bf16.mxu0 0
  %289 = vmatpush1.bf16.msra.mxu0 0
  %290 = vmatprep.subr.bf16.mxu0 0
  %291 = vmatpush1.bf16.msra.mxu0 0
  %292 = vmatprep.mubr.bf16.mxu0 0
  %293 = vmatmul.mubr.bf16.gmra.mrb[0].mxu0 %v188
  %v294 = vpop.f32.mrb[0].mxu0
  %v295 = vadd.f32 %v210, %v294
  %v296 = vpop.f32.mrb[0].mxu0
  %v297 = vpop.f32.mrb[0].mxu0
  %v298 = vpop.f32.mrb[0].mxu0
  %299 = vdwg.mxu0
  %v300 = vxor.u32 %v295, 2147483648
  %v301 = vmul.f32 %v300, 1.442695
  %v302 = vpow.pop %v301
  %v303 = vadd.f32 %v302, 1.0
  %v304 = vrcp.pop %v303
  %v305 = vmul.f32 1.0, %v304
  %306 = vst [vmem:[%s5] sm:$0x3] %v305
  // Predicated region
  $region22: #{_lambda_.13} parent=0 // pred_check
    _
  $region23: #{_lambda_.13} parent=0 // pred_check_branch
    %308 = sbr.rel (0) target = $region25
  $region24: #{_lambda_.13} parent=0 // pred_region
    _
  $region25: #{_lambda_.13} parent=0 // pred_fallthru
    _
  // Predicated region
  $region26: #{_lambda_.13} parent=0 // pred_check
    _
  $region27: #{_lambda_.13} parent=0 // pred_check_branch
    %310 = sbr.rel (0) target = $region29
  $region28: #{_lambda_.13} parent=0 // pred_region
    _
  $region29: #{_lambda_.13} parent=0 // pred_fallthru
    _

// kernel: _lambda_.14
$region0: #{_lambda_.14}
  #allocation0 [shape = 'u32[]', space=smem, size = 0x4, offset = 0x4, fixed_abs, tag = 'smem constant byte address 0x4 - core index']
  #allocation1 [shape = 'u32[144,128]{1,0:T(1,128)}', space=vmem, size = 0x12000, scoped, tag = 'internal scratch']
  %s0 = inlined_call_operand.vmem [shape: f32[2,64,128], index: 0, kind: input, shape index: {}]
  %s1 = inlined_call_operand.vmem [shape: f32[2,1,128], index: 1, kind: input, shape index: {}]
  %s2 = inlined_call_operand.vmem [shape: bf16[128,128], index: 2, kind: input, shape index: {}]
  %s3 = inlined_call_operand.vmem [shape: f32[1,128], index: 3, kind: input, shape index: {}]
  %s4 = inlined_call_operand.vmem [shape: f32[1,128], index: 4, kind: input, shape index: {}]
  %s5 = inlined_call_operand.vmem [shape: f32[2,64,128], index: 5, kind: input, shape index: {}]
  %s6 = inlined_call_operand.vmem [shape: f32[2,64,128], index: 6, kind: output, shape index: {}]
  %s7 = sld [smem:[#allocation0]]
  $region57: #{_lambda_.14} parent=0
    _
  %s9 = ssub.s32 1, %s7
  %s10 = scalar_select 0, %s9, %s7
  loop: start=0, step=1, limit=4
  $region2: #{_lambda_.14} parent=0 // loop_pre_header
    _
  $region3: #{_lambda_.14} parent=0 // loop_header
    %s12 = sphi 0, %s16
    %p13 = scmp.ge.s32.totalorder %s12, 4
    %s22 = sphi 0, %s24
    %s25 = sphi 0, %s22
    %s26 = sphi 0, %s25
    %s42 = sphi 0, %s26
    %s48 = sphi 0, %s50
    %s51 = sphi 0, %s48
    %s52 = sphi 0, %s51
    %s68 = sphi 0, %s52
    %s72 = sphi 0, %s72
    %s74 = sphi 0, %s72
    %s75 = sphi 0, %s74
    %s89 = sphi 0, %s75
    %s93 = sphi 0, %s93
    %s95 = sphi 0, %s93
    %s96 = sphi 0, %s95
    %s110 = sphi 0, %s96
    %s114 = sphi 0, %s114
    %s116 = sphi 0, %s114
    %s117 = sphi 0, %s116
    %s131 = sphi 0, %s117
    %s137 = sphi 0, %s139
    %s140 = sphi 0, %s137
    %s141 = sphi 0, %s140
    %s157 = sphi 0, %s141
    %s163 = sphi 0, %s165
    %s166 = sphi 0, %s163
    %s167 = sphi 0, %s166
    %s183 = sphi 0, %s167
  $region4: #{_lambda_.14} parent=0 // loop_header_branch
    %15 = sbr.rel (%p13) target = $region8
  $region5: #{_lambda_.14} parent=0 // loop_body
    %s17 = ssub.s32 %s12, 1
    %s18 = ssub.s32 %s12, 2
    %s19 = sadd.s32 %s12, 1
    %s20 = ssub.s32 %s12, %s19
    %p21 = scmp.eq.s32.totalorder %s20, 0
    %s23 = sadd.s32 %s22, 1
    %s24 = scalar_select %p21, %s22, %s23
    %p27 = pneg %p21
    %p28 = scmp.eq.s32.totalorder %s12, 1
    %p29 = por %p27, %p28
    %p30 = scmp.ne.s32.totalorder %s22, %s25
    %p31 = scmp.eq.s32.totalorder %s12, 0
    %p32 = por %p30, %p31
    %p33 = scmp.ne.s32.totalorder %s22, %s25
    %p34 = scmp.eq.s32.totalorder %s17, 1
    %p35 = por %p33, %p34
    %p36 = scmp.ne.s32.totalorder %s25, %s26
    %p37 = scmp.eq.s32.totalorder %s17, 0
    %p38 = por %p36, %p37
    %p39 = scmp.ne.s32.totalorder %s25, %s26
    %p40 = scmp.eq.s32.totalorder %s18, 1
    %p41 = por %p39, %p40
    %p43 = scmp.ne.s32.totalorder %s26, %s42
    %p44 = scmp.eq.s32.totalorder %s18, 0
    %p45 = por %p43, %p44
    %s46 = ssub.s32 %s12, %s19
    %p47 = scmp.eq.s32.totalorder %s46, 0
    %s49 = sadd.s32 %s48, 1
    %s50 = scalar_select %p47, %s48, %s49
    %p53 = pneg %p47
    %p54 = scmp.eq.s32.totalorder %s12, 1
    %p55 = por %p53, %p54
    %p56 = scmp.ne.s32.totalorder %s48, %s51
    %p57 = scmp.eq.s32.totalorder %s12, 0
    %p58 = por %p56, %p57
    %p59 = scmp.ne.s32.totalorder %s48, %s51
    %p60 = scmp.eq.s32.totalorder %s17, 1
    %p61 = por %p59, %p60
    %p62 = scmp.ne.s32.totalorder %s51, %s52
    %p63 = scmp.eq.s32.totalorder %s17, 0
    %p64 = por %p62, %p63
    %p65 = scmp.ne.s32.totalorder %s51, %s52
    %p66 = scmp.eq.s32.totalorder %s18, 1
    %p67 = por %p65, %p66
    %p69 = scmp.ne.s32.totalorder %s52, %s68
    %p70 = scmp.eq.s32.totalorder %s18, 0
    %p71 = por %p69, %p70
    %s73 = sadd.s32 %s72, 1
    %p76 = scmp.eq.s32.totalorder %s12, 1
    %p77 = scmp.ne.s32.totalorder %s72, %s74
    %p78 = scmp.eq.s32.totalorder %s12, 0
    %p79 = por %p77, %p78
    %p80 = scmp.ne.s32.totalorder %s72, %s74
    %p81 = scmp.eq.s32.totalorder %s17, 1
    %p82 = por %p80, %p81
    %p83 = scmp.ne.s32.totalorder %s74, %s75
    %p84 = scmp.eq.s32.totalorder %s17, 0
    %p85 = por %p83, %p84
    %p86 = scmp.ne.s32.totalorder %s74, %s75
    %p87 = scmp.eq.s32.totalorder %s18, 1
    %p88 = por %p86, %p87
    %p90 = scmp.ne.s32.totalorder %s75, %s89
    %p91 = scmp.eq.s32.totalorder %s18, 0
    %p92 = por %p90, %p91
    %s94 = sadd.s32 %s93, 1
    %p97 = scmp.eq.s32.totalorder %s12, 1
    %p98 = scmp.ne.s32.totalorder %s93, %s95
    %p99 = scmp.eq.s32.totalorder %s12, 0
    %p100 = por %p98, %p99
    %p101 = scmp.ne.s32.totalorder %s93, %s95
    %p102 = scmp.eq.s32.totalorder %s17, 1
    %p103 = por %p101, %p102
    %p104 = scmp.ne.s32.totalorder %s95, %s96
    %p105 = scmp.eq.s32.totalorder %s17, 0
    %p106 = por %p104, %p105
    %p107 = scmp.ne.s32.totalorder %s95, %s96
    %p108 = scmp.eq.s32.totalorder %s18, 1
    %p109 = por %p107, %p108
    %p111 = scmp.ne.s32.totalorder %s96, %s110
    %p112 = scmp.eq.s32.totalorder %s18, 0
    %p113 = por %p111, %p112
    %s115 = sadd.s32 %s114, 1
    %p118 = scmp.eq.s32.totalorder %s12, 1
    %p119 = scmp.ne.s32.totalorder %s114, %s116
    %p120 = scmp.eq.s32.totalorder %s12, 0
    %p121 = por %p119, %p120
    %p122 = scmp.ne.s32.totalorder %s114, %s116
    %p123 = scmp.eq.s32.totalorder %s17, 1
    %p124 = por %p122, %p123
    %p125 = scmp.ne.s32.totalorder %s116, %s117
    %p126 = scmp.eq.s32.totalorder %s17, 0
    %p127 = por %p125, %p126
    %p128 = scmp.ne.s32.totalorder %s116, %s117
    %p129 = scmp.eq.s32.totalorder %s18, 1
    %p130 = por %p128, %p129
    %p132 = scmp.ne.s32.totalorder %s117, %s131
    %p133 = scmp.eq.s32.totalorder %s18, 0
    %p134 = por %p132, %p133
    %s135 = ssub.s32 %s12, %s19
    %p136 = scmp.eq.s32.totalorder %s135, 0
    %s138 = sadd.s32 %s137, 1
    %s139 = scalar_select %p136, %s137, %s138
    %p142 = pneg %p136
    %p143 = scmp.eq.s32.totalorder %s12, 1
    %p144 = por %p142, %p143
    %p145 = scmp.ne.s32.totalorder %s137, %s140
    %p146 = scmp.eq.s32.totalorder %s12, 0
    %p147 = por %p145, %p146
    %p148 = scmp.ne.s32.totalorder %s137, %s140
    %p149 = scmp.eq.s32.totalorder %s17, 1
    %p150 = por %p148, %p149
    %p151 = scmp.ne.s32.totalorder %s140, %s141
    %p152 = scmp.eq.s32.totalorder %s17, 0
    %p153 = por %p151, %p152
    %p154 = scmp.ne.s32.totalorder %s140, %s141
    %p155 = scmp.eq.s32.totalorder %s18, 1
    %p156 = por %p154, %p155
    %p158 = scmp.ne.s32.totalorder %s141, %s157
    %p159 = scmp.eq.s32.totalorder %s18, 0
    %p160 = por %p158, %p159
    %s161 = ssub.s32 %s12, %s19
    %p162 = scmp.eq.s32.totalorder %s161, 0
    %s164 = sadd.s32 %s163, 1
    %s165 = scalar_select %p162, %s163, %s164
    %p168 = pneg %p162
    %p169 = scmp.eq.s32.totalorder %s12, 1
    %p170 = por %p168, %p169
    %p171 = scmp.ne.s32.totalorder %s163, %s166
    %p172 = scmp.eq.s32.totalorder %s12, 0
    %p173 = por %p171, %p172
    %p174 = scmp.ne.s32.totalorder %s163, %s166
    %p175 = scmp.eq.s32.totalorder %s17, 1
    %p176 = por %p174, %p175
    %p177 = scmp.ne.s32.totalorder %s166, %s167
    %p178 = scmp.eq.s32.totalorder %s17, 0
    %p179 = por %p177, %p178
    %p180 = scmp.ne.s32.totalorder %s166, %s167
    %p181 = scmp.eq.s32.totalorder %s18, 1
    %p182 = por %p180, %p181
    %p184 = scmp.ne.s32.totalorder %s167, %s183
    %p185 = scmp.eq.s32.totalorder %s18, 0
    %p186 = por %p184, %p185
    %p187 = scmp.le.s32.totalorder 1, %s12
    %p188 = scmp.lt.s32.totalorder %s12, 3
    %p189 = pnand %p187, %p188
    %p190 = pneg %p189
    // Predicated region
    $region9: #{_lambda_.14} parent=5 // pred_check
      _
    $region10: #{_lambda_.14} parent=5 // pred_check_branch
      %192 = sbr.rel (%p189) target = $region12
    $region11: #{_lambda_.14} parent=5 // pred_region
      %s193 = ssub.s32 %s12, 1
      // Predicated region
      $region13: #{_lambda_.14} parent=11 // pred_check
        %p194 = pneg %p85
      $region14: #{_lambda_.14} parent=11 // pred_check_branch
        %196 = sbr.rel (%p194) target = $region16
      $region15: #{_lambda_.14} parent=11 // pred_region
        _
      $region16: #{_lambda_.14} parent=11 // pred_fallthru
        _
      // Predicated region
      $region17: #{_lambda_.14} parent=11 // pred_check
        %p197 = pneg %p106
      $region18: #{_lambda_.14} parent=11 // pred_check_branch
        %199 = sbr.rel (%p197) target = $region20
      $region19: #{_lambda_.14} parent=11 // pred_region
        _
      $region20: #{_lambda_.14} parent=11 // pred_fallthru
        _
      // Predicated region
      $region21: #{_lambda_.14} parent=11 // pred_check
        %p200 = pneg %p127
      $region22: #{_lambda_.14} parent=11 // pred_check_branch
        %202 = sbr.rel (%p200) target = $region24
      $region23: #{_lambda_.14} parent=11 // pred_region
        _
      $region24: #{_lambda_.14} parent=11 // pred_fallthru
        _
    $region12: #{_lambda_.14} parent=5 // pred_fallthru
      _
    %p203 = scmp.lt.s32.totalorder %s12, 2
    // Predicated region
    $region25: #{_lambda_.14} parent=5 // pred_check
      %p204 = pneg %p203
    $region26: #{_lambda_.14} parent=5 // pred_check_branch
      %206 = sbr.rel (%p204) target = $region28
    $region27: #{_lambda_.14} parent=5 // pred_region
      // Predicated region
      $region29: #{_lambda_.14} parent=27 // pred_check
        %p207 = pneg %p32
      $region30: #{_lambda_.14} parent=27 // pred_check_branch
        %209 = sbr.rel (%p207) target = $region32
      $region31: #{_lambda_.14} parent=27 // pred_region
        %p210 = scmp.lt.s32.totalorder %s12, 1
        %s211 = scalar_select %p210, %s12, 1
        %s212 = smul.addr %s211, 8
        %s213 = smul.addr %s212, 8
        %s214 = scalar_lea.vmem %s0, %s213
      $region32: #{_lambda_.14} parent=27 // pred_fallthru
        _
      // Predicated region
      $region33: #{_lambda_.14} parent=27 // pred_check
        %p215 = pneg %p58
      $region34: #{_lambda_.14} parent=27 // pred_check_branch
        %217 = sbr.rel (%p215) target = $region36
      $region35: #{_lambda_.14} parent=27 // pred_region
        %p218 = scmp.lt.s32.totalorder %s12, 1
        %s219 = scalar_select %p218, %s12, 1
        %s220 = scalar_lea.vmem %s1, %s219
      $region36: #{_lambda_.14} parent=27 // pred_fallthru
        _
      // Predicated region
      $region37: #{_lambda_.14} parent=27 // pred_check
        %p221 = pneg %p147
      $region38: #{_lambda_.14} parent=27 // pred_check_branch
        %223 = sbr.rel (%p221) target = $region40
      $region39: #{_lambda_.14} parent=27 // pred_region
        %p224 = scmp.lt.s32.totalorder %s12, 1
        %s225 = scalar_select %p224, %s12, 1
        %s226 = smul.addr %s225, 8
        %s227 = smul.addr %s226, 8
        %s228 = scalar_lea.vmem %s5, %s227
      $region40: #{_lambda_.14} parent=27 // pred_fallthru
        _
    $region28: #{_lambda_.14} parent=5 // pred_fallthru
      _
    %p229 = scmp.le.s32.totalorder 1, %s12
    %p230 = scmp.lt.s32.totalorder %s12, 3
    %p231 = pnand %p229, %p230
    %p232 = pneg %p231
    // Predicated region
    $region41: #{_lambda_.14} parent=5 // pred_check
      _
    $region42: #{_lambda_.14} parent=5 // pred_check_branch
      %234 = sbr.rel (%p231) target = $region44
    $region43: #{_lambda_.14} parent=5 // pred_region
      %s235 = ssub.s32 %s12, 1
      %p236 = scmp.lt.s32.totalorder %s17, 1
      %s237 = scalar_select %p236, %s17, 1
      %s238 = smul.addr %s237, 8
      %s239 = smul.addr %s238, 8
      %s240 = scalar_lea.vmem %s0, %s239
      %p241 = pneg %p38
      %p242 = pneg %p35
      %p243 = scmp.lt.s32.totalorder %s17, 1
      %s244 = scalar_select %p243, %s17, 1
      %s245 = scalar_lea.vmem %s1, %s244
      %p246 = pneg %p64
      %p247 = pneg %p61
      %p248 = pneg %p85
      %p249 = pneg %p82
      %p250 = pneg %p106
      %p251 = pneg %p103
      %p252 = pneg %p127
      %p253 = pneg %p124
      %p254 = scmp.lt.s32.totalorder %s17, 1
      %s255 = scalar_select %p254, %s17, 1
      %s256 = smul.addr %s255, 8
      %s257 = smul.addr %s256, 8
      %s258 = scalar_lea.vmem %s5, %s257
      %p259 = pneg %p153
      %p260 = pneg %p150
      %p261 = pneg %p179
      %p262 = pneg %p176
      %p263 = scmp.lt.s32.totalorder %s17, 1
      %s264 = scalar_select %p263, %s17, 1
      %s265 = smul.addr %s264, 8
      %s266 = smul.addr %s265, 8
      %s267 = scalar_lea.vmem %s6, %s266
      %p268 = scmp.lt.s32.totalorder %s17, 1
      %s269 = scalar_select %p268, %s17, 1
      %s270 = smul.addr %s269, 8
      %s271 = smul.addr %s270, 8
      %s272 = scalar_lea.vmem %s0, %s271
      %p273 = scmp.lt.s32.totalorder %s17, 1
      %s274 = scalar_select %p273, %s17, 1
      %s275 = scalar_lea.vmem %s1, %s274
      %p276 = scmp.lt.s32.totalorder %s17, 1
      %s277 = scalar_select %p276, %s17, 1
      %s278 = smul.addr %s277, 8
      %s279 = smul.addr %s278, 8
      %s280 = scalar_lea.vmem %s5, %s279
      %p281 = scmp.lt.s32.totalorder %s17, 1
      %s282 = scalar_select %p281, %s17, 1
      %s283 = smul.addr %s282, 8
      %s284 = smul.addr %s283, 8
      %s285 = scalar_lea.vmem %s6, %s284
      %v287 = vld [vmem:[%s272] sm:$0xff]
      %v288 = vld [vmem:[%s272 + $0x8] sm:$0xff]
      %v289 = vld [vmem:[%s272 + $0x10] sm:$0xff]
      %v290 = vld [vmem:[%s272 + $0x18] sm:$0xff]
      %v291 = vld [vmem:[%s272 + $0x20] sm:$0xff]
      %v292 = vld [vmem:[%s272 + $0x28] sm:$0xff]
      %v293 = vld [vmem:[%s272 + $0x30] sm:$0xff]
      %v294 = vld [vmem:[%s272 + $0x38] sm:$0xff]
      %v295 = vld [vmem:[%s275] sm:$0x1]
      %v297 = vlaneseq
      %v298 = vshrl.u32 %v297, 7
      %v299 = vsub.s32 0, %v298
      %v300 = vrot.slane %v295, %v299
      %v302 = vmul.f32 %v287, %v300
      %v303 = vmul.f32 %v288, %v300
      %v304 = vmul.f32 %v289, %v300
      %v305 = vmul.f32 %v290, %v300
      %v306 = vmul.f32 %v291, %v300
      %v307 = vmul.f32 %v292, %v300
      %v308 = vmul.f32 %v293, %v300
      %v309 = vmul.f32 %v294, %v300
      %v310 = vpack.c.bf16 %v303, %v302
      %v311 = vpack.c.bf16 %v305, %v304
      %v312 = vpack.c.bf16 %v307, %v306
      %v313 = vpack.c.bf16 %v309, %v308
      %v314 = vld [vmem:[%s2] sm:$0xf]
      %v315 = vld [vmem:[%s2 + $0x4] sm:$0xf]
      %v316 = vld [vmem:[%s2 + $0x8] sm:$0xf]
      %v317 = vld [vmem:[%s2 + $0xc] sm:$0xf]
      %v318 = vld [vmem:[%s2 + $0x10] sm:$0xf]
      %v319 = vld [vmem:[%s2 + $0x14] sm:$0xf]
      %v320 = vld [vmem:[%s2 + $0x18] sm:$0xf]
      %v321 = vld [vmem:[%s2 + $0x1c] sm:$0xf]
      %v322 = vld [vmem:[%s2 + $0x20] sm:$0xf]
      %v323 = vld [vmem:[%s2 + $0x24] sm:$0xf]
      %v324 = vld [vmem:[%s2 + $0x28] sm:$0xf]
      %v325 = vld [vmem:[%s2 + $0x2c] sm:$0xf]
      %v326 = vld [vmem:[%s2 + $0x30] sm:$0xf]
      %v327 = vld [vmem:[%s2 + $0x34] sm:$0xf]
      %v328 = vld [vmem:[%s2 + $0x38] sm:$0xf]
      %v329 = vld [vmem:[%s2 + $0x3c] sm:$0xf]
      %v346 = vunpack.c.l.b16 %v314
      %v347 = vunpack.c.l.b16 %v315
      %v348 = vunpack.c.l.b16 %v316
      %v349 = vunpack.c.l.b16 %v317
      %v350 = vunpack.c.l.b16 %v318
      %v351 = vunpack.c.l.b16 %v319
      %v352 = vunpack.c.l.b16 %v320
      %v353 = vunpack.c.l.b16 %v321
      %v354 = vunpack.c.l.b16 %v322
      %v355 = vunpack.c.l.b16 %v323
      %v356 = vunpack.c.l.b16 %v324
      %v357 = vunpack.c.l.b16 %v325
      %v358 = vunpack.c.l.b16 %v326
      %v359 = vunpack.c.l.b16 %v327
      %v360 = vunpack.c.l.b16 %v328
      %v361 = vunpack.c.l.b16 %v329
      %v362 = vpack.c.b16 %v347, %v346
      %v363 = vpack.c.b16 %v349, %v348
      %v364 = vpack.c.b16 %v351, %v350
      %v365 = vpack.c.b16 %v353, %v352
      %v366 = vpack.c.b16 %v355, %v354
      %v367 = vpack.c.b16 %v357, %v356
      %v368 = vpack.c.b16 %v359, %v358
      %v369 = vpack.c.b16 %v361, %v360
      %378 = vmatprep.subr.bf16.mxu0 0
      %379 = vmatpush1.bf16.msra.mxu0 %v362
      %380 = vmatprep.subr.bf16.mxu0 0
      %381 = vmatpush1.bf16.msra.mxu0 %v363
      %382 = vmatprep.subr.bf16.mxu0 0
      %383 = vmatpush1.bf16.msra.mxu0 %v364
      %384 = vmatprep.subr.bf16.mxu0 0
      %385 = vmatpush1.bf16.msra.mxu0 %v365
      %386 = vmatprep.subr.bf16.mxu0 0
      %387 = vmatpush1.bf16.msra.mxu0 %v366
      %388 = vmatprep.subr.bf16.mxu0 0
      %389 = vmatpush1.bf16.msra.mxu0 %v367
      %390 = vmatprep.subr.bf16.mxu0 0
      %391 = vmatpush1.bf16.msra.mxu0 %v368
      %392 = vmatprep.subr.bf16.mxu0 0
      %393 = vmatpush1.bf16.msra.mxu0 %v369
      %394 = vmatprep.subr.bf16.mxu0 0
      %395 = vmatpush1.bf16.msra.mxu0 0
      %396 = vmatprep.subr.bf16.mxu0 0
      %397 = vmatpush1.bf16.msra.mxu0 0
      %398 = vmatprep.subr.bf16.mxu0 0
      %399 = vmatpush1.bf16.msra.mxu0 0
      %400 = vmatprep.subr.bf16.mxu0 0
      %401 = vmatpush1.bf16.msra.mxu0 0
      %402 = vmatprep.subr.bf16.mxu0 0
      %403 = vmatpush1.bf16.msra.mxu0 0
      %404 = vmatprep.subr.bf16.mxu0 0
      %405 = vmatpush1.bf16.msra.mxu0 0
      %406 = vmatprep.subr.bf16.mxu0 0
      %407 = vmatpush1.bf16.msra.mxu0 0
      %408 = vmatprep.subr.bf16.mxu0 0
      %409 = vmatpush1.bf16.msra.mxu0 0
      %410 = vmatprep.mubr.bf16.mxu0 0
      %411 = vmatmul.mubr.bf16.gmra.mrb[0].mxu0 %v310
      %v412 = vpop.f32.mrb[0].mxu0
      %v413 = vadd.f32 0.0, %v412
      %v414 = vpop.f32.mrb[0].mxu0
      %v415 = vpop.f32.mrb[0].mxu0
      %v416 = vadd.f32 0.0, %v415
      %v417 = vpop.f32.mrb[0].mxu0
      %418 = vmatprep.mubr.bf16.mxu0 0
      %419 = vmatmul.mubr.bf16.gmra.mrb[0].mxu0 %v311
      %v420 = vpop.f32.mrb[0].mxu0
      %v421 = vadd.f32 0.0, %v420
      %v422 = vpop.f32.mrb[0].mxu0
      %v423 = vpop.f32.mrb[0].mxu0
      %v424 = vadd.f32 0.0, %v423
      %v425 = vpop.f32.mrb[0].mxu0
      %426 = vmatprep.mubr.bf16.mxu0 0
      %427 = vmatmul.mubr.bf16.gmra.mrb[0].mxu0 %v312
      %v428 = vpop.f32.mrb[0].mxu0
      %v429 = vadd.f32 0.0, %v428
      %v430 = vpop.f32.mrb[0].mxu0
      %v431 = vpop.f32.mrb[0].mxu0
      %v432 = vadd.f32 0.0, %v431
      %v433 = vpop.f32.mrb[0].mxu0
      %434 = vmatprep.mubr.bf16.mxu0 0
      %435 = vmatmul.mubr.bf16.gmra.mrb[0].mxu0 %v313
      %v436 = vpop.f32.mrb[0].mxu0
      %v437 = vadd.f32 0.0, %v436
      %v438 = vpop.f32.mrb[0].mxu0
      %v439 = vpop.f32.mrb[0].mxu0
      %v440 = vadd.f32 0.0, %v439
      %v441 = vpop.f32.mrb[0].mxu0
      %442 = vdwg.mxu0
      %v443 = vld [vmem:[%s3] sm:$0x1]
      %v445 = vlaneseq
      %v446 = vshrl.u32 %v445, 7
      %v447 = vsub.s32 0, %v446
      %v448 = vrot.slane %v443, %v447
      %v450 = vmul.f32 %v413, %v448
      %v451 = vmul.f32 %v416, %v448
      %v452 = vmul.f32 %v421, %v448
      %v453 = vmul.f32 %v424, %v448
      %v454 = vmul.f32 %v429, %v448
      %v455 = vmul.f32 %v432, %v448
      %v456 = vmul.f32 %v437, %v448
      %v457 = vmul.f32 %v440, %v448
      %v458 = vld [vmem:[%s4] sm:$0x1]
      %v460 = vlaneseq
      %v461 = vshrl.u32 %v460, 7
      %v462 = vsub.s32 0, %v461
      %v463 = vrot.slane %v458, %v462
      %v465 = vadd.f32 %v450, %v463
      %v466 = vadd.f32 %v451, %v463
      %v467 = vadd.f32 %v452, %v463
      %v468 = vadd.f32 %v453, %v463
      %v469 = vadd.f32 %v454, %v463
      %v470 = vadd.f32 %v455, %v463
      %v471 = vadd.f32 %v456, %v463
      %v472 = vadd.f32 %v457, %v463
      %v473 = vld [vmem:[%s280] sm:$0xff]
      %v474 = vld [vmem:[%s280 + $0x8] sm:$0xff]
      %v475 = vld [vmem:[%s280 + $0x10] sm:$0xff]
      %v476 = vld [vmem:[%s280 + $0x18] sm:$0xff]
      %v477 = vld [vmem:[%s280 + $0x20] sm:$0xff]
      %v478 = vld [vmem:[%s280 + $0x28] sm:$0xff]
      %v479 = vld [vmem:[%s280 + $0x30] sm:$0xff]
      %v480 = vld [vmem:[%s280 + $0x38] sm:$0xff]
      %v481 = vadd.f32 %v465, %v473
      %v482 = vadd.f32 %v466, %v474
      %v483 = vadd.f32 %v467, %v475
      %v484 = vadd.f32 %v468, %v476
      %v485 = vadd.f32 %v469, %v477
      %v486 = vadd.f32 %v470, %v478
      %v487 = vadd.f32 %v471, %v479
      %v488 = vadd.f32 %v472, %v480
      %v489 = vmax.f32 %v481, 0.0
      %v490 = vmax.f32 %v482, 0.0
      %v491 = vmax.f32 %v483, 0.0
      %v492 = vmax.f32 %v484, 0.0
      %v493 = vmax.f32 %v485, 0.0
      %v494 = vmax.f32 %v486, 0.0
      %v495 = vmax.f32 %v487, 0.0
      %v496 = vmax.f32 %v488, 0.0
      %497 = vst [vmem:[%s285] sm:$0xff] %v489
      %498 = vst [vmem:[%s285 + $0x8] sm:$0xff] %v490
      %499 = vst [vmem:[%s285 + $0x10] sm:$0xff] %v491
      %500 = vst [vmem:[%s285 + $0x18] sm:$0xff] %v492
      %501 = vst [vmem:[%s285 + $0x20] sm:$0xff] %v493
      %502 = vst [vmem:[%s285 + $0x28] sm:$0xff] %v494
      %503 = vst [vmem:[%s285 + $0x30] sm:$0xff] %v495
      %504 = vst [vmem:[%s285 + $0x38] sm:$0xff] %v496
      %p505 = scmp.lt.s32.totalorder %s17, 1
      %s506 = scalar_select %p505, %s17, 1
      %s507 = smul.addr %s506, 8
      %s508 = smul.addr %s507, 8
      %s509 = scalar_lea.vmem %s6, %s508
      // Predicated region
      $region45: #{_lambda_.14} parent=43 // pred_check
        %p510 = pneg %p176
      $region46: #{_lambda_.14} parent=43 // pred_check_branch
        %512 = sbr.rel (%p510) target = $region48
      $region47: #{_lambda_.14} parent=43 // pred_region
        _
      $region48: #{_lambda_.14} parent=43 // pred_fallthru
        _
    $region44: #{_lambda_.14} parent=5 // pred_fallthru
      _
    %p513 = scmp.le.s32.totalorder 2, %s12
    // Predicated region
    $region49: #{_lambda_.14} parent=5 // pred_check
      %p514 = pneg %p513
    $region50: #{_lambda_.14} parent=5 // pred_check_branch
      %516 = sbr.rel (%p514) target = $region52
    $region51: #{_lambda_.14} parent=5 // pred_region
      %s517 = ssub.s32 %s12, 2
      // Predicated region
      $region53: #{_lambda_.14} parent=51 // pred_check
        %p518 = pneg %p182
      $region54: #{_lambda_.14} parent=51 // pred_check_branch
        %520 = sbr.rel (%p518) target = $region56
      $region55: #{_lambda_.14} parent=51 // pred_region
        %p521 = scmp.lt.s32.totalorder %s18, 1
        %s522 = scalar_select %p521, %s18, 1
        %s523 = smul.addr %s522, 8
        %s524 = smul.addr %s523, 8
        %s525 = scalar_lea.vmem %s6, %s524
      $region56: #{_lambda_.14} parent=51 // pred_fallthru
        _
    $region52: #{_lambda_.14} parent=5 // pred_fallthru
      _
  $region6: #{_lambda_.14} parent=0 // loop_footer
    %s16 = sadd.s32 1, %s12
  $region7: #{_lambda_.14} parent=0 // loop_footer_branch
    %11 = sbr.rel target = $region3
  $region8: #{_lambda_.14} parent=0 // loop_exit
    _

// kernel: _lambda_.12
$region0: #{_lambda_.12}
  #allocation0 [shape = 'u32[]', space=smem, size = 0x4, offset = 0x4, fixed_abs, tag = 'smem constant byte address 0x4 - core index']
  #allocation1 [shape = 'u32[144,128]{1,0:T(1,128)}', space=vmem, size = 0x12000, scoped, tag = 'internal scratch']
  %s0 = inlined_call_operand.vmem [shape: bf16[128,1152], index: 0, kind: input, shape index: {}]
  %s1 = inlined_call_operand.vmem [shape: bf16[1152,128], index: 1, kind: input, shape index: {}]
  %s2 = inlined_call_operand.vmem [shape: f32[1,128], index: 2, kind: input, shape index: {}]
  %s3 = inlined_call_operand.vmem [shape: f32[1,128], index: 3, kind: input, shape index: {}]
  %s4 = inlined_call_operand.vmem [shape: f32[128,128], index: 4, kind: output, shape index: {}]
  %s5 = sld [smem:[#allocation0]]
  $region26: #{_lambda_.12} parent=0
    _
  %s7 = ssub.s32 1, %s5
  %s8 = scalar_select 0, %s7, %s5
  // Predicated region
  $region2: #{_lambda_.12} parent=0 // pred_check
    _
  $region3: #{_lambda_.12} parent=0 // pred_check_branch
    %10 = sbr.rel (0) target = $region5
  $region4: #{_lambda_.12} parent=0 // pred_region
    _
  $region5: #{_lambda_.12} parent=0 // pred_fallthru
    _
  // Predicated region
  $region6: #{_lambda_.12} parent=0 // pred_check
    _
  $region7: #{_lambda_.12} parent=0 // pred_check_branch
    %12 = sbr.rel (0) target = $region9
  $region8: #{_lambda_.12} parent=0 // pred_region
    _
  $region9: #{_lambda_.12} parent=0 // pred_fallthru
    _
  // Predicated region
  $region10: #{_lambda_.12} parent=0 // pred_check
    _
  $region11: #{_lambda_.12} parent=0 // pred_check_branch
    %14 = sbr.rel (0) target = $region13
  $region12: #{_lambda_.12} parent=0 // pred_region
    _
  $region13: #{_lambda_.12} parent=0 // pred_fallthru
    _
  // Predicated region
  $region14: #{_lambda_.12} parent=0 // pred_check
    _
  $region15: #{_lambda_.12} parent=0 // pred_check_branch
    %16 = sbr.rel (0) target = $region17
  $region16: #{_lambda_.12} parent=0 // pred_region
    _
  $region17: #{_lambda_.12} parent=0 // pred_fallthru
    _
  %v18 = vld [vmem:[%s0] sm:$0xff]
  %v19 = vld [vmem:[%s0 + $0x8] sm:$0xff]
  %v20 = vld [vmem:[%s0 + $0x10] sm:$0xff]
  %v21 = vld [vmem:[%s0 + $0x18] sm:$0xff]
  %v22 = vld [vmem:[%s0 + $0x20] sm:$0xf]
  %v23 = vld [vmem:[%s0 + $0x24] sm:$0xff]
  %v24 = vld [vmem:[%s0 + $0x2c] sm:$0xff]
  %v25 = vld [vmem:[%s0 + $0x34] sm:$0xff]
  %v26 = vld [vmem:[%s0 + $0x3c] sm:$0xff]
  %v27 = vld [vmem:[%s0 + $0x44] sm:$0xf]
  %v28 = vld [vmem:[%s0 + $0x48] sm:$0xff]
  %v29 = vld [vmem:[%s0 + $0x50] sm:$0xff]
  %v30 = vld [vmem:[%s0 + $0x58] sm:$0xff]
  %v31 = vld [vmem:[%s0 + $0x60] sm:$0xff]
  %v32 = vld [vmem:[%s0 + $0x68] sm:$0xf]
  %v33 = vld [vmem:[%s0 + $0x6c] sm:$0xff]
  %v34 = vld [vmem:[%s0 + $0x74] sm:$0xff]
  %v35 = vld [vmem:[%s0 + $0x7c] sm:$0xff]
  %v36 = vld [vmem:[%s0 + $0x84] sm:$0xff]
  %v37 = vld [vmem:[%s0 + $0x8c] sm:$0xf]
  %v38 = vld [vmem:[%s0 + $0x90] sm:$0xff]
  %v39 = vld [vmem:[%s0 + $0x98] sm:$0xff]
  %v40 = vld [vmem:[%s0 + $0xa0] sm:$0xff]
  %v41 = vld [vmem:[%s0 + $0xa8] sm:$0xff]
  %v42 = vld [vmem:[%s0 + $0xb0] sm:$0xf]
  %v43 = vld [vmem:[%s0 + $0xb4] sm:$0xff]
  %v44 = vld [vmem:[%s0 + $0xbc] sm:$0xff]
  %v45 = vld [vmem:[%s0 + $0xc4] sm:$0xff]
  %v46 = vld [vmem:[%s0 + $0xcc] sm:$0xff]
  %v47 = vld [vmem:[%s0 + $0xd4] sm:$0xf]
  %v48 = vld [vmem:[%s0 + $0xd8] sm:$0xff]
  %v49 = vld [vmem:[%s0 + $0xe0] sm:$0xff]
  %v50 = vld [vmem:[%s0 + $0xe8] sm:$0xff]
  %v51 = vld [vmem:[%s0 + $0xf0] sm:$0xff]
  %v52 = vld [vmem:[%s0 + $0xf8] sm:$0xf]
  %v53 = vld [vmem:[%s0 + $0xfc] sm:$0xff]
  %v54 = vld [vmem:[%s0 + $0x104] sm:$0xff]
  %v55 = vld [vmem:[%s0 + $0x10c] sm:$0xff]
  %v56 = vld [vmem:[%s0 + $0x114] sm:$0xff]
  %v57 = vld [vmem:[%s0 + $0x11c] sm:$0xf]
  %v58 = vld [vmem:[%s0 + $0x120] sm:$0xff]
  %v59 = vld [vmem:[%s0 + $0x128] sm:$0xff]
  %v60 = vld [vmem:[%s0 + $0x130] sm:$0xff]
  %v61 = vld [vmem:[%s0 + $0x138] sm:$0xff]
  %v62 = vld [vmem:[%s0 + $0x140] sm:$0xf]
  %v63 = vld [vmem:[%s0 + $0x144] sm:$0xff]
  %v64 = vld [vmem:[%s0 + $0x14c] sm:$0xff]
  %v65 = vld [vmem:[%s0 + $0x154] sm:$0xff]
  %v66 = vld [vmem:[%s0 + $0x15c] sm:$0xff]
  %v67 = vld [vmem:[%s0 + $0x164] sm:$0xf]
  %v68 = vld [vmem:[%s0 + $0x168] sm:$0xff]
  %v69 = vld [vmem:[%s0 + $0x170] sm:$0xff]
  %v70 = vld [vmem:[%s0 + $0x178] sm:$0xff]
  %v71 = vld [vmem:[%s0 + $0x180] sm:$0xff]
  %v72 = vld [vmem:[%s0 + $0x188] sm:$0xf]
  %v73 = vld [vmem:[%s0 + $0x18c] sm:$0xff]
  %v74 = vld [vmem:[%s0 + $0x194] sm:$0xff]
  %v75 = vld [vmem:[%s0 + $0x19c] sm:$0xff]
  %v76 = vld [vmem:[%s0 + $0x1a4] sm:$0xff]
  %v77 = vld [vmem:[%s0 + $0x1ac] sm:$0xf]
  %v78 = vld [vmem:[%s0 + $0x1b0] sm:$0xff]
  %v79 = vld [vmem:[%s0 + $0x1b8] sm:$0xff]
  %v80 = vld [vmem:[%s0 + $0x1c0] sm:$0xff]
  %v81 = vld [vmem:[%s0 + $0x1c8] sm:$0xff]
  %v82 = vld [vmem:[%s0 + $0x1d0] sm:$0xf]
  %v83 = vld [vmem:[%s0 + $0x1d4] sm:$0xff]
  %v84 = vld [vmem:[%s0 + $0x1dc] sm:$0xff]
  %v85 = vld [vmem:[%s0 + $0x1e4] sm:$0xff]
  %v86 = vld [vmem:[%s0 + $0x1ec] sm:$0xff]
  %v87 = vld [vmem:[%s0 + $0x1f4] sm:$0xf]
  %v88 = vld [vmem:[%s0 + $0x1f8] sm:$0xff]
  %v89 = vld [vmem:[%s0 + $0x200] sm:$0xff]
  %v90 = vld [vmem:[%s0 + $0x208] sm:$0xff]
  %v91 = vld [vmem:[%s0 + $0x210] sm:$0xff]
  %v92 = vld [vmem:[%s0 + $0x218] sm:$0xf]
  %v93 = vld [vmem:[%s0 + $0x21c] sm:$0xff]
  %v94 = vld [vmem:[%s0 + $0x224] sm:$0xff]
  %v95 = vld [vmem:[%s0 + $0x22c] sm:$0xff]
  %v96 = vld [vmem:[%s0 + $0x234] sm:$0xff]
  %v97 = vld [vmem:[%s0 + $0x23c] sm:$0xf]
  %v98 = vld [vmem:[%s1] sm:$0xf]
  %v99 = vld [vmem:[%s1 + $0x4] sm:$0xf]
  %v100 = vld [vmem:[%s1 + $0x8] sm:$0xf]
  %v101 = vld [vmem:[%s1 + $0xc] sm:$0xf]
  %v102 = vld [vmem:[%s1 + $0x10] sm:$0xf]
  %v103 = vld [vmem:[%s1 + $0x14] sm:$0xf]
  %v104 = vld [vmem:[%s1 + $0x18] sm:$0xf]
  %v105 = vld [vmem:[%s1 + $0x1c] sm:$0xf]
  %v106 = vld [vmem:[%s1 + $0x20] sm:$0xf]
  %v107 = vld [vmem:[%s1 + $0x24] sm:$0xf]
  %v108 = vld [vmem:[%s1 + $0x28] sm:$0xf]
  %v109 = vld [vmem:[%s1 + $0x2c] sm:$0xf]
  %v110 = vld [vmem:[%s1 + $0x30] sm:$0xf]
  %v111 = vld [vmem:[%s1 + $0x34] sm:$0xf]
  %v112 = vld [vmem:[%s1 + $0x38] sm:$0xf]
  %v113 = vld [vmem:[%s1 + $0x3c] sm:$0xf]
  %v114 = vld [vmem:[%s1 + $0x40] sm:$0xf]
  %v115 = vld [vmem:[%s1 + $0x44] sm:$0xf]
  %v116 = vld [vmem:[%s1 + $0x48] sm:$0xf]
  %v117 = vld [vmem:[%s1 + $0x4c] sm:$0xf]
  %v118 = vld [vmem:[%s1 + $0x50] sm:$0xf]
  %v119 = vld [vmem:[%s1 + $0x54] sm:$0xf]
  %v120 = vld [vmem:[%s1 + $0x58] sm:$0xf]
  %v121 = vld [vmem:[%s1 + $0x5c] sm:$0xf]
  %v122 = vld [vmem:[%s1 + $0x60] sm:$0xf]
  %v123 = vld [vmem:[%s1 + $0x64] sm:$0xf]
  %v124 = vld [vmem:[%s1 + $0x68] sm:$0xf]
  %v125 = vld [vmem:[%s1 + $0x6c] sm:$0xf]
  %v126 = vld [vmem:[%s1 + $0x70] sm:$0xf]
  %v127 = vld [vmem:[%s1 + $0x74] sm:$0xf]
  %v128 = vld [vmem:[%s1 + $0x78] sm:$0xf]
  %v129 = vld [vmem:[%s1 + $0x7c] sm:$0xf]
  %v130 = vld [vmem:[%s1 + $0x80] sm:$0xf]
  %v131 = vld [vmem:[%s1 + $0x84] sm:$0xf]
  %v132 = vld [vmem:[%s1 + $0x88] sm:$0xf]
  %v133 = vld [vmem:[%s1 + $0x8c] sm:$0xf]
  %v134 = vld [vmem:[%s1 + $0x90] sm:$0xf]
  %v135 = vld [vmem:[%s1 + $0x94] sm:$0xf]
  %v136 = vld [vmem:[%s1 + $0x98] sm:$0xf]
  %v137 = vld [vmem:[%s1 + $0x9c] sm:$0xf]
  %v138 = vld [vmem:[%s1 + $0xa0] sm:$0xf]
  %v139 = vld [vmem:[%s1 + $0xa4] sm:$0xf]
  %v140 = vld [vmem:[%s1 + $0xa8] sm:$0xf]
  %v141 = vld [vmem:[%s1 + $0xac] sm:$0xf]
  %v142 = vld [vmem:[%s1 + $0xb0] sm:$0xf]
  %v143 = vld [vmem:[%s1 + $0xb4] sm:$0xf]
  %v144 = vld [vmem:[%s1 + $0xb8] sm:$0xf]
  %v145 = vld [vmem:[%s1 + $0xbc] sm:$0xf]
  %v146 = vld [vmem:[%s1 + $0xc0] sm:$0xf]
  %v147 = vld [vmem:[%s1 + $0xc4] sm:$0xf]
  %v148 = vld [vmem:[%s1 + $0xc8] sm:$0xf]
  %v149 = vld [vmem:[%s1 + $0xcc] sm:$0xf]
  %v150 = vld [vmem:[%s1 + $0xd0] sm:$0xf]
  %v151 = vld [vmem:[%s1 + $0xd4] sm:$0xf]
  %v152 = vld [vmem:[%s1 + $0xd8] sm:$0xf]
  %v153 = vld [vmem:[%s1 + $0xdc] sm:$0xf]
  %v154 = vld [vmem:[%s1 + $0xe0] sm:$0xf]
  %v155 = vld [vmem:[%s1 + $0xe4] sm:$0xf]
  %v156 = vld [vmem:[%s1 + $0xe8] sm:$0xf]
  %v157 = vld [vmem:[%s1 + $0xec] sm:$0xf]
  %v158 = vld [vmem:[%s1 + $0xf0] sm:$0xf]
  %v159 = vld [vmem:[%s1 + $0xf4] sm:$0xf]
  %v160 = vld [vmem:[%s1 + $0xf8] sm:$0xf]
  %v161 = vld [vmem:[%s1 + $0xfc] sm:$0xf]
  %v162 = vld [vmem:[%s1 + $0x100] sm:$0xf]
  %v163 = vld [vmem:[%s1 + $0x104] sm:$0xf]
  %v164 = vld [vmem:[%s1 + $0x108] sm:$0xf]
  %v165 = vld [vmem:[%s1 + $0x10c] sm:$0xf]
  %v166 = vld [vmem:[%s1 + $0x110] sm:$0xf]
  %v167 = vld [vmem:[%s1 + $0x114] sm:$0xf]
  %v168 = vld [vmem:[%s1 + $0x118] sm:$0xf]
  %v169 = vld [vmem:[%s1 + $0x11c] sm:$0xf]
  %v170 = vld [vmem:[%s1 + $0x120] sm:$0xf]
  %v171 = vld [vmem:[%s1 + $0x124] sm:$0xf]
  %v172 = vld [vmem:[%s1 + $0x128] sm:$0xf]
  %v173 = vld [vmem:[%s1 + $0x12c] sm:$0xf]
  %v174 = vld [vmem:[%s1 + $0x130] sm:$0xf]
  %v175 = vld [vmem:[%s1 + $0x134] sm:$0xf]
  %v176 = vld [vmem:[%s1 + $0x138] sm:$0xf]
  %v177 = vld [vmem:[%s1 + $0x13c] sm:$0xf]
  %v178 = vld [vmem:[%s1 + $0x140] sm:$0xf]
  %v179 = vld [vmem:[%s1 + $0x144] sm:$0xf]
  %v180 = vld [vmem:[%s1 + $0x148] sm:$0xf]
  %v181 = vld [vmem:[%s1 + $0x14c] sm:$0xf]
  %v182 = vld [vmem:[%s1 + $0x150] sm:$0xf]
  %v183 = vld [vmem:[%s1 + $0x154] sm:$0xf]
  %v184 = vld [vmem:[%s1 + $0x158] sm:$0xf]
  %v185 = vld [vmem:[%s1 + $0x15c] sm:$0xf]
  %v186 = vld [vmem:[%s1 + $0x160] sm:$0xf]
  %v187 = vld [vmem:[%s1 + $0x164] sm:$0xf]
  %v188 = vld [vmem:[%s1 + $0x168] sm:$0xf]
  %v189 = vld [vmem:[%s1 + $0x16c] sm:$0xf]
  %v190 = vld [vmem:[%s1 + $0x170] sm:$0xf]
  %v191 = vld [vmem:[%s1 + $0x174] sm:$0xf]
  %v192 = vld [vmem:[%s1 + $0x178] sm:$0xf]
  %v193 = vld [vmem:[%s1 + $0x17c] sm:$0xf]
  %v194 = vld [vmem:[%s1 + $0x180] sm:$0xf]
  %v195 = vld [vmem:[%s1 + $0x184] sm:$0xf]
  %v196 = vld [vmem:[%s1 + $0x188] sm:$0xf]
  %v197 = vld [vmem:[%s1 + $0x18c] sm:$0xf]
  %v198 = vld [vmem:[%s1 + $0x190] sm:$0xf]
  %v199 = vld [vmem:[%s1 + $0x194] sm:$0xf]
  %v200 = vld [vmem:[%s1 + $0x198] sm:$0xf]
  %v201 = vld [vmem:[%s1 + $0x19c] sm:$0xf]
  %v202 = vld [vmem:[%s1 + $0x1a0] sm:$0xf]
  %v203 = vld [vmem:[%s1 + $0x1a4] sm:$0xf]
  %v204 = vld [vmem:[%s1 + $0x1a8] sm:$0xf]
  %v205 = vld [vmem:[%s1 + $0x1ac] sm:$0xf]
  %v206 = vld [vmem:[%s1 + $0x1b0] sm:$0xf]
  %v207 = vld [vmem:[%s1 + $0x1b4] sm:$0xf]
  %v208 = vld [vmem:[%s1 + $0x1b8] sm:$0xf]
  %v209 = vld [vmem:[%s1 + $0x1bc] sm:$0xf]
  %v210 = vld [vmem:[%s1 + $0x1c0] sm:$0xf]
  %v211 = vld [vmem:[%s1 + $0x1c4] sm:$0xf]
  %v212 = vld [vmem:[%s1 + $0x1c8] sm:$0xf]
  %v213 = vld [vmem:[%s1 + $0x1cc] sm:$0xf]
  %v214 = vld [vmem:[%s1 + $0x1d0] sm:$0xf]
  %v215 = vld [vmem:[%s1 + $0x1d4] sm:$0xf]
  %v216 = vld [vmem:[%s1 + $0x1d8] sm:$0xf]
  %v217 = vld [vmem:[%s1 + $0x1dc] sm:$0xf]
  %v218 = vld [vmem:[%s1 + $0x1e0] sm:$0xf]
  %v219 = vld [vmem:[%s1 + $0x1e4] sm:$0xf]
  %v220 = vld [vmem:[%s1 + $0x1e8] sm:$0xf]
  %v221 = vld [vmem:[%s1 + $0x1ec] sm:$0xf]
  %v222 = vld [vmem:[%s1 + $0x1f0] sm:$0xf]
  %v223 = vld [vmem:[%s1 + $0x1f4] sm:$0xf]
  %v224 = vld [vmem:[%s1 + $0x1f8] sm:$0xf]
  %v225 = vld [vmem:[%s1 + $0x1fc] sm:$0xf]
  %v226 = vld [vmem:[%s1 + $0x200] sm:$0xf]
  %v227 = vld [vmem:[%s1 + $0x204] sm:$0xf]
  %v228 = vld [vmem:[%s1 + $0x208] sm:$0xf]
  %v229 = vld [vmem:[%s1 + $0x20c] sm:$0xf]
  %v230 = vld [vmem:[%s1 + $0x210] sm:$0xf]
  %v231 = vld [vmem:[%s1 + $0x214] sm:$0xf]
  %v232 = vld [vmem:[%s1 + $0x218] sm:$0xf]
  %v233 = vld [vmem:[%s1 + $0x21c] sm:$0xf]
  %v234 = vld [vmem:[%s1 + $0x220] sm:$0xf]
  %v235 = vld [vmem:[%s1 + $0x224] sm:$0xf]
  %v236 = vld [vmem:[%s1 + $0x228] sm:$0xf]
  %v237 = vld [vmem:[%s1 + $0x22c] sm:$0xf]
  %v238 = vld [vmem:[%s1 + $0x230] sm:$0xf]
  %v239 = vld [vmem:[%s1 + $0x234] sm:$0xf]
  %v240 = vld [vmem:[%s1 + $0x238] sm:$0xf]
  %v241 = vld [vmem:[%s1 + $0x23c] sm:$0xf]
  %v322 = vunpack.c.l.b16 %v18
  %v323 = vunpack.c.h.b16 %v18
  %v324 = vunpack.c.l.b16 %v19
  %v325 = vunpack.c.h.b16 %v19
  %v326 = vunpack.c.l.b16 %v20
  %v327 = vunpack.c.h.b16 %v20
  %v328 = vunpack.c.l.b16 %v21
  %v329 = vunpack.c.h.b16 %v21
  %v330 = vunpack.c.l.b16 %v22
  %v331 = vunpack.c.l.b16 %v23
  %v332 = vunpack.c.h.b16 %v23
  %v333 = vunpack.c.l.b16 %v24
  %v334 = vunpack.c.h.b16 %v24
  %v335 = vunpack.c.l.b16 %v25
  %v336 = vunpack.c.h.b16 %v25
  %v337 = vunpack.c.l.b16 %v26
  %v338 = vunpack.c.h.b16 %v26
  %v339 = vunpack.c.l.b16 %v27
  %v340 = vunpack.c.l.b16 %v28
  %v341 = vunpack.c.h.b16 %v28
  %v342 = vunpack.c.l.b16 %v29
  %v343 = vunpack.c.h.b16 %v29
  %v344 = vunpack.c.l.b16 %v30
  %v345 = vunpack.c.h.b16 %v30
  %v346 = vunpack.c.l.b16 %v31
  %v347 = vunpack.c.h.b16 %v31
  %v348 = vunpack.c.l.b16 %v32
  %v349 = vunpack.c.l.b16 %v33
  %v350 = vunpack.c.h.b16 %v33
  %v351 = vunpack.c.l.b16 %v34
  %v352 = vunpack.c.h.b16 %v34
  %v353 = vunpack.c.l.b16 %v35
  %v354 = vunpack.c.h.b16 %v35
  %v355 = vunpack.c.l.b16 %v36
  %v356 = vunpack.c.h.b16 %v36
  %v357 = vunpack.c.l.b16 %v37
  %v358 = vunpack.c.l.b16 %v38
  %v359 = vunpack.c.h.b16 %v38
  %v360 = vunpack.c.l.b16 %v39
  %v361 = vunpack.c.h.b16 %v39
  %v362 = vunpack.c.l.b16 %v40
  %v363 = vunpack.c.h.b16 %v40
  %v364 = vunpack.c.l.b16 %v41
  %v365 = vunpack.c.h.b16 %v41
  %v366 = vunpack.c.l.b16 %v42
  %v367 = vunpack.c.l.b16 %v43
  %v368 = vunpack.c.h.b16 %v43
  %v369 = vunpack.c.l.b16 %v44
  %v370 = vunpack.c.h.b16 %v44
  %v371 = vunpack.c.l.b16 %v45
  %v372 = vunpack.c.h.b16 %v45
  %v373 = vunpack.c.l.b16 %v46
  %v374 = vunpack.c.h.b16 %v46
  %v375 = vunpack.c.l.b16 %v47
  %v376 = vunpack.c.l.b16 %v48
  %v377 = vunpack.c.h.b16 %v48
  %v378 = vunpack.c.l.b16 %v49
  %v379 = vunpack.c.h.b16 %v49
  %v380 = vunpack.c.l.b16 %v50
  %v381 = vunpack.c.h.b16 %v50
  %v382 = vunpack.c.l.b16 %v51
  %v383 = vunpack.c.h.b16 %v51
  %v384 = vunpack.c.l.b16 %v52
  %v385 = vunpack.c.l.b16 %v53
  %v386 = vunpack.c.h.b16 %v53
  %v387 = vunpack.c.l.b16 %v54
  %v388 = vunpack.c.h.b16 %v54
  %v389 = vunpack.c.l.b16 %v55
  %v390 = vunpack.c.h.b16 %v55
  %v391 = vunpack.c.l.b16 %v56
  %v392 = vunpack.c.h.b16 %v56
  %v393 = vunpack.c.l.b16 %v57
  %v394 = vunpack.c.l.b16 %v58
  %v395 = vunpack.c.h.b16 %v58
  %v396 = vunpack.c.l.b16 %v59
  %v397 = vunpack.c.h.b16 %v59
  %v398 = vunpack.c.l.b16 %v60
  %v399 = vunpack.c.h.b16 %v60
  %v400 = vunpack.c.l.b16 %v61
  %v401 = vunpack.c.h.b16 %v61
  %v402 = vunpack.c.l.b16 %v62
  %v403 = vunpack.c.l.b16 %v63
  %v404 = vunpack.c.h.b16 %v63
  %v405 = vunpack.c.l.b16 %v64
  %v406 = vunpack.c.h.b16 %v64
  %v407 = vunpack.c.l.b16 %v65
  %v408 = vunpack.c.h.b16 %v65
  %v409 = vunpack.c.l.b16 %v66
  %v410 = vunpack.c.h.b16 %v66
  %v411 = vunpack.c.l.b16 %v67
  %v412 = vunpack.c.l.b16 %v68
  %v413 = vunpack.c.h.b16 %v68
  %v414 = vunpack.c.l.b16 %v69
  %v415 = vunpack.c.h.b16 %v69
  %v416 = vunpack.c.l.b16 %v70
  %v417 = vunpack.c.h.b16 %v70
  %v418 = vunpack.c.l.b16 %v71
  %v419 = vunpack.c.h.b16 %v71
  %v420 = vunpack.c.l.b16 %v72
  %v421 = vunpack.c.l.b16 %v73
  %v422 = vunpack.c.h.b16 %v73
  %v423 = vunpack.c.l.b16 %v74
  %v424 = vunpack.c.h.b16 %v74
  %v425 = vunpack.c.l.b16 %v75
  %v426 = vunpack.c.h.b16 %v75
  %v427 = vunpack.c.l.b16 %v76
  %v428 = vunpack.c.h.b16 %v76
  %v429 = vunpack.c.l.b16 %v77
  %v430 = vunpack.c.l.b16 %v78
  %v431 = vunpack.c.h.b16 %v78
  %v432 = vunpack.c.l.b16 %v79
  %v433 = vunpack.c.h.b16 %v79
  %v434 = vunpack.c.l.b16 %v80
  %v435 = vunpack.c.h.b16 %v80
  %v436 = vunpack.c.l.b16 %v81
  %v437 = vunpack.c.h.b16 %v81
  %v438 = vunpack.c.l.b16 %v82
  %v439 = vunpack.c.l.b16 %v83
  %v440 = vunpack.c.h.b16 %v83
  %v441 = vunpack.c.l.b16 %v84
  %v442 = vunpack.c.h.b16 %v84
  %v443 = vunpack.c.l.b16 %v85
  %v444 = vunpack.c.h.b16 %v85
  %v445 = vunpack.c.l.b16 %v86
  %v446 = vunpack.c.h.b16 %v86
  %v447 = vunpack.c.l.b16 %v87
  %v448 = vunpack.c.l.b16 %v88
  %v449 = vunpack.c.h.b16 %v88
  %v450 = vunpack.c.l.b16 %v89
  %v451 = vunpack.c.h.b16 %v89
  %v452 = vunpack.c.l.b16 %v90
  %v453 = vunpack.c.h.b16 %v90
  %v454 = vunpack.c.l.b16 %v91
  %v455 = vunpack.c.h.b16 %v91
  %v456 = vunpack.c.l.b16 %v92
  %v457 = vunpack.c.l.b16 %v93
  %v458 = vunpack.c.h.b16 %v93
  %v459 = vunpack.c.l.b16 %v94
  %v460 = vunpack.c.h.b16 %v94
  %v461 = vunpack.c.l.b16 %v95
  %v462 = vunpack.c.h.b16 %v95
  %v463 = vunpack.c.l.b16 %v96
  %v464 = vunpack.c.h.b16 %v96
  %v465 = vunpack.c.l.b16 %v97
  %v466 = vpack.c.b16 %v331, %v322
  %v467 = vpack.c.b16 %v332, %v323
  %v468 = vpack.c.b16 %v333, %v324
  %v469 = vpack.c.b16 %v334, %v325
  %v470 = vpack.c.b16 %v335, %v326
  %v471 = vpack.c.b16 %v336, %v327
  %v472 = vpack.c.b16 %v337, %v328
  %v473 = vpack.c.b16 %v338, %v329
  %v474 = vpack.c.b16 %v339, %v330
  %v475 = vpack.c.b16 %v349, %v340
  %v476 = vpack.c.b16 %v350, %v341
  %v477 = vpack.c.b16 %v351, %v342
  %v478 = vpack.c.b16 %v352, %v343
  %v479 = vpack.c.b16 %v353, %v344
  %v480 = vpack.c.b16 %v354, %v345
  %v481 = vpack.c.b16 %v355, %v346
  %v482 = vpack.c.b16 %v356, %v347
  %v483 = vpack.c.b16 %v357, %v348
  %v484 = vpack.c.b16 %v367, %v358
  %v485 = vpack.c.b16 %v368, %v359
  %v486 = vpack.c.b16 %v369, %v360
  %v487 = vpack.c.b16 %v370, %v361
  %v488 = vpack.c.b16 %v371, %v362
  %v489 = vpack.c.b16 %v372, %v363
  %v490 = vpack.c.b16 %v373, %v364
  %v491 = vpack.c.b16 %v374, %v365
  %v492 = vpack.c.b16 %v375, %v366
  %v493 = vpack.c.b16 %v385, %v376
  %v494 = vpack.c.b16 %v386, %v377
  %v495 = vpack.c.b16 %v387, %v378
  %v496 = vpack.c.b16 %v388, %v379
  %v497 = vpack.c.b16 %v389, %v380
  %v498 = vpack.c.b16 %v390, %v381
  %v499 = vpack.c.b16 %v391, %v382
  %v500 = vpack.c.b16 %v392, %v383
  %v501 = vpack.c.b16 %v393, %v384
  %v502 = vpack.c.b16 %v403, %v394
  %v503 = vpack.c.b16 %v404, %v395
  %v504 = vpack.c.b16 %v405, %v396
  %v505 = vpack.c.b16 %v406, %v397
  %v506 = vpack.c.b16 %v407, %v398
  %v507 = vpack.c.b16 %v408, %v399
  %v508 = vpack.c.b16 %v409, %v400
  %v509 = vpack.c.b16 %v410, %v401
  %v510 = vpack.c.b16 %v411, %v402
  %v511 = vpack.c.b16 %v421, %v412
  %v512 = vpack.c.b16 %v422, %v413
  %v513 = vpack.c.b16 %v423, %v414
  %v514 = vpack.c.b16 %v424, %v415
  %v515 = vpack.c.b16 %v425, %v416
  %v516 = vpack.c.b16 %v426, %v417
  %v517 = vpack.c.b16 %v427, %v418
  %v518 = vpack.c.b16 %v428, %v419
  %v519 = vpack.c.b16 %v429, %v420
  %v520 = vpack.c.b16 %v439, %v430
  %v521 = vpack.c.b16 %v440, %v431
  %v522 = vpack.c.b16 %v441, %v432
  %v523 = vpack.c.b16 %v442, %v433
  %v524 = vpack.c.b16 %v443, %v434
  %v525 = vpack.c.b16 %v444, %v435
  %v526 = vpack.c.b16 %v445, %v436
  %v527 = vpack.c.b16 %v446, %v437
  %v528 = vpack.c.b16 %v447, %v438
  %v529 = vpack.c.b16 %v457, %v448
  %v530 = vpack.c.b16 %v458, %v449
  %v531 = vpack.c.b16 %v459, %v450
  %v532 = vpack.c.b16 %v460, %v451
  %v533 = vpack.c.b16 %v461, %v452
  %v534 = vpack.c.b16 %v462, %v453
  %v535 = vpack.c.b16 %v463, %v454
  %v536 = vpack.c.b16 %v464, %v455
  %v537 = vpack.c.b16 %v465, %v456
  %v754 = vunpack.c.l.b16 %v98
  %v755 = vunpack.c.l.b16 %v99
  %v756 = vunpack.c.l.b16 %v100
  %v757 = vunpack.c.l.b16 %v101
  %v758 = vunpack.c.l.b16 %v102
  %v759 = vunpack.c.l.b16 %v103
  %v760 = vunpack.c.l.b16 %v104
  %v761 = vunpack.c.l.b16 %v105
  %v762 = vunpack.c.l.b16 %v106
  %v763 = vunpack.c.l.b16 %v107
  %v764 = vunpack.c.l.b16 %v108
  %v765 = vunpack.c.l.b16 %v109
  %v766 = vunpack.c.l.b16 %v110
  %v767 = vunpack.c.l.b16 %v111
  %v768 = vunpack.c.l.b16 %v112
  %v769 = vunpack.c.l.b16 %v113
  %v770 = vunpack.c.l.b16 %v114
  %v771 = vunpack.c.l.b16 %v115
  %v772 = vunpack.c.l.b16 %v116
  %v773 = vunpack.c.l.b16 %v117
  %v774 = vunpack.c.l.b16 %v118
  %v775 = vunpack.c.l.b16 %v119
  %v776 = vunpack.c.l.b16 %v120
  %v777 = vunpack.c.l.b16 %v121
  %v778 = vunpack.c.l.b16 %v122
  %v779 = vunpack.c.l.b16 %v123
  %v780 = vunpack.c.l.b16 %v124
  %v781 = vunpack.c.l.b16 %v125
  %v782 = vunpack.c.l.b16 %v126
  %v783 = vunpack.c.l.b16 %v127
  %v784 = vunpack.c.l.b16 %v128
  %v785 = vunpack.c.l.b16 %v129
  %v786 = vunpack.c.l.b16 %v130
  %v787 = vunpack.c.l.b16 %v131
  %v788 = vunpack.c.l.b16 %v132
  %v789 = vunpack.c.l.b16 %v133
  %v790 = vunpack.c.l.b16 %v134
  %v791 = vunpack.c.l.b16 %v135
  %v792 = vunpack.c.l.b16 %v136
  %v793 = vunpack.c.l.b16 %v137
  %v794 = vunpack.c.l.b16 %v138
  %v795 = vunpack.c.l.b16 %v139
  %v796 = vunpack.c.l.b16 %v140
  %v797 = vunpack.c.l.b16 %v141
  %v798 = vunpack.c.l.b16 %v142
  %v799 = vunpack.c.l.b16 %v143
  %v800 = vunpack.c.l.b16 %v144
  %v801 = vunpack.c.l.b16 %v145
  %v802 = vunpack.c.l.b16 %v146
  %v803 = vunpack.c.l.b16 %v147
  %v804 = vunpack.c.l.b16 %v148
  %v805 = vunpack.c.l.b16 %v149
  %v806 = vunpack.c.l.b16 %v150
  %v807 = vunpack.c.l.b16 %v151
  %v808 = vunpack.c.l.b16 %v152
  %v809 = vunpack.c.l.b16 %v153
  %v810 = vunpack.c.l.b16 %v154
  %v811 = vunpack.c.l.b16 %v155
  %v812 = vunpack.c.l.b16 %v156
  %v813 = vunpack.c.l.b16 %v157
  %v814 = vunpack.c.l.b16 %v158
  %v815 = vunpack.c.l.b16 %v159
  %v816 = vunpack.c.l.b16 %v160
  %v817 = vunpack.c.l.b16 %v161
  %v818 = vunpack.c.l.b16 %v162
  %v819 = vunpack.c.l.b16 %v163
  %v820 = vunpack.c.l.b16 %v164
  %v821 = vunpack.c.l.b16 %v165
  %v822 = vunpack.c.l.b16 %v166
  %v823 = vunpack.c.l.b16 %v167
  %v824 = vunpack.c.l.b16 %v168
  %v825 = vunpack.c.l.b16 %v169
  %v826 = vunpack.c.l.b16 %v170
  %v827 = vunpack.c.l.b16 %v171
  %v828 = vunpack.c.l.b16 %v172
  %v829 = vunpack.c.l.b16 %v173
  %v830 = vunpack.c.l.b16 %v174
  %v831 = vunpack.c.l.b16 %v175
  %v832 = vunpack.c.l.b16 %v176
  %v833 = vunpack.c.l.b16 %v177
  %v834 = vunpack.c.l.b16 %v178
  %v835 = vunpack.c.l.b16 %v179
  %v836 = vunpack.c.l.b16 %v180
  %v837 = vunpack.c.l.b16 %v181
  %v838 = vunpack.c.l.b16 %v182
  %v839 = vunpack.c.l.b16 %v183
  %v840 = vunpack.c.l.b16 %v184
  %v841 = vunpack.c.l.b16 %v185
  %v842 = vunpack.c.l.b16 %v186
  %v843 = vunpack.c.l.b16 %v187
  %v844 = vunpack.c.l.b16 %v188
  %v845 = vunpack.c.l.b16 %v189
  %v846 = vunpack.c.l.b16 %v190
  %v847 = vunpack.c.l.b16 %v191
  %v848 = vunpack.c.l.b16 %v192
  %v849 = vunpack.c.l.b16 %v193
  %v850 = vunpack.c.l.b16 %v194
  %v851 = vunpack.c.l.b16 %v195
  %v852 = vunpack.c.l.b16 %v196
  %v853 = vunpack.c.l.b16 %v197
  %v854 = vunpack.c.l.b16 %v198
  %v855 = vunpack.c.l.b16 %v199
  %v856 = vunpack.c.l.b16 %v200
  %v857 = vunpack.c.l.b16 %v201
  %v858 = vunpack.c.l.b16 %v202
  %v859 = vunpack.c.l.b16 %v203
  %v860 = vunpack.c.l.b16 %v204
  %v861 = vunpack.c.l.b16 %v205
  %v862 = vunpack.c.l.b16 %v206
  %v863 = vunpack.c.l.b16 %v207
  %v864 = vunpack.c.l.b16 %v208
  %v865 = vunpack.c.l.b16 %v209
  %v866 = vunpack.c.l.b16 %v210
  %v867 = vunpack.c.l.b16 %v211
  %v868 = vunpack.c.l.b16 %v212
  %v869 = vunpack.c.l.b16 %v213
  %v870 = vunpack.c.l.b16 %v214
  %v871 = vunpack.c.l.b16 %v215
  %v872 = vunpack.c.l.b16 %v216
  %v873 = vunpack.c.l.b16 %v217
  %v874 = vunpack.c.l.b16 %v218
  %v875 = vunpack.c.l.b16 %v219
  %v876 = vunpack.c.l.b16 %v220
  %v877 = vunpack.c.l.b16 %v221
  %v878 = vunpack.c.l.b16 %v222
  %v879 = vunpack.c.l.b16 %v223
  %v880 = vunpack.c.l.b16 %v224
  %v881 = vunpack.c.l.b16 %v225
  %v882 = vunpack.c.l.b16 %v226
  %v883 = vunpack.c.l.b16 %v227
  %v884 = vunpack.c.l.b16 %v228
  %v885 = vunpack.c.l.b16 %v229
  %v886 = vunpack.c.l.b16 %v230
  %v887 = vunpack.c.l.b16 %v231
  %v888 = vunpack.c.l.b16 %v232
  %v889 = vunpack.c.l.b16 %v233
  %v890 = vunpack.c.l.b16 %v234
  %v891 = vunpack.c.l.b16 %v235
  %v892 = vunpack.c.l.b16 %v236
  %v893 = vunpack.c.l.b16 %v237
  %v894 = vunpack.c.l.b16 %v238
  %v895 = vunpack.c.l.b16 %v239
  %v896 = vunpack.c.l.b16 %v240
  %v897 = vunpack.c.l.b16 %v241
  %v898 = vpack.c.b16 %v755, %v754
  %v899 = vpack.c.b16 %v757, %v756
  %v900 = vpack.c.b16 %v759, %v758
  %v901 = vpack.c.b16 %v761, %v760
  %v902 = vpack.c.b16 %v763, %v762
  %v903 = vpack.c.b16 %v765, %v764
  %v904 = vpack.c.b16 %v767, %v766
  %v905 = vpack.c.b16 %v769, %v768
  %v906 = vpack.c.b16 %v771, %v770
  %v907 = vpack.c.b16 %v773, %v772
  %v908 = vpack.c.b16 %v775, %v774
  %v909 = vpack.c.b16 %v777, %v776
  %v910 = vpack.c.b16 %v779, %v778
  %v911 = vpack.c.b16 %v781, %v780
  %v912 = vpack.c.b16 %v783, %v782
  %v913 = vpack.c.b16 %v785, %v784
  %v914 = vpack.c.b16 %v787, %v786
  %v915 = vpack.c.b16 %v789, %v788
  %v916 = vpack.c.b16 %v791, %v790
  %v917 = vpack.c.b16 %v793, %v792
  %v918 = vpack.c.b16 %v795, %v794
  %v919 = vpack.c.b16 %v797, %v796
  %v920 = vpack.c.b16 %v799, %v798
  %v921 = vpack.c.b16 %v801, %v800
  %v922 = vpack.c.b16 %v803, %v802
  %v923 = vpack.c.b16 %v805, %v804
  %v924 = vpack.c.b16 %v807, %v806
  %v925 = vpack.c.b16 %v809, %v808
  %v926 = vpack.c.b16 %v811, %v810
  %v927 = vpack.c.b16 %v813, %v812
  %v928 = vpack.c.b16 %v815, %v814
  %v929 = vpack.c.b16 %v817, %v816
  %v930 = vpack.c.b16 %v819, %v818
  %v931 = vpack.c.b16 %v821, %v820
  %v932 = vpack.c.b16 %v823, %v822
  %v933 = vpack.c.b16 %v825, %v824
  %v934 = vpack.c.b16 %v827, %v826
  %v935 = vpack.c.b16 %v829, %v828
  %v936 = vpack.c.b16 %v831, %v830
  %v937 = vpack.c.b16 %v833, %v832
  %v938 = vpack.c.b16 %v835, %v834
  %v939 = vpack.c.b16 %v837, %v836
  %v940 = vpack.c.b16 %v839, %v838
  %v941 = vpack.c.b16 %v841, %v840
  %v942 = vpack.c.b16 %v843, %v842
  %v943 = vpack.c.b16 %v845, %v844
  %v944 = vpack.c.b16 %v847, %v846
  %v945 = vpack.c.b16 %v849, %v848
  %v946 = vpack.c.b16 %v851, %v850
  %v947 = vpack.c.b16 %v853, %v852
  %v948 = vpack.c.b16 %v855, %v854
  %v949 = vpack.c.b16 %v857, %v856
  %v950 = vpack.c.b16 %v859, %v858
  %v951 = vpack.c.b16 %v861, %v860
  %v952 = vpack.c.b16 %v863, %v862
  %v953 = vpack.c.b16 %v865, %v864
  %v954 = vpack.c.b16 %v867, %v866
  %v955 = vpack.c.b16 %v869, %v868
  %v956 = vpack.c.b16 %v871, %v870
  %v957 = vpack.c.b16 %v873, %v872
  %v958 = vpack.c.b16 %v875, %v874
  %v959 = vpack.c.b16 %v877, %v876
  %v960 = vpack.c.b16 %v879, %v878
  %v961 = vpack.c.b16 %v881, %v880
  %v962 = vpack.c.b16 %v883, %v882
  %v963 = vpack.c.b16 %v885, %v884
  %v964 = vpack.c.b16 %v887, %v886
  %v965 = vpack.c.b16 %v889, %v888
  %v966 = vpack.c.b16 %v891, %v890
  %v967 = vpack.c.b16 %v893, %v892
  %v968 = vpack.c.b16 %v895, %v894
  %v969 = vpack.c.b16 %v897, %v896
  %1042 = vmatprep.subr.bf16.mxu0 0
  %1043 = vmatpush1.bf16.msra.mxu0 %v898
  %1044 = vmatprep.subr.bf16.mxu0 0
  %1045 = vmatpush1.bf16.msra.mxu0 %v899
  %1046 = vmatprep.subr.bf16.mxu0 0
  %1047 = vmatpush1.bf16.msra.mxu0 %v900
  %1048 = vmatprep.subr.bf16.mxu0 0
  %1049 = vmatpush1.bf16.msra.mxu0 %v901
  %1050 = vmatprep.subr.bf16.mxu0 0
  %1051 = vmatpush1.bf16.msra.mxu0 %v902
  %1052 = vmatprep.subr.bf16.mxu0 0
  %1053 = vmatpush1.bf16.msra.mxu0 %v903
  %1054 = vmatprep.subr.bf16.mxu0 0
  %1055 = vmatpush1.bf16.msra.mxu0 %v904
  %1056 = vmatprep.subr.bf16.mxu0 0
  %1057 = vmatpush1.bf16.msra.mxu0 %v905
  %1058 = vmatprep.subr.bf16.mxu0 0
  %1059 = vmatpush1.bf16.msra.mxu0 %v906
  %1060 = vmatprep.subr.bf16.mxu0 0
  %1061 = vmatpush1.bf16.msra.mxu0 %v907
  %1062 = vmatprep.subr.bf16.mxu0 0
  %1063 = vmatpush1.bf16.msra.mxu0 %v908
  %1064 = vmatprep.subr.bf16.mxu0 0
  %1065 = vmatpush1.bf16.msra.mxu0 %v909
  %1066 = vmatprep.subr.bf16.mxu0 0
  %1067 = vmatpush1.bf16.msra.mxu0 %v910
  %1068 = vmatprep.subr.bf16.mxu0 0
  %1069 = vmatpush1.bf16.msra.mxu0 %v911
  %1070 = vmatprep.subr.bf16.mxu0 0
  %1071 = vmatpush1.bf16.msra.mxu0 %v912
  %1072 = vmatprep.subr.bf16.mxu0 0
  %1073 = vmatpush1.bf16.msra.mxu0 %v913
  %1074 = vmatprep.mubr.bf16.mxu0 %v467
  %1075 = vmatmul.mubr.bf16.gmra.mrb[0].mxu0 %v466
  %v1076 = vpop.f32.mrb[0].mxu0
  %v1077 = vadd.f32 0.0, %v1076
  %v1078 = vpop.f32.mrb[0].mxu0
  %v1079 = vpop.f32.mrb[0].mxu0
  %v1080 = vadd.f32 0.0, %v1079
  %v1081 = vpop.f32.mrb[0].mxu0
  %1082 = vmatprep.mubr.bf16.mxu0 %v476
  %1083 = vmatmul.mubr.bf16.gmra.mrb[0].mxu0 %v475
  %v1084 = vpop.f32.mrb[0].mxu0
  %v1085 = vadd.f32 0.0, %v1084
  %v1086 = vpop.f32.mrb[0].mxu0
  %v1087 = vpop.f32.mrb[0].mxu0
  %v1088 = vadd.f32 0.0, %v1087
  %v1089 = vpop.f32.mrb[0].mxu0
  %1090 = vmatprep.mubr.bf16.mxu0 %v485
  %1091 = vmatmul.mubr.bf16.gmra.mrb[0].mxu0 %v484
  %v1092 = vpop.f32.mrb[0].mxu0
  %v1093 = vadd.f32 0.0, %v1092
  %v1094 = vpop.f32.mrb[0].mxu0
  %v1095 = vpop.f32.mrb[0].mxu0
  %v1096 = vadd.f32 0.0, %v1095
  %v1097 = vpop.f32.mrb[0].mxu0
  %1098 = vmatprep.mubr.bf16.mxu0 %v494
  %1099 = vmatmul.mubr.bf16.gmra.mrb[0].mxu0 %v493
  %v1100 = vpop.f32.mrb[0].mxu0
  %v1101 = vadd.f32 0.0, %v1100
  %v1102 = vpop.f32.mrb[0].mxu0
  %v1103 = vpop.f32.mrb[0].mxu0
  %v1104 = vadd.f32 0.0, %v1103
  %v1105 = vpop.f32.mrb[0].mxu0
  %1106 = vmatprep.mubr.bf16.mxu0 %v503
  %1107 = vmatmul.mubr.bf16.gmra.mrb[0].mxu0 %v502
  %v1108 = vpop.f32.mrb[0].mxu0
  %v1109 = vadd.f32 0.0, %v1108
  %v1110 = vpop.f32.mrb[0].mxu0
  %v1111 = vpop.f32.mrb[0].mxu0
  %v1112 = vadd.f32 0.0, %v1111
  %v1113 = vpop.f32.mrb[0].mxu0
  %1114 = vmatprep.mubr.bf16.mxu0 %v512
  %1115 = vmatmul.mubr.bf16.gmra.mrb[0].mxu0 %v511
  %v1116 = vpop.f32.mrb[0].mxu0
  %v1117 = vadd.f32 0.0, %v1116
  %v1118 = vpop.f32.mrb[0].mxu0
  %v1119 = vpop.f32.mrb[0].mxu0
  %v1120 = vadd.f32 0.0, %v1119
  %v1121 = vpop.f32.mrb[0].mxu0
  %1122 = vmatprep.mubr.bf16.mxu0 %v521
  %1123 = vmatmul.mubr.bf16.gmra.mrb[0].mxu0 %v520
  %v1124 = vpop.f32.mrb[0].mxu0
  %v1125 = vadd.f32 0.0, %v1124
  %v1126 = vpop.f32.mrb[0].mxu0
  %v1127 = vpop.f32.mrb[0].mxu0
  %v1128 = vadd.f32 0.0, %v1127
  %v1129 = vpop.f32.mrb[0].mxu0
  %1130 = vmatprep.mubr.bf16.mxu0 %v530
  %1131 = vmatmul.mubr.bf16.gmra.mrb[0].mxu0 %v529
  %v1132 = vpop.f32.mrb[0].mxu0
  %v1133 = vadd.f32 0.0, %v1132
  %v1134 = vpop.f32.mrb[0].mxu0
  %v1135 = vpop.f32.mrb[0].mxu0
  %v1136 = vadd.f32 0.0, %v1135
  %v1137 = vpop.f32.mrb[0].mxu0
  %1138 = vdwg.mxu0
  %1139 = vmatprep.subr.bf16.mxu0 0
  %1140 = vmatpush1.bf16.msra.mxu0 %v914
  %1141 = vmatprep.subr.bf16.mxu0 0
  %1142 = vmatpush1.bf16.msra.mxu0 %v915
  %1143 = vmatprep.subr.bf16.mxu0 0
  %1144 = vmatpush1.bf16.msra.mxu0 %v916
  %1145 = vmatprep.subr.bf16.mxu0 0
  %1146 = vmatpush1.bf16.msra.mxu0 %v917
  %1147 = vmatprep.subr.bf16.mxu0 0
  %1148 = vmatpush1.bf16.msra.mxu0 %v918
  %1149 = vmatprep.subr.bf16.mxu0 0
  %1150 = vmatpush1.bf16.msra.mxu0 %v919
  %1151 = vmatprep.subr.bf16.mxu0 0
  %1152 = vmatpush1.bf16.msra.mxu0 %v920
  %1153 = vmatprep.subr.bf16.mxu0 0
  %1154 = vmatpush1.bf16.msra.mxu0 %v921
  %1155 = vmatprep.subr.bf16.mxu0 0
  %1156 = vmatpush1.bf16.msra.mxu0 %v922
  %1157 = vmatprep.subr.bf16.mxu0 0
  %1158 = vmatpush1.bf16.msra.mxu0 %v923
  %1159 = vmatprep.subr.bf16.mxu0 0
  %1160 = vmatpush1.bf16.msra.mxu0 %v924
  %1161 = vmatprep.subr.bf16.mxu0 0
  %1162 = vmatpush1.bf16.msra.mxu0 %v925
  %1163 = vmatprep.subr.bf16.mxu0 0
  %1164 = vmatpush1.bf16.msra.mxu0 %v926
  %1165 = vmatprep.subr.bf16.mxu0 0
  %1166 = vmatpush1.bf16.msra.mxu0 %v927
  %1167 = vmatprep.subr.bf16.mxu0 0
  %1168 = vmatpush1.bf16.msra.mxu0 %v928
  %1169 = vmatprep.subr.bf16.mxu0 0
  %1170 = vmatpush1.bf16.msra.mxu0 %v929
  %1171 = vmatprep.mubr.bf16.mxu0 %v469
  %1172 = vmatmul.mubr.bf16.gmra.mrb[0].mxu0 %v468
  %v1173 = vpop.f32.mrb[0].mxu0
  %v1174 = vadd.f32 %v1077, %v1173
  %v1175 = vpop.f32.mrb[0].mxu0
  %v1176 = vpop.f32.mrb[0].mxu0
  %v1177 = vadd.f32 %v1080, %v1176
  %v1178 = vpop.f32.mrb[0].mxu0
  %1179 = vmatprep.mubr.bf16.mxu0 %v478
  %1180 = vmatmul.mubr.bf16.gmra.mrb[0].mxu0 %v477
  %v1181 = vpop.f32.mrb[0].mxu0
  %v1182 = vadd.f32 %v1085, %v1181
  %v1183 = vpop.f32.mrb[0].mxu0
  %v1184 = vpop.f32.mrb[0].mxu0
  %v1185 = vadd.f32 %v1088, %v1184
  %v1186 = vpop.f32.mrb[0].mxu0
  %1187 = vmatprep.mubr.bf16.mxu0 %v487
  %1188 = vmatmul.mubr.bf16.gmra.mrb[0].mxu0 %v486
  %v1189 = vpop.f32.mrb[0].mxu0
  %v1190 = vadd.f32 %v1093, %v1189
  %v1191 = vpop.f32.mrb[0].mxu0
  %v1192 = vpop.f32.mrb[0].mxu0
  %v1193 = vadd.f32 %v1096, %v1192
  %v1194 = vpop.f32.mrb[0].mxu0
  %1195 = vmatprep.mubr.bf16.mxu0 %v496
  %1196 = vmatmul.mubr.bf16.gmra.mrb[0].mxu0 %v495
  %v1197 = vpop.f32.mrb[0].mxu0
  %v1198 = vadd.f32 %v1101, %v1197
  %v1199 = vpop.f32.mrb[0].mxu0
  %v1200 = vpop.f32.mrb[0].mxu0
  %v1201 = vadd.f32 %v1104, %v1200
  %v1202 = vpop.f32.mrb[0].mxu0
  %1203 = vmatprep.mubr.bf16.mxu0 %v505
  %1204 = vmatmul.mubr.bf16.gmra.mrb[0].mxu0 %v504
  %v1205 = vpop.f32.mrb[0].mxu0
  %v1206 = vadd.f32 %v1109, %v1205
  %v1207 = vpop.f32.mrb[0].mxu0
  %v1208 = vpop.f32.mrb[0].mxu0
  %v1209 = vadd.f32 %v1112, %v1208
  %v1210 = vpop.f32.mrb[0].mxu0
  %1211 = vmatprep.mubr.bf16.mxu0 %v514
  %1212 = vmatmul.mubr.bf16.gmra.mrb[0].mxu0 %v513
  %v1213 = vpop.f32.mrb[0].mxu0
  %v1214 = vadd.f32 %v1117, %v1213
  %v1215 = vpop.f32.mrb[0].mxu0
  %v1216 = vpop.f32.mrb[0].mxu0
  %v1217 = vadd.f32 %v1120, %v1216
  %v1218 = vpop.f32.mrb[0].mxu0
  %1219 = vmatprep.mubr.bf16.mxu0 %v523
  %1220 = vmatmul.mubr.bf16.gmra.mrb[0].mxu0 %v522
  %v1221 = vpop.f32.mrb[0].mxu0
  %v1222 = vadd.f32 %v1125, %v1221
  %v1223 = vpop.f32.mrb[0].mxu0
  %v1224 = vpop.f32.mrb[0].mxu0
  %v1225 = vadd.f32 %v1128, %v1224
  %v1226 = vpop.f32.mrb[0].mxu0
  %1227 = vmatprep.mubr.bf16.mxu0 %v532
  %1228 = vmatmul.mubr.bf16.gmra.mrb[0].mxu0 %v531
  %v1229 = vpop.f32.mrb[0].mxu0
  %v1230 = vadd.f32 %v1133, %v1229
  %v1231 = vpop.f32.mrb[0].mxu0
  %v1232 = vpop.f32.mrb[0].mxu0
  %v1233 = vadd.f32 %v1136, %v1232
  %v1234 = vpop.f32.mrb[0].mxu0
  %1235 = vdwg.mxu0
  %1236 = vmatprep.subr.bf16.mxu0 0
  %1237 = vmatpush1.bf16.msra.mxu0 %v930
  %1238 = vmatprep.subr.bf16.mxu0 0
  %1239 = vmatpush1.bf16.msra.mxu0 %v931
  %1240 = vmatprep.subr.bf16.mxu0 0
  %1241 = vmatpush1.bf16.msra.mxu0 %v932
  %1242 = vmatprep.subr.bf16.mxu0 0
  %1243 = vmatpush1.bf16.msra.mxu0 %v933
  %1244 = vmatprep.subr.bf16.mxu0 0
  %1245 = vmatpush1.bf16.msra.mxu0 %v934
  %1246 = vmatprep.subr.bf16.mxu0 0
  %1247 = vmatpush1.bf16.msra.mxu0 %v935
  %1248 = vmatprep.subr.bf16.mxu0 0
  %1249 = vmatpush1.bf16.msra.mxu0 %v936
  %1250 = vmatprep.subr.bf16.mxu0 0
  %1251 = vmatpush1.bf16.msra.mxu0 %v937
  %1252 = vmatprep.subr.bf16.mxu0 0
  %1253 = vmatpush1.bf16.msra.mxu0 %v938
  %1254 = vmatprep.subr.bf16.mxu0 0
  %1255 = vmatpush1.bf16.msra.mxu0 %v939
  %1256 = vmatprep.subr.bf16.mxu0 0
  %1257 = vmatpush1.bf16.msra.mxu0 %v940
  %1258 = vmatprep.subr.bf16.mxu0 0
  %1259 = vmatpush1.bf16.msra.mxu0 %v941
  %1260 = vmatprep.subr.bf16.mxu0 0
  %1261 = vmatpush1.bf16.msra.mxu0 %v942
  %1262 = vmatprep.subr.bf16.mxu0 0
  %1263 = vmatpush1.bf16.msra.mxu0 %v943
  %1264 = vmatprep.subr.bf16.mxu0 0
  %1265 = vmatpush1.bf16.msra.mxu0 %v944
  %1266 = vmatprep.subr.bf16.mxu0 0
  %1267 = vmatpush1.bf16.msra.mxu0 %v945
  %1268 = vmatprep.mubr.bf16.mxu0 %v471
  %1269 = vmatmul.mubr.bf16.gmra.mrb[0].mxu0 %v470
  %v1270 = vpop.f32.mrb[0].mxu0
  %v1271 = vadd.f32 %v1174, %v1270
  %v1272 = vpop.f32.mrb[0].mxu0
  %v1273 = vpop.f32.mrb[0].mxu0
  %v1274 = vadd.f32 %v1177, %v1273
  %v1275 = vpop.f32.mrb[0].mxu0
  %1276 = vmatprep.mubr.bf16.mxu0 %v480
  %1277 = vmatmul.mubr.bf16.gmra.mrb[0].mxu0 %v479
  %v1278 = vpop.f32.mrb[0].mxu0
  %v1279 = vadd.f32 %v1182, %v1278
  %v1280 = vpop.f32.mrb[0].mxu0
  %v1281 = vpop.f32.mrb[0].mxu0
  %v1282 = vadd.f32 %v1185, %v1281
  %v1283 = vpop.f32.mrb[0].mxu0
  %1284 = vmatprep.mubr.bf16.mxu0 %v489
  %1285 = vmatmul.mubr.bf16.gmra.mrb[0].mxu0 %v488
  %v1286 = vpop.f32.mrb[0].mxu0
  %v1287 = vadd.f32 %v1190, %v1286
  %v1288 = vpop.f32.mrb[0].mxu0
  %v1289 = vpop.f32.mrb[0].mxu0
  %v1290 = vadd.f32 %v1193, %v1289
  %v1291 = vpop.f32.mrb[0].mxu0
  %1292 = vmatprep.mubr.bf16.mxu0 %v498
  %1293 = vmatmul.mubr.bf16.gmra.mrb[0].mxu0 %v497
  %v1294 = vpop.f32.mrb[0].mxu0
  %v1295 = vadd.f32 %v1198, %v1294
  %v1296 = vpop.f32.mrb[0].mxu0
  %v1297 = vpop.f32.mrb[0].mxu0
  %v1298 = vadd.f32 %v1201, %v1297
  %v1299 = vpop.f32.mrb[0].mxu0
  %1300 = vmatprep.mubr.bf16.mxu0 %v507
  %1301 = vmatmul.mubr.bf16.gmra.mrb[0].mxu0 %v506
  %v1302 = vpop.f32.mrb[0].mxu0
  %v1303 = vadd.f32 %v1206, %v1302
  %v1304 = vpop.f32.mrb[0].mxu0
  %v1305 = vpop.f32.mrb[0].mxu0
  %v1306 = vadd.f32 %v1209, %v1305
  %v1307 = vpop.f32.mrb[0].mxu0
  %1308 = vmatprep.mubr.bf16.mxu0 %v516
  %1309 = vmatmul.mubr.bf16.gmra.mrb[0].mxu0 %v515
  %v1310 = vpop.f32.mrb[0].mxu0
  %v1311 = vadd.f32 %v1214, %v1310
  %v1312 = vpop.f32.mrb[0].mxu0
  %v1313 = vpop.f32.mrb[0].mxu0
  %v1314 = vadd.f32 %v1217, %v1313
  %v1315 = vpop.f32.mrb[0].mxu0
  %1316 = vmatprep.mubr.bf16.mxu0 %v525
  %1317 = vmatmul.mubr.bf16.gmra.mrb[0].mxu0 %v524
  %v1318 = vpop.f32.mrb[0].mxu0
  %v1319 = vadd.f32 %v1222, %v1318
  %v1320 = vpop.f32.mrb[0].mxu0
  %v1321 = vpop.f32.mrb[0].mxu0
  %v1322 = vadd.f32 %v1225, %v1321
  %v1323 = vpop.f32.mrb[0].mxu0
  %1324 = vmatprep.mubr.bf16.mxu0 %v534
  %1325 = vmatmul.mubr.bf16.gmra.mrb[0].mxu0 %v533
  %v1326 = vpop.f32.mrb[0].mxu0
  %v1327 = vadd.f32 %v1230, %v1326
  %v1328 = vpop.f32.mrb[0].mxu0
  %v1329 = vpop.f32.mrb[0].mxu0
  %v1330 = vadd.f32 %v1233, %v1329
  %v1331 = vpop.f32.mrb[0].mxu0
  %1332 = vdwg.mxu0
  %1333 = vmatprep.subr.bf16.mxu0 0
  %1334 = vmatpush1.bf16.msra.mxu0 %v946
  %1335 = vmatprep.subr.bf16.mxu0 0
  %1336 = vmatpush1.bf16.msra.mxu0 %v947
  %1337 = vmatprep.subr.bf16.mxu0 0
  %1338 = vmatpush1.bf16.msra.mxu0 %v948
  %1339 = vmatprep.subr.bf16.mxu0 0
  %1340 = vmatpush1.bf16.msra.mxu0 %v949
  %1341 = vmatprep.subr.bf16.mxu0 0
  %1342 = vmatpush1.bf16.msra.mxu0 %v950
  %1343 = vmatprep.subr.bf16.mxu0 0
  %1344 = vmatpush1.bf16.msra.mxu0 %v951
  %1345 = vmatprep.subr.bf16.mxu0 0
  %1346 = vmatpush1.bf16.msra.mxu0 %v952
  %1347 = vmatprep.subr.bf16.mxu0 0
  %1348 = vmatpush1.bf16.msra.mxu0 %v953
  %1349 = vmatprep.subr.bf16.mxu0 0
  %1350 = vmatpush1.bf16.msra.mxu0 %v954
  %1351 = vmatprep.subr.bf16.mxu0 0
  %1352 = vmatpush1.bf16.msra.mxu0 %v955
  %1353 = vmatprep.subr.bf16.mxu0 0
  %1354 = vmatpush1.bf16.msra.mxu0 %v956
  %1355 = vmatprep.subr.bf16.mxu0 0
  %1356 = vmatpush1.bf16.msra.mxu0 %v957
  %1357 = vmatprep.subr.bf16.mxu0 0
  %1358 = vmatpush1.bf16.msra.mxu0 %v958
  %1359 = vmatprep.subr.bf16.mxu0 0
  %1360 = vmatpush1.bf16.msra.mxu0 %v959
  %1361 = vmatprep.subr.bf16.mxu0 0
  %1362 = vmatpush1.bf16.msra.mxu0 %v960
  %1363 = vmatprep.subr.bf16.mxu0 0
  %1364 = vmatpush1.bf16.msra.mxu0 %v961
  %1365 = vmatprep.mubr.bf16.mxu0 %v473
  %1366 = vmatmul.mubr.bf16.gmra.mrb[0].mxu0 %v472
  %v1367 = vpop.f32.mrb[0].mxu0
  %v1368 = vadd.f32 %v1271, %v1367
  %v1369 = vpop.f32.mrb[0].mxu0
  %v1370 = vpop.f32.mrb[0].mxu0
  %v1371 = vadd.f32 %v1274, %v1370
  %v1372 = vpop.f32.mrb[0].mxu0
  %1373 = vmatprep.mubr.bf16.mxu0 %v482
  %1374 = vmatmul.mubr.bf16.gmra.mrb[0].mxu0 %v481
  %v1375 = vpop.f32.mrb[0].mxu0
  %v1376 = vadd.f32 %v1279, %v1375
  %v1377 = vpop.f32.mrb[0].mxu0
  %v1378 = vpop.f32.mrb[0].mxu0
  %v1379 = vadd.f32 %v1282, %v1378
  %v1380 = vpop.f32.mrb[0].mxu0
  %1381 = vmatprep.mubr.bf16.mxu0 %v491
  %1382 = vmatmul.mubr.bf16.gmra.mrb[0].mxu0 %v490
  %v1383 = vpop.f32.mrb[0].mxu0
  %v1384 = vadd.f32 %v1287, %v1383
  %v1385 = vpop.f32.mrb[0].mxu0
  %v1386 = vpop.f32.mrb[0].mxu0
  %v1387 = vadd.f32 %v1290, %v1386
  %v1388 = vpop.f32.mrb[0].mxu0
  %1389 = vmatprep.mubr.bf16.mxu0 %v500
  %1390 = vmatmul.mubr.bf16.gmra.mrb[0].mxu0 %v499
  %v1391 = vpop.f32.mrb[0].mxu0
  %v1392 = vadd.f32 %v1295, %v1391
  %v1393 = vpop.f32.mrb[0].mxu0
  %v1394 = vpop.f32.mrb[0].mxu0
  %v1395 = vadd.f32 %v1298, %v1394
  %v1396 = vpop.f32.mrb[0].mxu0
  %1397 = vmatprep.mubr.bf16.mxu0 %v509
  %1398 = vmatmul.mubr.bf16.gmra.mrb[0].mxu0 %v508
  %v1399 = vpop.f32.mrb[0].mxu0
  %v1400 = vadd.f32 %v1303, %v1399
  %v1401 = vpop.f32.mrb[0].mxu0
  %v1402 = vpop.f32.mrb[0].mxu0
  %v1403 = vadd.f32 %v1306, %v1402
  %v1404 = vpop.f32.mrb[0].mxu0
  %1405 = vmatprep.mubr.bf16.mxu0 %v518
  %1406 = vmatmul.mubr.bf16.gmra.mrb[0].mxu0 %v517
  %v1407 = vpop.f32.mrb[0].mxu0
  %v1408 = vadd.f32 %v1311, %v1407
  %v1409 = vpop.f32.mrb[0].mxu0
  %v1410 = vpop.f32.mrb[0].mxu0
  %v1411 = vadd.f32 %v1314, %v1410
  %v1412 = vpop.f32.mrb[0].mxu0
  %1413 = vmatprep.mubr.bf16.mxu0 %v527
  %1414 = vmatmul.mubr.bf16.gmra.mrb[0].mxu0 %v526
  %v1415 = vpop.f32.mrb[0].mxu0
  %v1416 = vadd.f32 %v1319, %v1415
  %v1417 = vpop.f32.mrb[0].mxu0
  %v1418 = vpop.f32.mrb[0].mxu0
  %v1419 = vadd.f32 %v1322, %v1418
  %v1420 = vpop.f32.mrb[0].mxu0
  %1421 = vmatprep.mubr.bf16.mxu0 %v536
  %1422 = vmatmul.mubr.bf16.gmra.mrb[0].mxu0 %v535
  %v1423 = vpop.f32.mrb[0].mxu0
  %v1424 = vadd.f32 %v1327, %v1423
  %v1425 = vpop.f32.mrb[0].mxu0
  %v1426 = vpop.f32.mrb[0].mxu0
  %v1427 = vadd.f32 %v1330, %v1426
  %v1428 = vpop.f32.mrb[0].mxu0
  %1429 = vdwg.mxu0
  %1430 = vmatprep.subr.bf16.mxu0 0
  %1431 = vmatpush1.bf16.msra.mxu0 %v962
  %1432 = vmatprep.subr.bf16.mxu0 0
  %1433 = vmatpush1.bf16.msra.mxu0 %v963
  %1434 = vmatprep.subr.bf16.mxu0 0
  %1435 = vmatpush1.bf16.msra.mxu0 %v964
  %1436 = vmatprep.subr.bf16.mxu0 0
  %1437 = vmatpush1.bf16.msra.mxu0 %v965
  %1438 = vmatprep.subr.bf16.mxu0 0
  %1439 = vmatpush1.bf16.msra.mxu0 %v966
  %1440 = vmatprep.subr.bf16.mxu0 0
  %1441 = vmatpush1.bf16.msra.mxu0 %v967
  %1442 = vmatprep.subr.bf16.mxu0 0
  %1443 = vmatpush1.bf16.msra.mxu0 %v968
  %1444 = vmatprep.subr.bf16.mxu0 0
  %1445 = vmatpush1.bf16.msra.mxu0 %v969
  %1446 = vmatprep.subr.bf16.mxu0 0
  %1447 = vmatpush1.bf16.msra.mxu0 0
  %1448 = vmatprep.subr.bf16.mxu0 0
  %1449 = vmatpush1.bf16.msra.mxu0 0
  %1450 = vmatprep.subr.bf16.mxu0 0
  %1451 = vmatpush1.bf16.msra.mxu0 0
  %1452 = vmatprep.subr.bf16.mxu0 0
  %1453 = vmatpush1.bf16.msra.mxu0 0
  %1454 = vmatprep.subr.bf16.mxu0 0
  %1455 = vmatpush1.bf16.msra.mxu0 0
  %1456 = vmatprep.subr.bf16.mxu0 0
  %1457 = vmatpush1.bf16.msra.mxu0 0
  %1458 = vmatprep.subr.bf16.mxu0 0
  %1459 = vmatpush1.bf16.msra.mxu0 0
  %1460 = vmatprep.subr.bf16.mxu0 0
  %1461 = vmatpush1.bf16.msra.mxu0 0
  %1462 = vmatprep.mubr.bf16.mxu0 0
  %1463 = vmatmul.mubr.bf16.gmra.mrb[0].mxu0 %v474
  %v1464 = vpop.f32.mrb[0].mxu0
  %v1465 = vadd.f32 %v1368, %v1464
  %v1466 = vpop.f32.mrb[0].mxu0
  %v1467 = vpop.f32.mrb[0].mxu0
  %v1468 = vadd.f32 %v1371, %v1467
  %v1469 = vpop.f32.mrb[0].mxu0
  %1470 = vmatprep.mubr.bf16.mxu0 0
  %1471 = vmatmul.mubr.bf16.gmra.mrb[0].mxu0 %v483
  %v1472 = vpop.f32.mrb[0].mxu0
  %v1473 = vadd.f32 %v1376, %v1472
  %v1474 = vpop.f32.mrb[0].mxu0
  %v1475 = vpop.f32.mrb[0].mxu0
  %v1476 = vadd.f32 %v1379, %v1475
  %v1477 = vpop.f32.mrb[0].mxu0
  %1478 = vmatprep.mubr.bf16.mxu0 0
  %1479 = vmatmul.mubr.bf16.gmra.mrb[0].mxu0 %v492
  %v1480 = vpop.f32.mrb[0].mxu0
  %v1481 = vadd.f32 %v1384, %v1480
  %v1482 = vpop.f32.mrb[0].mxu0
  %v1483 = vpop.f32.mrb[0].mxu0
  %v1484 = vadd.f32 %v1387, %v1483
  %v1485 = vpop.f32.mrb[0].mxu0
  %1486 = vmatprep.mubr.bf16.mxu0 0
  %1487 = vmatmul.mubr.bf16.gmra.mrb[0].mxu0 %v501
  %v1488 = vpop.f32.mrb[0].mxu0
  %v1489 = vadd.f32 %v1392, %v1488
  %v1490 = vpop.f32.mrb[0].mxu0
  %v1491 = vpop.f32.mrb[0].mxu0
  %v1492 = vadd.f32 %v1395, %v1491
  %v1493 = vpop.f32.mrb[0].mxu0
  %1494 = vmatprep.mubr.bf16.mxu0 0
  %1495 = vmatmul.mubr.bf16.gmra.mrb[0].mxu0 %v510
  %v1496 = vpop.f32.mrb[0].mxu0
  %v1497 = vadd.f32 %v1400, %v1496
  %v1498 = vpop.f32.mrb[0].mxu0
  %v1499 = vpop.f32.mrb[0].mxu0
  %v1500 = vadd.f32 %v1403, %v1499
  %v1501 = vpop.f32.mrb[0].mxu0
  %1502 = vmatprep.mubr.bf16.mxu0 0
  %1503 = vmatmul.mubr.bf16.gmra.mrb[0].mxu0 %v519
  %v1504 = vpop.f32.mrb[0].mxu0
  %v1505 = vadd.f32 %v1408, %v1504
  %v1506 = vpop.f32.mrb[0].mxu0
  %v1507 = vpop.f32.mrb[0].mxu0
  %v1508 = vadd.f32 %v1411, %v1507
  %v1509 = vpop.f32.mrb[0].mxu0
  %1510 = vmatprep.mubr.bf16.mxu0 0
  %1511 = vmatmul.mubr.bf16.gmra.mrb[0].mxu0 %v528
  %v1512 = vpop.f32.mrb[0].mxu0
  %v1513 = vadd.f32 %v1416, %v1512
  %v1514 = vpop.f32.mrb[0].mxu0
  %v1515 = vpop.f32.mrb[0].mxu0
  %v1516 = vadd.f32 %v1419, %v1515
  %v1517 = vpop.f32.mrb[0].mxu0
  %1518 = vmatprep.mubr.bf16.mxu0 0
  %1519 = vmatmul.mubr.bf16.gmra.mrb[0].mxu0 %v537
  %v1520 = vpop.f32.mrb[0].mxu0
  %v1521 = vadd.f32 %v1424, %v1520
  %v1522 = vpop.f32.mrb[0].mxu0
  %v1523 = vpop.f32.mrb[0].mxu0
  %v1524 = vadd.f32 %v1427, %v1523
  %v1525 = vpop.f32.mrb[0].mxu0
  %1526 = vdwg.mxu0
  %v1527 = vld [vmem:[%s2] sm:$0x1]
  %v1529 = vlaneseq
  %v1530 = vshrl.u32 %v1529, 7
  %v1531 = vsub.s32 0, %v1530
  %v1532 = vrot.slane %v1527, %v1531
  %v1534 = vmul.f32 %v1465, %v1532
  %v1535 = vmul.f32 %v1468, %v1532
  %v1536 = vmul.f32 %v1473, %v1532
  %v1537 = vmul.f32 %v1476, %v1532
  %v1538 = vmul.f32 %v1481, %v1532
  %v1539 = vmul.f32 %v1484, %v1532
  %v1540 = vmul.f32 %v1489, %v1532
  %v1541 = vmul.f32 %v1492, %v1532
  %v1542 = vmul.f32 %v1497, %v1532
  %v1543 = vmul.f32 %v1500, %v1532
  %v1544 = vmul.f32 %v1505, %v1532
  %v1545 = vmul.f32 %v1508, %v1532
  %v1546 = vmul.f32 %v1513, %v1532
  %v1547 = vmul.f32 %v1516, %v1532
  %v1548 = vmul.f32 %v1521, %v1532
  %v1549 = vmul.f32 %v1524, %v1532
  %v1550 = vld [vmem:[%s3] sm:$0x1]
  %v1552 = vlaneseq
  %v1553 = vshrl.u32 %v1552, 7
  %v1554 = vsub.s32 0, %v1553
  %v1555 = vrot.slane %v1550, %v1554
  %v1557 = vadd.f32 %v1534, %v1555
  %v1558 = vadd.f32 %v1535, %v1555
  %v1559 = vadd.f32 %v1536, %v1555
  %v1560 = vadd.f32 %v1537, %v1555
  %v1561 = vadd.f32 %v1538, %v1555
  %v1562 = vadd.f32 %v1539, %v1555
  %v1563 = vadd.f32 %v1540, %v1555
  %v1564 = vadd.f32 %v1541, %v1555
  %v1565 = vadd.f32 %v1542, %v1555
  %v1566 = vadd.f32 %v1543, %v1555
  %v1567 = vadd.f32 %v1544, %v1555
  %v1568 = vadd.f32 %v1545, %v1555
  %v1569 = vadd.f32 %v1546, %v1555
  %v1570 = vadd.f32 %v1547, %v1555
  %v1571 = vadd.f32 %v1548, %v1555
  %v1572 = vadd.f32 %v1549, %v1555
  %v1573 = vmax.f32 %v1557, 0.0
  %v1574 = vmax.f32 %v1558, 0.0
  %v1575 = vmax.f32 %v1559, 0.0
  %v1576 = vmax.f32 %v1560, 0.0
  %v1577 = vmax.f32 %v1561, 0.0
  %v1578 = vmax.f32 %v1562, 0.0
  %v1579 = vmax.f32 %v1563, 0.0
  %v1580 = vmax.f32 %v1564, 0.0
  %v1581 = vmax.f32 %v1565, 0.0
  %v1582 = vmax.f32 %v1566, 0.0
  %v1583 = vmax.f32 %v1567, 0.0
  %v1584 = vmax.f32 %v1568, 0.0
  %v1585 = vmax.f32 %v1569, 0.0
  %v1586 = vmax.f32 %v1570, 0.0
  %v1587 = vmax.f32 %v1571, 0.0
  %v1588 = vmax.f32 %v1572, 0.0
  %1589 = vst [vmem:[%s4] sm:$0xff] %v1573
  %1590 = vst [vmem:[%s4 + $0x8] sm:$0xff] %v1574
  %1591 = vst [vmem:[%s4 + $0x10] sm:$0xff] %v1575
  %1592 = vst [vmem:[%s4 + $0x18] sm:$0xff] %v1576
  %1593 = vst [vmem:[%s4 + $0x20] sm:$0xff] %v1577
  %1594 = vst [vmem:[%s4 + $0x28] sm:$0xff] %v1578
  %1595 = vst [vmem:[%s4 + $0x30] sm:$0xff] %v1579
  %1596 = vst [vmem:[%s4 + $0x38] sm:$0xff] %v1580
  %1597 = vst [vmem:[%s4 + $0x40] sm:$0xff] %v1581
  %1598 = vst [vmem:[%s4 + $0x48] sm:$0xff] %v1582
  %1599 = vst [vmem:[%s4 + $0x50] sm:$0xff] %v1583
  %1600 = vst [vmem:[%s4 + $0x58] sm:$0xff] %v1584
  %1601 = vst [vmem:[%s4 + $0x60] sm:$0xff] %v1585
  %1602 = vst [vmem:[%s4 + $0x68] sm:$0xff] %v1586
  %1603 = vst [vmem:[%s4 + $0x70] sm:$0xff] %v1587
  %1604 = vst [vmem:[%s4 + $0x78] sm:$0xff] %v1588
  // Predicated region
  $region18: #{_lambda_.12} parent=0 // pred_check
    _
  $region19: #{_lambda_.12} parent=0 // pred_check_branch
    %1606 = sbr.rel (0) target = $region21
  $region20: #{_lambda_.12} parent=0 // pred_region
    _
  $region21: #{_lambda_.12} parent=0 // pred_fallthru
    _
  // Predicated region
  $region22: #{_lambda_.12} parent=0 // pred_check
    _
  $region23: #{_lambda_.12} parent=0 // pred_check_branch
    %1608 = sbr.rel (0) target = $region25
  $region24: #{_lambda_.12} parent=0 // pred_region
    _
  $region25: #{_lambda_.12} parent=0 // pred_fallthru
    _

// kernel: _lambda_.17
$region0: #{_lambda_.17}
  #allocation0 [shape = 'u32[]', space=smem, size = 0x4, offset = 0x4, fixed_abs, tag = 'smem constant byte address 0x4 - core index']
  #allocation1 [shape = 'u32[144,128]{1,0:T(1,128)}', space=vmem, size = 0x12000, scoped, tag = 'internal scratch']
  %s0 = inlined_call_operand.vmem [shape: f32[2,16,128], index: 0, kind: input, shape index: {}]
  %s1 = inlined_call_operand.vmem [shape: bf16[128,128], index: 1, kind: input, shape index: {}]
  %s2 = inlined_call_operand.vmem [shape: f32[1,128], index: 2, kind: input, shape index: {}, may-alias: {2,4}]
  %s3 = inlined_call_operand.vmem [shape: bf16[128,128], index: 3, kind: input, shape index: {}]
  %s4 = inlined_call_operand.vmem [shape: f32[1,128], index: 4, kind: input, shape index: {}, may-alias: {2,4}]
  %s5 = inlined_call_operand.vmem [shape: f32[2,128], index: 5, kind: output, shape index: {}]
  %s6 = sld [smem:[#allocation0]]
  $region30: #{_lambda_.17} parent=0
    _
  %s8 = ssub.s32 1, %s6
  %s9 = scalar_select 0, %s8, %s6
  // Predicated region
  $region2: #{_lambda_.17} parent=0 // pred_check
    _
  $region3: #{_lambda_.17} parent=0 // pred_check_branch
    %11 = sbr.rel (0) target = $region5
  $region4: #{_lambda_.17} parent=0 // pred_region
    _
  $region5: #{_lambda_.17} parent=0 // pred_fallthru
    _
  // Predicated region
  $region6: #{_lambda_.17} parent=0 // pred_check
    _
  $region7: #{_lambda_.17} parent=0 // pred_check_branch
    %13 = sbr.rel (0) target = $region9
  $region8: #{_lambda_.17} parent=0 // pred_region
    _
  $region9: #{_lambda_.17} parent=0 // pred_fallthru
    _
  // Predicated region
  $region10: #{_lambda_.17} parent=0 // pred_check
    _
  $region11: #{_lambda_.17} parent=0 // pred_check_branch
    %15 = sbr.rel (0) target = $region13
  $region12: #{_lambda_.17} parent=0 // pred_region
    _
  $region13: #{_lambda_.17} parent=0 // pred_fallthru
    _
  // Predicated region
  $region14: #{_lambda_.17} parent=0 // pred_check
    _
  $region15: #{_lambda_.17} parent=0 // pred_check_branch
    %17 = sbr.rel (0) target = $region17
  $region16: #{_lambda_.17} parent=0 // pred_region
    _
  $region17: #{_lambda_.17} parent=0 // pred_fallthru
    _
  // Predicated region
  $region18: #{_lambda_.17} parent=0 // pred_check
    _
  $region19: #{_lambda_.17} parent=0 // pred_check_branch
    %19 = sbr.rel (0) target = $region21
  $region20: #{_lambda_.17} parent=0 // pred_region
    _
  $region21: #{_lambda_.17} parent=0 // pred_fallthru
    _
  %v21 = vld [vmem:[%s0] sm:$0xff]
  %v22 = vld [vmem:[%s0 + $0x8] sm:$0xff]
  %v23 = vld [vmem:[%s0 + $0x10] sm:$0xff]
  %v24 = vld [vmem:[%s0 + $0x18] sm:$0xff]
  %v25 = vadd.f32 %v21, %v22
  %v26 = vrot.slane %v25, 4
  %v27 = vadd.f32 %v25, %v26
  %v28 = vrot.slane %v27, 2
  %v29 = vadd.f32 %v27, %v28
  %v30 = vrot.slane %v29, 1
  %v31 = vadd.f32 %v29, %v30
  %v32 = vadd.f32 %v23, %v24
  %v33 = vrot.slane %v32, 4
  %v34 = vadd.f32 %v32, %v33
  %v35 = vrot.slane %v34, 2
  %v36 = vadd.f32 %v34, %v35
  %v37 = vrot.slane %v36, 1
  %v38 = vadd.f32 %v36, %v37
  %v39 = vrcp.pop 16.0
  %v40 = vmul.f32 %v31, %v39
  %v41 = vmul.f32 %v38, %v39
  %v42 = vpack.c.bf16 %v40, %v40
  %v43 = vpack.c.bf16 %v41, %v41
  %v44 = vld [vmem:[%s1] sm:$0xf]
  %v45 = vld [vmem:[%s1 + $0x4] sm:$0xf]
  %v46 = vld [vmem:[%s1 + $0x8] sm:$0xf]
  %v47 = vld [vmem:[%s1 + $0xc] sm:$0xf]
  %v48 = vld [vmem:[%s1 + $0x10] sm:$0xf]
  %v49 = vld [vmem:[%s1 + $0x14] sm:$0xf]
  %v50 = vld [vmem:[%s1 + $0x18] sm:$0xf]
  %v51 = vld [vmem:[%s1 + $0x1c] sm:$0xf]
  %v52 = vld [vmem:[%s1 + $0x20] sm:$0xf]
  %v53 = vld [vmem:[%s1 + $0x24] sm:$0xf]
  %v54 = vld [vmem:[%s1 + $0x28] sm:$0xf]
  %v55 = vld [vmem:[%s1 + $0x2c] sm:$0xf]
  %v56 = vld [vmem:[%s1 + $0x30] sm:$0xf]
  %v57 = vld [vmem:[%s1 + $0x34] sm:$0xf]
  %v58 = vld [vmem:[%s1 + $0x38] sm:$0xf]
  %v59 = vld [vmem:[%s1 + $0x3c] sm:$0xf]
  %v60 = vld [vmem:[%s2] sm:$0x1]
  %v62 = vlaneseq
  %v63 = vshrl.u32 %v62, 7
  %v64 = vsub.s32 0, %v63
  %v65 = vrot.slane %v60, %v64
  %v69 = vunpack.c.l.b16 %v42
  %v70 = vunpack.c.l.b16 %v43
  %vm71 = vcmask 1041409
  %v72 = vsel %vm71, %v70, %v69
  %v73 = vpack.c.b16 %v72, %v72
  %v91 = vunpack.c.l.b16 %v44
  %v92 = vunpack.c.l.b16 %v45
  %v93 = vunpack.c.l.b16 %v46
  %v94 = vunpack.c.l.b16 %v47
  %v95 = vunpack.c.l.b16 %v48
  %v96 = vunpack.c.l.b16 %v49
  %v97 = vunpack.c.l.b16 %v50
  %v98 = vunpack.c.l.b16 %v51
  %v99 = vunpack.c.l.b16 %v52
  %v100 = vunpack.c.l.b16 %v53
  %v101 = vunpack.c.l.b16 %v54
  %v102 = vunpack.c.l.b16 %v55
  %v103 = vunpack.c.l.b16 %v56
  %v104 = vunpack.c.l.b16 %v57
  %v105 = vunpack.c.l.b16 %v58
  %v106 = vunpack.c.l.b16 %v59
  %v107 = vpack.c.b16 %v92, %v91
  %v108 = vpack.c.b16 %v94, %v93
  %v109 = vpack.c.b16 %v96, %v95
  %v110 = vpack.c.b16 %v98, %v97
  %v111 = vpack.c.b16 %v100, %v99
  %v112 = vpack.c.b16 %v102, %v101
  %v113 = vpack.c.b16 %v104, %v103
  %v114 = vpack.c.b16 %v106, %v105
  %123 = vmatprep.subr.bf16.mxu0 0
  %124 = vmatpush1.bf16.msra.mxu0 %v107
  %125 = vmatprep.subr.bf16.mxu0 0
  %126 = vmatpush1.bf16.msra.mxu0 %v108
  %127 = vmatprep.subr.bf16.mxu0 0
  %128 = vmatpush1.bf16.msra.mxu0 %v109
  %129 = vmatprep.subr.bf16.mxu0 0
  %130 = vmatpush1.bf16.msra.mxu0 %v110
  %131 = vmatprep.subr.bf16.mxu0 0
  %132 = vmatpush1.bf16.msra.mxu0 %v111
  %133 = vmatprep.subr.bf16.mxu0 0
  %134 = vmatpush1.bf16.msra.mxu0 %v112
  %135 = vmatprep.subr.bf16.mxu0 0
  %136 = vmatpush1.bf16.msra.mxu0 %v113
  %137 = vmatprep.subr.bf16.mxu0 0
  %138 = vmatpush1.bf16.msra.mxu0 %v114
  %139 = vmatprep.subr.bf16.mxu0 0
  %140 = vmatpush1.bf16.msra.mxu0 0
  %141 = vmatprep.subr.bf16.mxu0 0
  %142 = vmatpush1.bf16.msra.mxu0 0
  %143 = vmatprep.subr.bf16.mxu0 0
  %144 = vmatpush1.bf16.msra.mxu0 0
  %145 = vmatprep.subr.bf16.mxu0 0
  %146 = vmatpush1.bf16.msra.mxu0 0
  %147 = vmatprep.subr.bf16.mxu0 0
  %148 = vmatpush1.bf16.msra.mxu0 0
  %149 = vmatprep.subr.bf16.mxu0 0
  %150 = vmatpush1.bf16.msra.mxu0 0
  %151 = vmatprep.subr.bf16.mxu0 0
  %152 = vmatpush1.bf16.msra.mxu0 0
  %153 = vmatprep.subr.bf16.mxu0 0
  %154 = vmatpush1.bf16.msra.mxu0 0
  %155 = vmatprep.mubr.bf16.mxu0 0
  %156 = vmatmul.mubr.bf16.gmra.mrb[0].mxu0 %v73
  %v157 = vpop.f32.mrb[0].mxu0
  %v158 = vadd.f32 %v65, %v157
  %v159 = vpop.f32.mrb[0].mxu0
  %v160 = vpop.f32.mrb[0].mxu0
  %v161 = vpop.f32.mrb[0].mxu0
  %162 = vdwg.mxu0
  %v163 = vmax.f32 %v158, 0.0
  %v164 = vpack.c.bf16 %v163, %v163
  %v165 = vld [vmem:[%s3] sm:$0xf]
  %v166 = vld [vmem:[%s3 + $0x4] sm:$0xf]
  %v167 = vld [vmem:[%s3 + $0x8] sm:$0xf]
  %v168 = vld [vmem:[%s3 + $0xc] sm:$0xf]
  %v169 = vld [vmem:[%s3 + $0x10] sm:$0xf]
  %v170 = vld [vmem:[%s3 + $0x14] sm:$0xf]
  %v171 = vld [vmem:[%s3 + $0x18] sm:$0xf]
  %v172 = vld [vmem:[%s3 + $0x1c] sm:$0xf]
  %v173 = vld [vmem:[%s3 + $0x20] sm:$0xf]
  %v174 = vld [vmem:[%s3 + $0x24] sm:$0xf]
  %v175 = vld [vmem:[%s3 + $0x28] sm:$0xf]
  %v176 = vld [vmem:[%s3 + $0x2c] sm:$0xf]
  %v177 = vld [vmem:[%s3 + $0x30] sm:$0xf]
  %v178 = vld [vmem:[%s3 + $0x34] sm:$0xf]
  %v179 = vld [vmem:[%s3 + $0x38] sm:$0xf]
  %v180 = vld [vmem:[%s3 + $0x3c] sm:$0xf]
  %v181 = vld [vmem:[%s4] sm:$0x1]
  %v183 = vlaneseq
  %v184 = vshrl.u32 %v183, 7
  %v185 = vsub.s32 0, %v184
  %v186 = vrot.slane %v181, %v185
  %v204 = vunpack.c.l.b16 %v165
  %v205 = vunpack.c.l.b16 %v166
  %v206 = vunpack.c.l.b16 %v167
  %v207 = vunpack.c.l.b16 %v168
  %v208 = vunpack.c.l.b16 %v169
  %v209 = vunpack.c.l.b16 %v170
  %v210 = vunpack.c.l.b16 %v171
  %v211 = vunpack.c.l.b16 %v172
  %v212 = vunpack.c.l.b16 %v173
  %v213 = vunpack.c.l.b16 %v174
  %v214 = vunpack.c.l.b16 %v175
  %v215 = vunpack.c.l.b16 %v176
  %v216 = vunpack.c.l.b16 %v177
  %v217 = vunpack.c.l.b16 %v178
  %v218 = vunpack.c.l.b16 %v179
  %v219 = vunpack.c.l.b16 %v180
  %v220 = vpack.c.b16 %v205, %v204
  %v221 = vpack.c.b16 %v207, %v206
  %v222 = vpack.c.b16 %v209, %v208
  %v223 = vpack.c.b16 %v211, %v210
  %v224 = vpack.c.b16 %v213, %v212
  %v225 = vpack.c.b16 %v215, %v214
  %v226 = vpack.c.b16 %v217, %v216
  %v227 = vpack.c.b16 %v219, %v218
  %236 = vmatprep.subr.bf16.mxu0 0
  %237 = vmatpush1.bf16.msra.mxu0 %v220
  %238 = vmatprep.subr.bf16.mxu0 0
  %239 = vmatpush1.bf16.msra.mxu0 %v221
  %240 = vmatprep.subr.bf16.mxu0 0
  %241 = vmatpush1.bf16.msra.mxu0 %v222
  %242 = vmatprep.subr.bf16.mxu0 0
  %243 = vmatpush1.bf16.msra.mxu0 %v223
  %244 = vmatprep.subr.bf16.mxu0 0
  %245 = vmatpush1.bf16.msra.mxu0 %v224
  %246 = vmatprep.subr.bf16.mxu0 0
  %247 = vmatpush1.bf16.msra.mxu0 %v225
  %248 = vmatprep.subr.bf16.mxu0 0
  %249 = vmatpush1.bf16.msra.mxu0 %v226
  %250 = vmatprep.subr.bf16.mxu0 0
  %251 = vmatpush1.bf16.msra.mxu0 %v227
  %252 = vmatprep.subr.bf16.mxu0 0
  %253 = vmatpush1.bf16.msra.mxu0 0
  %254 = vmatprep.subr.bf16.mxu0 0
  %255 = vmatpush1.bf16.msra.mxu0 0
  %256 = vmatprep.subr.bf16.mxu0 0
  %257 = vmatpush1.bf16.msra.mxu0 0
  %258 = vmatprep.subr.bf16.mxu0 0
  %259 = vmatpush1.bf16.msra.mxu0 0
  %260 = vmatprep.subr.bf16.mxu0 0
  %261 = vmatpush1.bf16.msra.mxu0 0
  %262 = vmatprep.subr.bf16.mxu0 0
  %263 = vmatpush1.bf16.msra.mxu0 0
  %264 = vmatprep.subr.bf16.mxu0 0
  %265 = vmatpush1.bf16.msra.mxu0 0
  %266 = vmatprep.subr.bf16.mxu0 0
  %267 = vmatpush1.bf16.msra.mxu0 0
  %268 = vmatprep.mubr.bf16.mxu0 0
  %269 = vmatmul.mubr.bf16.gmra.mrb[0].mxu0 %v164
  %v270 = vpop.f32.mrb[0].mxu0
  %v271 = vadd.f32 %v186, %v270
  %v272 = vpop.f32.mrb[0].mxu0
  %v273 = vpop.f32.mrb[0].mxu0
  %v274 = vpop.f32.mrb[0].mxu0
  %275 = vdwg.mxu0
  %v276 = vxor.u32 %v271, 2147483648
  %v277 = vmul.f32 %v276, 1.442695
  %v278 = vpow.pop %v277
  %v279 = vadd.f32 %v278, 1.0
  %v280 = vrcp.pop %v279
  %v281 = vmul.f32 1.0, %v280
  %282 = vst [vmem:[%s5] sm:$0x3] %v281
  // Predicated region
  $region22: #{_lambda_.17} parent=0 // pred_check
    _
  $region23: #{_lambda_.17} parent=0 // pred_check_branch
    %284 = sbr.rel (0) target = $region25
  $region24: #{_lambda_.17} parent=0 // pred_region
    _
  $region25: #{_lambda_.17} parent=0 // pred_fallthru
    _
  // Predicated region
  $region26: #{_lambda_.17} parent=0 // pred_check
    _
  $region27: #{_lambda_.17} parent=0 // pred_check_branch
    %286 = sbr.rel (0) target = $region29
  $region28: #{_lambda_.17} parent=0 // pred_region
    _
  $region29: #{_lambda_.17} parent=0 // pred_fallthru
    _

// kernel: _lambda_.18
$region0: #{_lambda_.18}
  #allocation0 [shape = 'u32[]', space=smem, size = 0x4, offset = 0x4, fixed_abs, tag = 'smem constant byte address 0x4 - core index']
  #allocation1 [shape = 'u32[144,128]{1,0:T(1,128)}', space=vmem, size = 0x12000, scoped, tag = 'internal scratch']
  %s0 = inlined_call_operand.vmem [shape: f32[2,16,128], index: 0, kind: input, shape index: {}]
  %s1 = inlined_call_operand.vmem [shape: f32[2,1,128], index: 1, kind: input, shape index: {}]
  %s2 = inlined_call_operand.vmem [shape: bf16[128,128], index: 2, kind: input, shape index: {}]
  %s3 = inlined_call_operand.vmem [shape: f32[1,128], index: 3, kind: input, shape index: {}, may-alias: {3,7}]
  %s4 = inlined_call_operand.vmem [shape: f32[1,128], index: 4, kind: input, shape index: {}, may-alias: {4,8}]
  %s5 = inlined_call_operand.vmem [shape: f32[2,16,128], index: 5, kind: input, shape index: {}]
  %s6 = inlined_call_operand.vmem [shape: bf16[128,128], index: 6, kind: input, shape index: {}]
  %s7 = inlined_call_operand.vmem [shape: f32[1,128], index: 7, kind: input, shape index: {}, may-alias: {3,7}]
  %s8 = inlined_call_operand.vmem [shape: f32[1,128], index: 8, kind: input, shape index: {}, may-alias: {4,8}]
  %s9 = inlined_call_operand.vmem [shape: f32[2,16,128], index: 9, kind: output, shape index: {}]
  %s10 = sld [smem:[#allocation0]]
  $region69: #{_lambda_.18} parent=0
    _
  %s12 = ssub.s32 1, %s10
  %s13 = scalar_select 0, %s12, %s10
  loop: start=0, step=1, limit=4
  $region2: #{_lambda_.18} parent=0 // loop_pre_header
    _
  $region3: #{_lambda_.18} parent=0 // loop_header
    %s15 = sphi 0, %s19
    %p16 = scmp.ge.s32.totalorder %s15, 4
    %s25 = sphi 0, %s27
    %s28 = sphi 0, %s25
    %s29 = sphi 0, %s28
    %s45 = sphi 0, %s29
    %s51 = sphi 0, %s53
    %s54 = sphi 0, %s51
    %s55 = sphi 0, %s54
    %s71 = sphi 0, %s55
    %s75 = sphi 0, %s75
    %s77 = sphi 0, %s75
    %s78 = sphi 0, %s77
    %s92 = sphi 0, %s78
    %s96 = sphi 0, %s96
    %s98 = sphi 0, %s96
    %s99 = sphi 0, %s98
    %s113 = sphi 0, %s99
    %s117 = sphi 0, %s117
    %s119 = sphi 0, %s117
    %s120 = sphi 0, %s119
    %s134 = sphi 0, %s120
    %s140 = sphi 0, %s142
    %s143 = sphi 0, %s140
    %s144 = sphi 0, %s143
    %s160 = sphi 0, %s144
    %s164 = sphi 0, %s164
    %s166 = sphi 0, %s164
    %s167 = sphi 0, %s166
    %s181 = sphi 0, %s167
    %s185 = sphi 0, %s185
    %s187 = sphi 0, %s185
    %s188 = sphi 0, %s187
    %s202 = sphi 0, %s188
    %s206 = sphi 0, %s206
    %s208 = sphi 0, %s206
    %s209 = sphi 0, %s208
    %s223 = sphi 0, %s209
    %s229 = sphi 0, %s231
    %s232 = sphi 0, %s229
    %s233 = sphi 0, %s232
    %s249 = sphi 0, %s233
  $region4: #{_lambda_.18} parent=0 // loop_header_branch
    %18 = sbr.rel (%p16) target = $region8
  $region5: #{_lambda_.18} parent=0 // loop_body
    %s20 = ssub.s32 %s15, 1
    %s21 = ssub.s32 %s15, 2
    %s22 = sadd.s32 %s15, 1
    %s23 = ssub.s32 %s15, %s22
    %p24 = scmp.eq.s32.totalorder %s23, 0
    %s26 = sadd.s32 %s25, 1
    %s27 = scalar_select %p24, %s25, %s26
    %p30 = pneg %p24
    %p31 = scmp.eq.s32.totalorder %s15, 1
    %p32 = por %p30, %p31
    %p33 = scmp.ne.s32.totalorder %s25, %s28
    %p34 = scmp.eq.s32.totalorder %s15, 0
    %p35 = por %p33, %p34
    %p36 = scmp.ne.s32.totalorder %s25, %s28
    %p37 = scmp.eq.s32.totalorder %s20, 1
    %p38 = por %p36, %p37
    %p39 = scmp.ne.s32.totalorder %s28, %s29
    %p40 = scmp.eq.s32.totalorder %s20, 0
    %p41 = por %p39, %p40
    %p42 = scmp.ne.s32.totalorder %s28, %s29
    %p43 = scmp.eq.s32.totalorder %s21, 1
    %p44 = por %p42, %p43
    %p46 = scmp.ne.s32.totalorder %s29, %s45
    %p47 = scmp.eq.s32.totalorder %s21, 0
    %p48 = por %p46, %p47
    %s49 = ssub.s32 %s15, %s22
    %p50 = scmp.eq.s32.totalorder %s49, 0
    %s52 = sadd.s32 %s51, 1
    %s53 = scalar_select %p50, %s51, %s52
    %p56 = pneg %p50
    %p57 = scmp.eq.s32.totalorder %s15, 1
    %p58 = por %p56, %p57
    %p59 = scmp.ne.s32.totalorder %s51, %s54
    %p60 = scmp.eq.s32.totalorder %s15, 0
    %p61 = por %p59, %p60
    %p62 = scmp.ne.s32.totalorder %s51, %s54
    %p63 = scmp.eq.s32.totalorder %s20, 1
    %p64 = por %p62, %p63
    %p65 = scmp.ne.s32.totalorder %s54, %s55
    %p66 = scmp.eq.s32.totalorder %s20, 0
    %p67 = por %p65, %p66
    %p68 = scmp.ne.s32.totalorder %s54, %s55
    %p69 = scmp.eq.s32.totalorder %s21, 1
    %p70 = por %p68, %p69
    %p72 = scmp.ne.s32.totalorder %s55, %s71
    %p73 = scmp.eq.s32.totalorder %s21, 0
    %p74 = por %p72, %p73
    %s76 = sadd.s32 %s75, 1
    %p79 = scmp.eq.s32.totalorder %s15, 1
    %p80 = scmp.ne.s32.totalorder %s75, %s77
    %p81 = scmp.eq.s32.totalorder %s15, 0
    %p82 = por %p80, %p81
    %p83 = scmp.ne.s32.totalorder %s75, %s77
    %p84 = scmp.eq.s32.totalorder %s20, 1
    %p85 = por %p83, %p84
    %p86 = scmp.ne.s32.totalorder %s77, %s78
    %p87 = scmp.eq.s32.totalorder %s20, 0
    %p88 = por %p86, %p87
    %p89 = scmp.ne.s32.totalorder %s77, %s78
    %p90 = scmp.eq.s32.totalorder %s21, 1
    %p91 = por %p89, %p90
    %p93 = scmp.ne.s32.totalorder %s78, %s92
    %p94 = scmp.eq.s32.totalorder %s21, 0
    %p95 = por %p93, %p94
    %s97 = sadd.s32 %s96, 1
    %p100 = scmp.eq.s32.totalorder %s15, 1
    %p101 = scmp.ne.s32.totalorder %s96, %s98
    %p102 = scmp.eq.s32.totalorder %s15, 0
    %p103 = por %p101, %p102
    %p104 = scmp.ne.s32.totalorder %s96, %s98
    %p105 = scmp.eq.s32.totalorder %s20, 1
    %p106 = por %p104, %p105
    %p107 = scmp.ne.s32.totalorder %s98, %s99
    %p108 = scmp.eq.s32.totalorder %s20, 0
    %p109 = por %p107, %p108
    %p110 = scmp.ne.s32.totalorder %s98, %s99
    %p111 = scmp.eq.s32.totalorder %s21, 1
    %p112 = por %p110, %p111
    %p114 = scmp.ne.s32.totalorder %s99, %s113
    %p115 = scmp.eq.s32.totalorder %s21, 0
    %p116 = por %p114, %p115
    %s118 = sadd.s32 %s117, 1
    %p121 = scmp.eq.s32.totalorder %s15, 1
    %p122 = scmp.ne.s32.totalorder %s117, %s119
    %p123 = scmp.eq.s32.totalorder %s15, 0
    %p124 = por %p122, %p123
    %p125 = scmp.ne.s32.totalorder %s117, %s119
    %p126 = scmp.eq.s32.totalorder %s20, 1
    %p127 = por %p125, %p126
    %p128 = scmp.ne.s32.totalorder %s119, %s120
    %p129 = scmp.eq.s32.totalorder %s20, 0
    %p130 = por %p128, %p129
    %p131 = scmp.ne.s32.totalorder %s119, %s120
    %p132 = scmp.eq.s32.totalorder %s21, 1
    %p133 = por %p131, %p132
    %p135 = scmp.ne.s32.totalorder %s120, %s134
    %p136 = scmp.eq.s32.totalorder %s21, 0
    %p137 = por %p135, %p136
    %s138 = ssub.s32 %s15, %s22
    %p139 = scmp.eq.s32.totalorder %s138, 0
    %s141 = sadd.s32 %s140, 1
    %s142 = scalar_select %p139, %s140, %s141
    %p145 = pneg %p139
    %p146 = scmp.eq.s32.totalorder %s15, 1
    %p147 = por %p145, %p146
    %p148 = scmp.ne.s32.totalorder %s140, %s143
    %p149 = scmp.eq.s32.totalorder %s15, 0
    %p150 = por %p148, %p149
    %p151 = scmp.ne.s32.totalorder %s140, %s143
    %p152 = scmp.eq.s32.totalorder %s20, 1
    %p153 = por %p151, %p152
    %p154 = scmp.ne.s32.totalorder %s143, %s144
    %p155 = scmp.eq.s32.totalorder %s20, 0
    %p156 = por %p154, %p155
    %p157 = scmp.ne.s32.totalorder %s143, %s144
    %p158 = scmp.eq.s32.totalorder %s21, 1
    %p159 = por %p157, %p158
    %p161 = scmp.ne.s32.totalorder %s144, %s160
    %p162 = scmp.eq.s32.totalorder %s21, 0
    %p163 = por %p161, %p162
    %s165 = sadd.s32 %s164, 1
    %p168 = scmp.eq.s32.totalorder %s15, 1
    %p169 = scmp.ne.s32.totalorder %s164, %s166
    %p170 = scmp.eq.s32.totalorder %s15, 0
    %p171 = por %p169, %p170
    %p172 = scmp.ne.s32.totalorder %s164, %s166
    %p173 = scmp.eq.s32.totalorder %s20, 1
    %p174 = por %p172, %p173
    %p175 = scmp.ne.s32.totalorder %s166, %s167
    %p176 = scmp.eq.s32.totalorder %s20, 0
    %p177 = por %p175, %p176
    %p178 = scmp.ne.s32.totalorder %s166, %s167
    %p179 = scmp.eq.s32.totalorder %s21, 1
    %p180 = por %p178, %p179
    %p182 = scmp.ne.s32.totalorder %s167, %s181
    %p183 = scmp.eq.s32.totalorder %s21, 0
    %p184 = por %p182, %p183
    %s186 = sadd.s32 %s185, 1
    %p189 = scmp.eq.s32.totalorder %s15, 1
    %p190 = scmp.ne.s32.totalorder %s185, %s187
    %p191 = scmp.eq.s32.totalorder %s15, 0
    %p192 = por %p190, %p191
    %p193 = scmp.ne.s32.totalorder %s185, %s187
    %p194 = scmp.eq.s32.totalorder %s20, 1
    %p195 = por %p193, %p194
    %p196 = scmp.ne.s32.totalorder %s187, %s188
    %p197 = scmp.eq.s32.totalorder %s20, 0
    %p198 = por %p196, %p197
    %p199 = scmp.ne.s32.totalorder %s187, %s188
    %p200 = scmp.eq.s32.totalorder %s21, 1
    %p201 = por %p199, %p200
    %p203 = scmp.ne.s32.totalorder %s188, %s202
    %p204 = scmp.eq.s32.totalorder %s21, 0
    %p205 = por %p203, %p204
    %s207 = sadd.s32 %s206, 1
    %p210 = scmp.eq.s32.totalorder %s15, 1
    %p211 = scmp.ne.s32.totalorder %s206, %s208
    %p212 = scmp.eq.s32.totalorder %s15, 0
    %p213 = por %p211, %p212
    %p214 = scmp.ne.s32.totalorder %s206, %s208
    %p215 = scmp.eq.s32.totalorder %s20, 1
    %p216 = por %p214, %p215
    %p217 = scmp.ne.s32.totalorder %s208, %s209
    %p218 = scmp.eq.s32.totalorder %s20, 0
    %p219 = por %p217, %p218
    %p220 = scmp.ne.s32.totalorder %s208, %s209
    %p221 = scmp.eq.s32.totalorder %s21, 1
    %p222 = por %p220, %p221
    %p224 = scmp.ne.s32.totalorder %s209, %s223
    %p225 = scmp.eq.s32.totalorder %s21, 0
    %p226 = por %p224, %p225
    %s227 = ssub.s32 %s15, %s22
    %p228 = scmp.eq.s32.totalorder %s227, 0
    %s230 = sadd.s32 %s229, 1
    %s231 = scalar_select %p228, %s229, %s230
    %p234 = pneg %p228
    %p235 = scmp.eq.s32.totalorder %s15, 1
    %p236 = por %p234, %p235
    %p237 = scmp.ne.s32.totalorder %s229, %s232
    %p238 = scmp.eq.s32.totalorder %s15, 0
    %p239 = por %p237, %p238
    %p240 = scmp.ne.s32.totalorder %s229, %s232
    %p241 = scmp.eq.s32.totalorder %s20, 1
    %p242 = por %p240, %p241
    %p243 = scmp.ne.s32.totalorder %s232, %s233
    %p244 = scmp.eq.s32.totalorder %s20, 0
    %p245 = por %p243, %p244
    %p246 = scmp.ne.s32.totalorder %s232, %s233
    %p247 = scmp.eq.s32.totalorder %s21, 1
    %p248 = por %p246, %p247
    %p250 = scmp.ne.s32.totalorder %s233, %s249
    %p251 = scmp.eq.s32.totalorder %s21, 0
    %p252 = por %p250, %p251
    %p253 = scmp.le.s32.totalorder 1, %s15
    %p254 = scmp.lt.s32.totalorder %s15, 3
    %p255 = pnand %p253, %p254
    %p256 = pneg %p255
    // Predicated region
    $region9: #{_lambda_.18} parent=5 // pred_check
      _
    $region10: #{_lambda_.18} parent=5 // pred_check_branch
      %258 = sbr.rel (%p255) target = $region12
    $region11: #{_lambda_.18} parent=5 // pred_region
      %s259 = ssub.s32 %s15, 1
      // Predicated region
      $region13: #{_lambda_.18} parent=11 // pred_check
        %p260 = pneg %p88
      $region14: #{_lambda_.18} parent=11 // pred_check_branch
        %262 = sbr.rel (%p260) target = $region16
      $region15: #{_lambda_.18} parent=11 // pred_region
        _
      $region16: #{_lambda_.18} parent=11 // pred_fallthru
        _
      // Predicated region
      $region17: #{_lambda_.18} parent=11 // pred_check
        %p263 = pneg %p109
      $region18: #{_lambda_.18} parent=11 // pred_check_branch
        %265 = sbr.rel (%p263) target = $region20
      $region19: #{_lambda_.18} parent=11 // pred_region
        _
      $region20: #{_lambda_.18} parent=11 // pred_fallthru
        _
      // Predicated region
      $region21: #{_lambda_.18} parent=11 // pred_check
        %p266 = pneg %p130
      $region22: #{_lambda_.18} parent=11 // pred_check_branch
        %268 = sbr.rel (%p266) target = $region24
      $region23: #{_lambda_.18} parent=11 // pred_region
        _
      $region24: #{_lambda_.18} parent=11 // pred_fallthru
        _
      // Predicated region
      $region25: #{_lambda_.18} parent=11 // pred_check
        %p269 = pneg %p177
      $region26: #{_lambda_.18} parent=11 // pred_check_branch
        %271 = sbr.rel (%p269) target = $region28
      $region27: #{_lambda_.18} parent=11 // pred_region
        _
      $region28: #{_lambda_.18} parent=11 // pred_fallthru
        _
      // Predicated region
      $region29: #{_lambda_.18} parent=11 // pred_check
        %p272 = pneg %p198
      $region30: #{_lambda_.18} parent=11 // pred_check_branch
        %274 = sbr.rel (%p272) target = $region32
      $region31: #{_lambda_.18} parent=11 // pred_region
        _
      $region32: #{_lambda_.18} parent=11 // pred_fallthru
        _
      // Predicated region
      $region33: #{_lambda_.18} parent=11 // pred_check
        %p275 = pneg %p219
      $region34: #{_lambda_.18} parent=11 // pred_check_branch
        %277 = sbr.rel (%p275) target = $region36
      $region35: #{_lambda_.18} parent=11 // pred_region
        _
      $region36: #{_lambda_.18} parent=11 // pred_fallthru
        _
    $region12: #{_lambda_.18} parent=5 // pred_fallthru
      _
    %p278 = scmp.lt.s32.totalorder %s15, 2
    // Predicated region
    $region37: #{_lambda_.18} parent=5 // pred_check
      %p279 = pneg %p278
    $region38: #{_lambda_.18} parent=5 // pred_check_branch
      %281 = sbr.rel (%p279) target = $region40
    $region39: #{_lambda_.18} parent=5 // pred_region
      // Predicated region
      $region41: #{_lambda_.18} parent=39 // pred_check
        %p282 = pneg %p35
      $region42: #{_lambda_.18} parent=39 // pred_check_branch
        %284 = sbr.rel (%p282) target = $region44
      $region43: #{_lambda_.18} parent=39 // pred_region
        %p285 = scmp.lt.s32.totalorder %s15, 1
        %s286 = scalar_select %p285, %s15, 1
        %s287 = smul.addr %s286, 2
        %s288 = smul.addr %s287, 8
        %s289 = scalar_lea.vmem %s0, %s288
      $region44: #{_lambda_.18} parent=39 // pred_fallthru
        _
      // Predicated region
      $region45: #{_lambda_.18} parent=39 // pred_check
        %p290 = pneg %p61
      $region46: #{_lambda_.18} parent=39 // pred_check_branch
        %292 = sbr.rel (%p290) target = $region48
      $region47: #{_lambda_.18} parent=39 // pred_region
        %p293 = scmp.lt.s32.totalorder %s15, 1
        %s294 = scalar_select %p293, %s15, 1
        %s295 = scalar_lea.vmem %s1, %s294
      $region48: #{_lambda_.18} parent=39 // pred_fallthru
        _
      // Predicated region
      $region49: #{_lambda_.18} parent=39 // pred_check
        %p296 = pneg %p150
      $region50: #{_lambda_.18} parent=39 // pred_check_branch
        %298 = sbr.rel (%p296) target = $region52
      $region51: #{_lambda_.18} parent=39 // pred_region
        %p299 = scmp.lt.s32.totalorder %s15, 1
        %s300 = scalar_select %p299, %s15, 1
        %s301 = smul.addr %s300, 2
        %s302 = smul.addr %s301, 8
        %s303 = scalar_lea.vmem %s5, %s302
      $region52: #{_lambda_.18} parent=39 // pred_fallthru
        _
    $region40: #{_lambda_.18} parent=5 // pred_fallthru
      _
    %p304 = scmp.le.s32.totalorder 1, %s15
    %p305 = scmp.lt.s32.totalorder %s15, 3
    %p306 = pnand %p304, %p305
    %p307 = pneg %p306
    // Predicated region
    $region53: #{_lambda_.18} parent=5 // pred_check
      _
    $region54: #{_lambda_.18} parent=5 // pred_check_branch
      %309 = sbr.rel (%p306) target = $region56
    $region55: #{_lambda_.18} parent=5 // pred_region
      %s310 = ssub.s32 %s15, 1
      %p311 = scmp.lt.s32.totalorder %s20, 1
      %s312 = scalar_select %p311, %s20, 1
      %s313 = smul.addr %s312, 2
      %s314 = smul.addr %s313, 8
      %s315 = scalar_lea.vmem %s0, %s314
      %p316 = pneg %p41
      %p317 = pneg %p38
      %p318 = scmp.lt.s32.totalorder %s20, 1
      %s319 = scalar_select %p318, %s20, 1
      %s320 = scalar_lea.vmem %s1, %s319
      %p321 = pneg %p67
      %p322 = pneg %p64
      %p323 = pneg %p88
      %p324 = pneg %p85
      %p325 = pneg %p109
      %p326 = pneg %p106
      %p327 = pneg %p130
      %p328 = pneg %p127
      %p329 = scmp.lt.s32.totalorder %s20, 1
      %s330 = scalar_select %p329, %s20, 1
      %s331 = smul.addr %s330, 2
      %s332 = smul.addr %s331, 8
      %s333 = scalar_lea.vmem %s5, %s332
      %p334 = pneg %p156
      %p335 = pneg %p153
      %p336 = pneg %p177
      %p337 = pneg %p174
      %p338 = pneg %p198
      %p339 = pneg %p195
      %p340 = pneg %p219
      %p341 = pneg %p216
      %p342 = pneg %p245
      %p343 = pneg %p242
      %p344 = scmp.lt.s32.totalorder %s20, 1
      %s345 = scalar_select %p344, %s20, 1
      %s346 = smul.addr %s345, 2
      %s347 = smul.addr %s346, 8
      %s348 = scalar_lea.vmem %s9, %s347
      %p349 = scmp.lt.s32.totalorder %s20, 1
      %s350 = scalar_select %p349, %s20, 1
      %s351 = smul.addr %s350, 2
      %s352 = smul.addr %s351, 8
      %s353 = scalar_lea.vmem %s0, %s352
      %p354 = scmp.lt.s32.totalorder %s20, 1
      %s355 = scalar_select %p354, %s20, 1
      %s356 = scalar_lea.vmem %s1, %s355
      %p357 = scmp.lt.s32.totalorder %s20, 1
      %s358 = scalar_select %p357, %s20, 1
      %s359 = smul.addr %s358, 2
      %s360 = smul.addr %s359, 8
      %s361 = scalar_lea.vmem %s5, %s360
      %p362 = scmp.lt.s32.totalorder %s20, 1
      %s363 = scalar_select %p362, %s20, 1
      %s364 = smul.addr %s363, 2
      %s365 = smul.addr %s364, 8
      %s366 = scalar_lea.vmem %s9, %s365
      %v368 = vld [vmem:[%s353] sm:$0xff]
      %v369 = vld [vmem:[%s353 + $0x8] sm:$0xff]
      %v370 = vld [vmem:[%s356] sm:$0x1]
      %v372 = vlaneseq
      %v373 = vshrl.u32 %v372, 7
      %v374 = vsub.s32 0, %v373
      %v375 = vrot.slane %v370, %v374
      %v377 = vmul.f32 %v368, %v375
      %v378 = vmul.f32 %v369, %v375
      %v379 = vpack.c.bf16 %v378, %v377
      %v380 = vld [vmem:[%s2] sm:$0xf]
      %v381 = vld [vmem:[%s2 + $0x4] sm:$0xf]
      %v382 = vld [vmem:[%s2 + $0x8] sm:$0xf]
      %v383 = vld [vmem:[%s2 + $0xc] sm:$0xf]
      %v384 = vld [vmem:[%s2 + $0x10] sm:$0xf]
      %v385 = vld [vmem:[%s2 + $0x14] sm:$0xf]
      %v386 = vld [vmem:[%s2 + $0x18] sm:$0xf]
      %v387 = vld [vmem:[%s2 + $0x1c] sm:$0xf]
      %v388 = vld [vmem:[%s2 + $0x20] sm:$0xf]
      %v389 = vld [vmem:[%s2 + $0x24] sm:$0xf]
      %v390 = vld [vmem:[%s2 + $0x28] sm:$0xf]
      %v391 = vld [vmem:[%s2 + $0x2c] sm:$0xf]
      %v392 = vld [vmem:[%s2 + $0x30] sm:$0xf]
      %v393 = vld [vmem:[%s2 + $0x34] sm:$0xf]
      %v394 = vld [vmem:[%s2 + $0x38] sm:$0xf]
      %v395 = vld [vmem:[%s2 + $0x3c] sm:$0xf]
      %v412 = vunpack.c.l.b16 %v380
      %v413 = vunpack.c.l.b16 %v381
      %v414 = vunpack.c.l.b16 %v382
      %v415 = vunpack.c.l.b16 %v383
      %v416 = vunpack.c.l.b16 %v384
      %v417 = vunpack.c.l.b16 %v385
      %v418 = vunpack.c.l.b16 %v386
      %v419 = vunpack.c.l.b16 %v387
      %v420 = vunpack.c.l.b16 %v388
      %v421 = vunpack.c.l.b16 %v389
      %v422 = vunpack.c.l.b16 %v390
      %v423 = vunpack.c.l.b16 %v391
      %v424 = vunpack.c.l.b16 %v392
      %v425 = vunpack.c.l.b16 %v393
      %v426 = vunpack.c.l.b16 %v394
      %v427 = vunpack.c.l.b16 %v395
      %v428 = vpack.c.b16 %v413, %v412
      %v429 = vpack.c.b16 %v415, %v414
      %v430 = vpack.c.b16 %v417, %v416
      %v431 = vpack.c.b16 %v419, %v418
      %v432 = vpack.c.b16 %v421, %v420
      %v433 = vpack.c.b16 %v423, %v422
      %v434 = vpack.c.b16 %v425, %v424
      %v435 = vpack.c.b16 %v427, %v426
      %444 = vmatprep.subr.bf16.mxu0 0
      %445 = vmatpush1.bf16.msra.mxu0 %v428
      %446 = vmatprep.subr.bf16.mxu0 0
      %447 = vmatpush1.bf16.msra.mxu0 %v429
      %448 = vmatprep.subr.bf16.mxu0 0
      %449 = vmatpush1.bf16.msra.mxu0 %v430
      %450 = vmatprep.subr.bf16.mxu0 0
      %451 = vmatpush1.bf16.msra.mxu0 %v431
      %452 = vmatprep.subr.bf16.mxu0 0
      %453 = vmatpush1.bf16.msra.mxu0 %v432
      %454 = vmatprep.subr.bf16.mxu0 0
      %455 = vmatpush1.bf16.msra.mxu0 %v433
      %456 = vmatprep.subr.bf16.mxu0 0
      %457 = vmatpush1.bf16.msra.mxu0 %v434
      %458 = vmatprep.subr.bf16.mxu0 0
      %459 = vmatpush1.bf16.msra.mxu0 %v435
      %460 = vmatprep.subr.bf16.mxu0 0
      %461 = vmatpush1.bf16.msra.mxu0 0
      %462 = vmatprep.subr.bf16.mxu0 0
      %463 = vmatpush1.bf16.msra.mxu0 0
      %464 = vmatprep.subr.bf16.mxu0 0
      %465 = vmatpush1.bf16.msra.mxu0 0
      %466 = vmatprep.subr.bf16.mxu0 0
      %467 = vmatpush1.bf16.msra.mxu0 0
      %468 = vmatprep.subr.bf16.mxu0 0
      %469 = vmatpush1.bf16.msra.mxu0 0
      %470 = vmatprep.subr.bf16.mxu0 0
      %471 = vmatpush1.bf16.msra.mxu0 0
      %472 = vmatprep.subr.bf16.mxu0 0
      %473 = vmatpush1.bf16.msra.mxu0 0
      %474 = vmatprep.subr.bf16.mxu0 0
      %475 = vmatpush1.bf16.msra.mxu0 0
      %476 = vmatprep.mubr.bf16.mxu0 0
      %477 = vmatmul.mubr.bf16.gmra.mrb[0].mxu0 %v379
      %v478 = vpop.f32.mrb[0].mxu0
      %v479 = vadd.f32 0.0, %v478
      %v480 = vpop.f32.mrb[0].mxu0
      %v481 = vpop.f32.mrb[0].mxu0
      %v482 = vadd.f32 0.0, %v481
      %v483 = vpop.f32.mrb[0].mxu0
      %484 = vdwg.mxu0
      %v485 = vld [vmem:[%s3] sm:$0x1]
      %v487 = vlaneseq
      %v488 = vshrl.u32 %v487, 7
      %v489 = vsub.s32 0, %v488
      %v490 = vrot.slane %v485, %v489
      %v492 = vmul.f32 %v479, %v490
      %v493 = vmul.f32 %v482, %v490
      %v494 = vld [vmem:[%s4] sm:$0x1]
      %v496 = vlaneseq
      %v497 = vshrl.u32 %v496, 7
      %v498 = vsub.s32 0, %v497
      %v499 = vrot.slane %v494, %v498
      %v501 = vadd.f32 %v492, %v499
      %v502 = vadd.f32 %v493, %v499
      %v503 = vld [vmem:[%s361] sm:$0xff]
      %v504 = vld [vmem:[%s361 + $0x8] sm:$0xff]
      %v505 = vpack.c.bf16 %v504, %v503
      %v506 = vld [vmem:[%s6] sm:$0xf]
      %v507 = vld [vmem:[%s6 + $0x4] sm:$0xf]
      %v508 = vld [vmem:[%s6 + $0x8] sm:$0xf]
      %v509 = vld [vmem:[%s6 + $0xc] sm:$0xf]
      %v510 = vld [vmem:[%s6 + $0x10] sm:$0xf]
      %v511 = vld [vmem:[%s6 + $0x14] sm:$0xf]
      %v512 = vld [vmem:[%s6 + $0x18] sm:$0xf]
      %v513 = vld [vmem:[%s6 + $0x1c] sm:$0xf]
      %v514 = vld [vmem:[%s6 + $0x20] sm:$0xf]
      %v515 = vld [vmem:[%s6 + $0x24] sm:$0xf]
      %v516 = vld [vmem:[%s6 + $0x28] sm:$0xf]
      %v517 = vld [vmem:[%s6 + $0x2c] sm:$0xf]
      %v518 = vld [vmem:[%s6 + $0x30] sm:$0xf]
      %v519 = vld [vmem:[%s6 + $0x34] sm:$0xf]
      %v520 = vld [vmem:[%s6 + $0x38] sm:$0xf]
      %v521 = vld [vmem:[%s6 + $0x3c] sm:$0xf]
      %v538 = vunpack.c.l.b16 %v506
      %v539 = vunpack.c.l.b16 %v507
      %v540 = vunpack.c.l.b16 %v508
      %v541 = vunpack.c.l.b16 %v509
      %v542 = vunpack.c.l.b16 %v510
      %v543 = vunpack.c.l.b16 %v511
      %v544 = vunpack.c.l.b16 %v512
      %v545 = vunpack.c.l.b16 %v513
      %v546 = vunpack.c.l.b16 %v514
      %v547 = vunpack.c.l.b16 %v515
      %v548 = vunpack.c.l.b16 %v516
      %v549 = vunpack.c.l.b16 %v517
      %v550 = vunpack.c.l.b16 %v518
      %v551 = vunpack.c.l.b16 %v519
      %v552 = vunpack.c.l.b16 %v520
      %v553 = vunpack.c.l.b16 %v521
      %v554 = vpack.c.b16 %v539, %v538
      %v555 = vpack.c.b16 %v541, %v540
      %v556 = vpack.c.b16 %v543, %v542
      %v557 = vpack.c.b16 %v545, %v544
      %v558 = vpack.c.b16 %v547, %v546
      %v559 = vpack.c.b16 %v549, %v548
      %v560 = vpack.c.b16 %v551, %v550
      %v561 = vpack.c.b16 %v553, %v552
      %570 = vmatprep.subr.bf16.mxu0 0
      %571 = vmatpush1.bf16.msra.mxu0 %v554
      %572 = vmatprep.subr.bf16.mxu0 0
      %573 = vmatpush1.bf16.msra.mxu0 %v555
      %574 = vmatprep.subr.bf16.mxu0 0
      %575 = vmatpush1.bf16.msra.mxu0 %v556
      %576 = vmatprep.subr.bf16.mxu0 0
      %577 = vmatpush1.bf16.msra.mxu0 %v557
      %578 = vmatprep.subr.bf16.mxu0 0
      %579 = vmatpush1.bf16.msra.mxu0 %v558
      %580 = vmatprep.subr.bf16.mxu0 0
      %581 = vmatpush1.bf16.msra.mxu0 %v559
      %582 = vmatprep.subr.bf16.mxu0 0
      %583 = vmatpush1.bf16.msra.mxu0 %v560
      %584 = vmatprep.subr.bf16.mxu0 0
      %585 = vmatpush1.bf16.msra.mxu0 %v561
      %586 = vmatprep.subr.bf16.mxu0 0
      %587 = vmatpush1.bf16.msra.mxu0 0
      %588 = vmatprep.subr.bf16.mxu0 0
      %589 = vmatpush1.bf16.msra.mxu0 0
      %590 = vmatprep.subr.bf16.mxu0 0
      %591 = vmatpush1.bf16.msra.mxu0 0
      %592 = vmatprep.subr.bf16.mxu0 0
      %593 = vmatpush1.bf16.msra.mxu0 0
      %594 = vmatprep.subr.bf16.mxu0 0
      %595 = vmatpush1.bf16.msra.mxu0 0
      %596 = vmatprep.subr.bf16.mxu0 0
      %597 = vmatpush1.bf16.msra.mxu0 0
      %598 = vmatprep.subr.bf16.mxu0 0
      %599 = vmatpush1.bf16.msra.mxu0 0
      %600 = vmatprep.subr.bf16.mxu0 0
      %601 = vmatpush1.bf16.msra.mxu0 0
      %602 = vmatprep.mubr.bf16.mxu0 0
      %603 = vmatmul.mubr.bf16.gmra.mrb[0].mxu0 %v505
      %v604 = vpop.f32.mrb[0].mxu0
      %v605 = vadd.f32 0.0, %v604
      %v606 = vpop.f32.mrb[0].mxu0
      %v607 = vpop.f32.mrb[0].mxu0
      %v608 = vadd.f32 0.0, %v607
      %v609 = vpop.f32.mrb[0].mxu0
      %610 = vdwg.mxu0
      %v611 = vld [vmem:[%s7] sm:$0x1]
      %v613 = vlaneseq
      %v614 = vshrl.u32 %v613, 7
      %v615 = vsub.s32 0, %v614
      %v616 = vrot.slane %v611, %v615
      %v618 = vmul.f32 %v605, %v616
      %v619 = vmul.f32 %v608, %v616
      %v620 = vld [vmem:[%s8] sm:$0x1]
      %v622 = vlaneseq
      %v623 = vshrl.u32 %v622, 7
      %v624 = vsub.s32 0, %v623
      %v625 = vrot.slane %v620, %v624
      %v627 = vadd.f32 %v618, %v625
      %v628 = vadd.f32 %v619, %v625
      %v629 = vadd.f32 %v501, %v627
      %v630 = vadd.f32 %v502, %v628
      %v631 = vmax.f32 %v629, 0.0
      %v632 = vmax.f32 %v630, 0.0
      %633 = vst [vmem:[%s366] sm:$0xff] %v631
      %634 = vst [vmem:[%s366 + $0x8] sm:$0xff] %v632
      %p635 = scmp.lt.s32.totalorder %s20, 1
      %s636 = scalar_select %p635, %s20, 1
      %s637 = smul.addr %s636, 2
      %s638 = smul.addr %s637, 8
      %s639 = scalar_lea.vmem %s9, %s638
      // Predicated region
      $region57: #{_lambda_.18} parent=55 // pred_check
        %p640 = pneg %p242
      $region58: #{_lambda_.18} parent=55 // pred_check_branch
        %642 = sbr.rel (%p640) target = $region60
      $region59: #{_lambda_.18} parent=55 // pred_region
        _
      $region60: #{_lambda_.18} parent=55 // pred_fallthru
        _
    $region56: #{_lambda_.18} parent=5 // pred_fallthru
      _
    %p643 = scmp.le.s32.totalorder 2, %s15
    // Predicated region
    $region61: #{_lambda_.18} parent=5 // pred_check
      %p644 = pneg %p643
    $region62: #{_lambda_.18} parent=5 // pred_check_branch
      %646 = sbr.rel (%p644) target = $region64
    $region63: #{_lambda_.18} parent=5 // pred_region
      %s647 = ssub.s32 %s15, 2
      // Predicated region
      $region65: #{_lambda_.18} parent=63 // pred_check
        %p648 = pneg %p248
      $region66: #{_lambda_.18} parent=63 // pred_check_branch
        %650 = sbr.rel (%p648) target = $region68
      $region67: #{_lambda_.18} parent=63 // pred_region
        %p651 = scmp.lt.s32.totalorder %s21, 1
        %s652 = scalar_select %p651, %s21, 1
        %s653 = smul.addr %s652, 2
        %s654 = smul.addr %s653, 8
        %s655 = scalar_lea.vmem %s9, %s654
      $region68: #{_lambda_.18} parent=63 // pred_fallthru
        _
    $region64: #{_lambda_.18} parent=5 // pred_fallthru
      _
  $region6: #{_lambda_.18} parent=0 // loop_footer
    %s19 = sadd.s32 1, %s15
  $region7: #{_lambda_.18} parent=0 // loop_footer_branch
    %14 = sbr.rel target = $region3
  $region8: #{_lambda_.18} parent=0 // loop_exit
    _

// kernel: _lambda_.19
$region0: #{_lambda_.19}
  #allocation0 [shape = 'u32[]', space=smem, size = 0x4, offset = 0x4, fixed_abs, tag = 'smem constant byte address 0x4 - core index']
  #allocation1 [shape = 'u32[144,128]{1,0:T(1,128)}', space=vmem, size = 0x12000, scoped, tag = 'internal scratch']
  %s0 = inlined_call_operand.vmem [shape: f32[2,16,128], index: 0, kind: input, shape index: {}]
  %s1 = inlined_call_operand.vmem [shape: bf16[128,128], index: 1, kind: input, shape index: {}]
  %s2 = inlined_call_operand.vmem [shape: f32[1,128], index: 2, kind: input, shape index: {}]
  %s3 = inlined_call_operand.hbm [shape: f32[2,128], index: 3, kind: output, shape index: {}]
  %s4 = sld [smem:[#allocation0]]
  $region22: #{_lambda_.19} parent=0
    _
  %s6 = ssub.s32 1, %s4
  %s7 = scalar_select 0, %s6, %s4
  $region1: #{_lambda_.19} parent=0
    #allocation2 [shape = 'u8[1024]{0}', space=vmem, size = 0x400, scoped, tag = 'output window, operand 0, single buffered']
    #allocation3 [shape = 's32[1]{0}', space=sflag, size = 0x4, scoped, tag = 'scoped memory for _lambda_.19']
    %8 = vsyncpa [#allocation3], 0
    // Predicated region
    $region2: #{_lambda_.19} parent=1 // pred_check
      _
    $region3: #{_lambda_.19} parent=1 // pred_check_branch
      %10 = sbr.rel (0) target = $region5
    $region4: #{_lambda_.19} parent=1 // pred_region
      _
    $region5: #{_lambda_.19} parent=1 // pred_fallthru
      _
    // Predicated region
    $region6: #{_lambda_.19} parent=1 // pred_check
      _
    $region7: #{_lambda_.19} parent=1 // pred_check_branch
      %12 = sbr.rel (0) target = $region9
    $region8: #{_lambda_.19} parent=1 // pred_region
      _
    $region9: #{_lambda_.19} parent=1 // pred_fallthru
      _
    // Predicated region
    $region10: #{_lambda_.19} parent=1 // pred_check
      _
    $region11: #{_lambda_.19} parent=1 // pred_check_branch
      %14 = sbr.rel (0) target = $region13
    $region12: #{_lambda_.19} parent=1 // pred_region
      _
    $region13: #{_lambda_.19} parent=1 // pred_fallthru
      _
    %v16 = vld [vmem:[%s0] sm:$0xff]
    %v17 = vld [vmem:[%s0 + $0x8] sm:$0xff]
    %v18 = vld [vmem:[%s0 + $0x10] sm:$0xff]
    %v19 = vld [vmem:[%s0 + $0x18] sm:$0xff]
    %v20 = vadd.f32 %v16, %v17
    %v21 = vrot.slane %v20, 4
    %v22 = vadd.f32 %v20, %v21
    %v23 = vrot.slane %v22, 2
    %v24 = vadd.f32 %v22, %v23
    %v25 = vrot.slane %v24, 1
    %v26 = vadd.f32 %v24, %v25
    %v27 = vadd.f32 %v18, %v19
    %v28 = vrot.slane %v27, 4
    %v29 = vadd.f32 %v27, %v28
    %v30 = vrot.slane %v29, 2
    %v31 = vadd.f32 %v29, %v30
    %v32 = vrot.slane %v31, 1
    %v33 = vadd.f32 %v31, %v32
    %v34 = vrcp.pop 16.0
    %v35 = vmul.f32 %v26, %v34
    %v36 = vmul.f32 %v33, %v34
    %v37 = vpack.c.bf16 %v35, %v35
    %v38 = vpack.c.bf16 %v36, %v36
    %v39 = vld [vmem:[%s1] sm:$0xf]
    %v40 = vld [vmem:[%s1 + $0x4] sm:$0xf]
    %v41 = vld [vmem:[%s1 + $0x8] sm:$0xf]
    %v42 = vld [vmem:[%s1 + $0xc] sm:$0xf]
    %v43 = vld [vmem:[%s1 + $0x10] sm:$0xf]
    %v44 = vld [vmem:[%s1 + $0x14] sm:$0xf]
    %v45 = vld [vmem:[%s1 + $0x18] sm:$0xf]
    %v46 = vld [vmem:[%s1 + $0x1c] sm:$0xf]
    %v47 = vld [vmem:[%s1 + $0x20] sm:$0xf]
    %v48 = vld [vmem:[%s1 + $0x24] sm:$0xf]
    %v49 = vld [vmem:[%s1 + $0x28] sm:$0xf]
    %v50 = vld [vmem:[%s1 + $0x2c] sm:$0xf]
    %v51 = vld [vmem:[%s1 + $0x30] sm:$0xf]
    %v52 = vld [vmem:[%s1 + $0x34] sm:$0xf]
    %v53 = vld [vmem:[%s1 + $0x38] sm:$0xf]
    %v54 = vld [vmem:[%s1 + $0x3c] sm:$0xf]
    %v55 = vld [vmem:[%s2] sm:$0x1]
    %v57 = vlaneseq
    %v58 = vshrl.u32 %v57, 7
    %v59 = vsub.s32 0, %v58
    %v60 = vrot.slane %v55, %v59
    %v64 = vunpack.c.l.b16 %v37
    %v65 = vunpack.c.l.b16 %v38
    %vm66 = vcmask 1041409
    %v67 = vsel %vm66, %v65, %v64
    %v68 = vpack.c.b16 %v67, %v67
    %v86 = vunpack.c.l.b16 %v39
    %v87 = vunpack.c.l.b16 %v40
    %v88 = vunpack.c.l.b16 %v41
    %v89 = vunpack.c.l.b16 %v42
    %v90 = vunpack.c.l.b16 %v43
    %v91 = vunpack.c.l.b16 %v44
    %v92 = vunpack.c.l.b16 %v45
    %v93 = vunpack.c.l.b16 %v46
    %v94 = vunpack.c.l.b16 %v47
    %v95 = vunpack.c.l.b16 %v48
    %v96 = vunpack.c.l.b16 %v49
    %v97 = vunpack.c.l.b16 %v50
    %v98 = vunpack.c.l.b16 %v51
    %v99 = vunpack.c.l.b16 %v52
    %v100 = vunpack.c.l.b16 %v53
    %v101 = vunpack.c.l.b16 %v54
    %v102 = vpack.c.b16 %v87, %v86
    %v103 = vpack.c.b16 %v89, %v88
    %v104 = vpack.c.b16 %v91, %v90
    %v105 = vpack.c.b16 %v93, %v92
    %v106 = vpack.c.b16 %v95, %v94
    %v107 = vpack.c.b16 %v97, %v96
    %v108 = vpack.c.b16 %v99, %v98
    %v109 = vpack.c.b16 %v101, %v100
    %118 = vmatprep.subr.bf16.mxu0 0
    %119 = vmatpush1.bf16.msra.mxu0 %v102
    %120 = vmatprep.subr.bf16.mxu0 0
    %121 = vmatpush1.bf16.msra.mxu0 %v103
    %122 = vmatprep.subr.bf16.mxu0 0
    %123 = vmatpush1.bf16.msra.mxu0 %v104
    %124 = vmatprep.subr.bf16.mxu0 0
    %125 = vmatpush1.bf16.msra.mxu0 %v105
    %126 = vmatprep.subr.bf16.mxu0 0
    %127 = vmatpush1.bf16.msra.mxu0 %v106
    %128 = vmatprep.subr.bf16.mxu0 0
    %129 = vmatpush1.bf16.msra.mxu0 %v107
    %130 = vmatprep.subr.bf16.mxu0 0
    %131 = vmatpush1.bf16.msra.mxu0 %v108
    %132 = vmatprep.subr.bf16.mxu0 0
    %133 = vmatpush1.bf16.msra.mxu0 %v109
    %134 = vmatprep.subr.bf16.mxu0 0
    %135 = vmatpush1.bf16.msra.mxu0 0
    %136 = vmatprep.subr.bf16.mxu0 0
    %137 = vmatpush1.bf16.msra.mxu0 0
    %138 = vmatprep.subr.bf16.mxu0 0
    %139 = vmatpush1.bf16.msra.mxu0 0
    %140 = vmatprep.subr.bf16.mxu0 0
    %141 = vmatpush1.bf16.msra.mxu0 0
    %142 = vmatprep.subr.bf16.mxu0 0
    %143 = vmatpush1.bf16.msra.mxu0 0
    %144 = vmatprep.subr.bf16.mxu0 0
    %145 = vmatpush1.bf16.msra.mxu0 0
    %146 = vmatprep.subr.bf16.mxu0 0
    %147 = vmatpush1.bf16.msra.mxu0 0
    %148 = vmatprep.subr.bf16.mxu0 0
    %149 = vmatpush1.bf16.msra.mxu0 0
    %150 = vmatprep.mubr.bf16.mxu0 0
    %151 = vmatmul.mubr.bf16.gmra.mrb[0].mxu0 %v68
    %v152 = vpop.f32.mrb[0].mxu0
    %v153 = vadd.f32 %v60, %v152
    %v154 = vpop.f32.mrb[0].mxu0
    %v155 = vpop.f32.mrb[0].mxu0
    %v156 = vpop.f32.mrb[0].mxu0
    %157 = vdwg.mxu0
    %158 = vst [vmem:[#allocation2] sm:$0x3] %v153
    // Predicated region
    $region14: #{_lambda_.19} parent=1 // pred_check
      _
    $region15: #{_lambda_.19} parent=1 // pred_check_branch
      %160 = sbr.rel (0) target = $region17
    $region16: #{_lambda_.19} parent=1 // pred_region
      %s162 = ssub.s32 32, 32
      %163 = vsyncadd [#allocation3], %s162
      %s165 = sshll.u32 [#allocation2], 4
      %s166 = int_to_ptr.vmem [resolvable:$true] %s165
      %168 = dma.vmem_to_hbm [thread:$0]  %s166, 32, %s3, [#allocation3]
    $region17: #{_lambda_.19} parent=1 // pred_fallthru
      _
    // Predicated region
    $region18: #{_lambda_.19} parent=1 // pred_check
      _
    $region19: #{_lambda_.19} parent=1 // pred_check_branch
      %170 = sbr.rel (0) target = $region21
    $region20: #{_lambda_.19} parent=1 // pred_region
      %171 = dma.done [#allocation3], 32
    $region21: #{_lambda_.19} parent=1 // pred_fallthru
      _
    %172 = vsyncpa [#allocation3], 1

// kernel: _lambda_.16
$region0: #{_lambda_.16}
  #allocation0 [shape = 'u32[]', space=smem, size = 0x4, offset = 0x4, fixed_abs, tag = 'smem constant byte address 0x4 - core index']
  #allocation1 [shape = 'u32[144,128]{1,0:T(1,128)}', space=vmem, size = 0x12000, scoped, tag = 'internal scratch']
  %s0 = inlined_call_operand.vmem [shape: bf16[32,1152], index: 0, kind: input, shape index: {}]
  %s1 = inlined_call_operand.vmem [shape: bf16[1152,128], index: 1, kind: input, shape index: {}]
  %s2 = inlined_call_operand.vmem [shape: f32[1,128], index: 2, kind: input, shape index: {}]
  %s3 = inlined_call_operand.vmem [shape: f32[1,128], index: 3, kind: input, shape index: {}]
  %s4 = inlined_call_operand.vmem [shape: f32[32,128], index: 4, kind: output, shape index: {}]
  %s5 = sld [smem:[#allocation0]]
  $region26: #{_lambda_.16} parent=0
    _
  %s7 = ssub.s32 1, %s5
  %s8 = scalar_select 0, %s7, %s5
  // Predicated region
  $region2: #{_lambda_.16} parent=0 // pred_check
    _
  $region3: #{_lambda_.16} parent=0 // pred_check_branch
    %10 = sbr.rel (0) target = $region5
  $region4: #{_lambda_.16} parent=0 // pred_region
    _
  $region5: #{_lambda_.16} parent=0 // pred_fallthru
    _
  // Predicated region
  $region6: #{_lambda_.16} parent=0 // pred_check
    _
  $region7: #{_lambda_.16} parent=0 // pred_check_branch
    %12 = sbr.rel (0) target = $region9
  $region8: #{_lambda_.16} parent=0 // pred_region
    _
  $region9: #{_lambda_.16} parent=0 // pred_fallthru
    _
  // Predicated region
  $region10: #{_lambda_.16} parent=0 // pred_check
    _
  $region11: #{_lambda_.16} parent=0 // pred_check_branch
    %14 = sbr.rel (0) target = $region13
  $region12: #{_lambda_.16} parent=0 // pred_region
    _
  $region13: #{_lambda_.16} parent=0 // pred_fallthru
    _
  // Predicated region
  $region14: #{_lambda_.16} parent=0 // pred_check
    _
  $region15: #{_lambda_.16} parent=0 // pred_check_branch
    %16 = sbr.rel (0) target = $region17
  $region16: #{_lambda_.16} parent=0 // pred_region
    _
  $region17: #{_lambda_.16} parent=0 // pred_fallthru
    _
  %v18 = vld [vmem:[%s0] sm:$0xff]
  %v19 = vld [vmem:[%s0 + $0x8] sm:$0xff]
  %v20 = vld [vmem:[%s0 + $0x10] sm:$0xff]
  %v21 = vld [vmem:[%s0 + $0x18] sm:$0xff]
  %v22 = vld [vmem:[%s0 + $0x20] sm:$0xf]
  %v23 = vld [vmem:[%s0 + $0x24] sm:$0xff]
  %v24 = vld [vmem:[%s0 + $0x2c] sm:$0xff]
  %v25 = vld [vmem:[%s0 + $0x34] sm:$0xff]
  %v26 = vld [vmem:[%s0 + $0x3c] sm:$0xff]
  %v27 = vld [vmem:[%s0 + $0x44] sm:$0xf]
  %v28 = vld [vmem:[%s0 + $0x48] sm:$0xff]
  %v29 = vld [vmem:[%s0 + $0x50] sm:$0xff]
  %v30 = vld [vmem:[%s0 + $0x58] sm:$0xff]
  %v31 = vld [vmem:[%s0 + $0x60] sm:$0xff]
  %v32 = vld [vmem:[%s0 + $0x68] sm:$0xf]
  %v33 = vld [vmem:[%s0 + $0x6c] sm:$0xff]
  %v34 = vld [vmem:[%s0 + $0x74] sm:$0xff]
  %v35 = vld [vmem:[%s0 + $0x7c] sm:$0xff]
  %v36 = vld [vmem:[%s0 + $0x84] sm:$0xff]
  %v37 = vld [vmem:[%s0 + $0x8c] sm:$0xf]
  %v38 = vld [vmem:[%s1] sm:$0xf]
  %v39 = vld [vmem:[%s1 + $0x4] sm:$0xf]
  %v40 = vld [vmem:[%s1 + $0x8] sm:$0xf]
  %v41 = vld [vmem:[%s1 + $0xc] sm:$0xf]
  %v42 = vld [vmem:[%s1 + $0x10] sm:$0xf]
  %v43 = vld [vmem:[%s1 + $0x14] sm:$0xf]
  %v44 = vld [vmem:[%s1 + $0x18] sm:$0xf]
  %v45 = vld [vmem:[%s1 + $0x1c] sm:$0xf]
  %v46 = vld [vmem:[%s1 + $0x20] sm:$0xf]
  %v47 = vld [vmem:[%s1 + $0x24] sm:$0xf]
  %v48 = vld [vmem:[%s1 + $0x28] sm:$0xf]
  %v49 = vld [vmem:[%s1 + $0x2c] sm:$0xf]
  %v50 = vld [vmem:[%s1 + $0x30] sm:$0xf]
  %v51 = vld [vmem:[%s1 + $0x34] sm:$0xf]
  %v52 = vld [vmem:[%s1 + $0x38] sm:$0xf]
  %v53 = vld [vmem:[%s1 + $0x3c] sm:$0xf]
  %v54 = vld [vmem:[%s1 + $0x40] sm:$0xf]
  %v55 = vld [vmem:[%s1 + $0x44] sm:$0xf]
  %v56 = vld [vmem:[%s1 + $0x48] sm:$0xf]
  %v57 = vld [vmem:[%s1 + $0x4c] sm:$0xf]
  %v58 = vld [vmem:[%s1 + $0x50] sm:$0xf]
  %v59 = vld [vmem:[%s1 + $0x54] sm:$0xf]
  %v60 = vld [vmem:[%s1 + $0x58] sm:$0xf]
  %v61 = vld [vmem:[%s1 + $0x5c] sm:$0xf]
  %v62 = vld [vmem:[%s1 + $0x60] sm:$0xf]
  %v63 = vld [vmem:[%s1 + $0x64] sm:$0xf]
  %v64 = vld [vmem:[%s1 + $0x68] sm:$0xf]
  %v65 = vld [vmem:[%s1 + $0x6c] sm:$0xf]
  %v66 = vld [vmem:[%s1 + $0x70] sm:$0xf]
  %v67 = vld [vmem:[%s1 + $0x74] sm:$0xf]
  %v68 = vld [vmem:[%s1 + $0x78] sm:$0xf]
  %v69 = vld [vmem:[%s1 + $0x7c] sm:$0xf]
  %v70 = vld [vmem:[%s1 + $0x80] sm:$0xf]
  %v71 = vld [vmem:[%s1 + $0x84] sm:$0xf]
  %v72 = vld [vmem:[%s1 + $0x88] sm:$0xf]
  %v73 = vld [vmem:[%s1 + $0x8c] sm:$0xf]
  %v74 = vld [vmem:[%s1 + $0x90] sm:$0xf]
  %v75 = vld [vmem:[%s1 + $0x94] sm:$0xf]
  %v76 = vld [vmem:[%s1 + $0x98] sm:$0xf]
  %v77 = vld [vmem:[%s1 + $0x9c] sm:$0xf]
  %v78 = vld [vmem:[%s1 + $0xa0] sm:$0xf]
  %v79 = vld [vmem:[%s1 + $0xa4] sm:$0xf]
  %v80 = vld [vmem:[%s1 + $0xa8] sm:$0xf]
  %v81 = vld [vmem:[%s1 + $0xac] sm:$0xf]
  %v82 = vld [vmem:[%s1 + $0xb0] sm:$0xf]
  %v83 = vld [vmem:[%s1 + $0xb4] sm:$0xf]
  %v84 = vld [vmem:[%s1 + $0xb8] sm:$0xf]
  %v85 = vld [vmem:[%s1 + $0xbc] sm:$0xf]
  %v86 = vld [vmem:[%s1 + $0xc0] sm:$0xf]
  %v87 = vld [vmem:[%s1 + $0xc4] sm:$0xf]
  %v88 = vld [vmem:[%s1 + $0xc8] sm:$0xf]
  %v89 = vld [vmem:[%s1 + $0xcc] sm:$0xf]
  %v90 = vld [vmem:[%s1 + $0xd0] sm:$0xf]
  %v91 = vld [vmem:[%s1 + $0xd4] sm:$0xf]
  %v92 = vld [vmem:[%s1 + $0xd8] sm:$0xf]
  %v93 = vld [vmem:[%s1 + $0xdc] sm:$0xf]
  %v94 = vld [vmem:[%s1 + $0xe0] sm:$0xf]
  %v95 = vld [vmem:[%s1 + $0xe4] sm:$0xf]
  %v96 = vld [vmem:[%s1 + $0xe8] sm:$0xf]
  %v97 = vld [vmem:[%s1 + $0xec] sm:$0xf]
  %v98 = vld [vmem:[%s1 + $0xf0] sm:$0xf]
  %v99 = vld [vmem:[%s1 + $0xf4] sm:$0xf]
  %v100 = vld [vmem:[%s1 + $0xf8] sm:$0xf]
  %v101 = vld [vmem:[%s1 + $0xfc] sm:$0xf]
  %v102 = vld [vmem:[%s1 + $0x100] sm:$0xf]
  %v103 = vld [vmem:[%s1 + $0x104] sm:$0xf]
  %v104 = vld [vmem:[%s1 + $0x108] sm:$0xf]
  %v105 = vld [vmem:[%s1 + $0x10c] sm:$0xf]
  %v106 = vld [vmem:[%s1 + $0x110] sm:$0xf]
  %v107 = vld [vmem:[%s1 + $0x114] sm:$0xf]
  %v108 = vld [vmem:[%s1 + $0x118] sm:$0xf]
  %v109 = vld [vmem:[%s1 + $0x11c] sm:$0xf]
  %v110 = vld [vmem:[%s1 + $0x120] sm:$0xf]
  %v111 = vld [vmem:[%s1 + $0x124] sm:$0xf]
  %v112 = vld [vmem:[%s1 + $0x128] sm:$0xf]
  %v113 = vld [vmem:[%s1 + $0x12c] sm:$0xf]
  %v114 = vld [vmem:[%s1 + $0x130] sm:$0xf]
  %v115 = vld [vmem:[%s1 + $0x134] sm:$0xf]
  %v116 = vld [vmem:[%s1 + $0x138] sm:$0xf]
  %v117 = vld [vmem:[%s1 + $0x13c] sm:$0xf]
  %v118 = vld [vmem:[%s1 + $0x140] sm:$0xf]
  %v119 = vld [vmem:[%s1 + $0x144] sm:$0xf]
  %v120 = vld [vmem:[%s1 + $0x148] sm:$0xf]
  %v121 = vld [vmem:[%s1 + $0x14c] sm:$0xf]
  %v122 = vld [vmem:[%s1 + $0x150] sm:$0xf]
  %v123 = vld [vmem:[%s1 + $0x154] sm:$0xf]
  %v124 = vld [vmem:[%s1 + $0x158] sm:$0xf]
  %v125 = vld [vmem:[%s1 + $0x15c] sm:$0xf]
  %v126 = vld [vmem:[%s1 + $0x160] sm:$0xf]
  %v127 = vld [vmem:[%s1 + $0x164] sm:$0xf]
  %v128 = vld [vmem:[%s1 + $0x168] sm:$0xf]
  %v129 = vld [vmem:[%s1 + $0x16c] sm:$0xf]
  %v130 = vld [vmem:[%s1 + $0x170] sm:$0xf]
  %v131 = vld [vmem:[%s1 + $0x174] sm:$0xf]
  %v132 = vld [vmem:[%s1 + $0x178] sm:$0xf]
  %v133 = vld [vmem:[%s1 + $0x17c] sm:$0xf]
  %v134 = vld [vmem:[%s1 + $0x180] sm:$0xf]
  %v135 = vld [vmem:[%s1 + $0x184] sm:$0xf]
  %v136 = vld [vmem:[%s1 + $0x188] sm:$0xf]
  %v137 = vld [vmem:[%s1 + $0x18c] sm:$0xf]
  %v138 = vld [vmem:[%s1 + $0x190] sm:$0xf]
  %v139 = vld [vmem:[%s1 + $0x194] sm:$0xf]
  %v140 = vld [vmem:[%s1 + $0x198] sm:$0xf]
  %v141 = vld [vmem:[%s1 + $0x19c] sm:$0xf]
  %v142 = vld [vmem:[%s1 + $0x1a0] sm:$0xf]
  %v143 = vld [vmem:[%s1 + $0x1a4] sm:$0xf]
  %v144 = vld [vmem:[%s1 + $0x1a8] sm:$0xf]
  %v145 = vld [vmem:[%s1 + $0x1ac] sm:$0xf]
  %v146 = vld [vmem:[%s1 + $0x1b0] sm:$0xf]
  %v147 = vld [vmem:[%s1 + $0x1b4] sm:$0xf]
  %v148 = vld [vmem:[%s1 + $0x1b8] sm:$0xf]
  %v149 = vld [vmem:[%s1 + $0x1bc] sm:$0xf]
  %v150 = vld [vmem:[%s1 + $0x1c0] sm:$0xf]
  %v151 = vld [vmem:[%s1 + $0x1c4] sm:$0xf]
  %v152 = vld [vmem:[%s1 + $0x1c8] sm:$0xf]
  %v153 = vld [vmem:[%s1 + $0x1cc] sm:$0xf]
  %v154 = vld [vmem:[%s1 + $0x1d0] sm:$0xf]
  %v155 = vld [vmem:[%s1 + $0x1d4] sm:$0xf]
  %v156 = vld [vmem:[%s1 + $0x1d8] sm:$0xf]
  %v157 = vld [vmem:[%s1 + $0x1dc] sm:$0xf]
  %v158 = vld [vmem:[%s1 + $0x1e0] sm:$0xf]
  %v159 = vld [vmem:[%s1 + $0x1e4] sm:$0xf]
  %v160 = vld [vmem:[%s1 + $0x1e8] sm:$0xf]
  %v161 = vld [vmem:[%s1 + $0x1ec] sm:$0xf]
  %v162 = vld [vmem:[%s1 + $0x1f0] sm:$0xf]
  %v163 = vld [vmem:[%s1 + $0x1f4] sm:$0xf]
  %v164 = vld [vmem:[%s1 + $0x1f8] sm:$0xf]
  %v165 = vld [vmem:[%s1 + $0x1fc] sm:$0xf]
  %v166 = vld [vmem:[%s1 + $0x200] sm:$0xf]
  %v167 = vld [vmem:[%s1 + $0x204] sm:$0xf]
  %v168 = vld [vmem:[%s1 + $0x208] sm:$0xf]
  %v169 = vld [vmem:[%s1 + $0x20c] sm:$0xf]
  %v170 = vld [vmem:[%s1 + $0x210] sm:$0xf]
  %v171 = vld [vmem:[%s1 + $0x214] sm:$0xf]
  %v172 = vld [vmem:[%s1 + $0x218] sm:$0xf]
  %v173 = vld [vmem:[%s1 + $0x21c] sm:$0xf]
  %v174 = vld [vmem:[%s1 + $0x220] sm:$0xf]
  %v175 = vld [vmem:[%s1 + $0x224] sm:$0xf]
  %v176 = vld [vmem:[%s1 + $0x228] sm:$0xf]
  %v177 = vld [vmem:[%s1 + $0x22c] sm:$0xf]
  %v178 = vld [vmem:[%s1 + $0x230] sm:$0xf]
  %v179 = vld [vmem:[%s1 + $0x234] sm:$0xf]
  %v180 = vld [vmem:[%s1 + $0x238] sm:$0xf]
  %v181 = vld [vmem:[%s1 + $0x23c] sm:$0xf]
  %v202 = vunpack.c.l.b16 %v18
  %v203 = vunpack.c.h.b16 %v18
  %v204 = vunpack.c.l.b16 %v19
  %v205 = vunpack.c.h.b16 %v19
  %v206 = vunpack.c.l.b16 %v20
  %v207 = vunpack.c.h.b16 %v20
  %v208 = vunpack.c.l.b16 %v21
  %v209 = vunpack.c.h.b16 %v21
  %v210 = vunpack.c.l.b16 %v22
  %v211 = vunpack.c.l.b16 %v23
  %v212 = vunpack.c.h.b16 %v23
  %v213 = vunpack.c.l.b16 %v24
  %v214 = vunpack.c.h.b16 %v24
  %v215 = vunpack.c.l.b16 %v25
  %v216 = vunpack.c.h.b16 %v25
  %v217 = vunpack.c.l.b16 %v26
  %v218 = vunpack.c.h.b16 %v26
  %v219 = vunpack.c.l.b16 %v27
  %v220 = vunpack.c.l.b16 %v28
  %v221 = vunpack.c.h.b16 %v28
  %v222 = vunpack.c.l.b16 %v29
  %v223 = vunpack.c.h.b16 %v29
  %v224 = vunpack.c.l.b16 %v30
  %v225 = vunpack.c.h.b16 %v30
  %v226 = vunpack.c.l.b16 %v31
  %v227 = vunpack.c.h.b16 %v31
  %v228 = vunpack.c.l.b16 %v32
  %v229 = vunpack.c.l.b16 %v33
  %v230 = vunpack.c.h.b16 %v33
  %v231 = vunpack.c.l.b16 %v34
  %v232 = vunpack.c.h.b16 %v34
  %v233 = vunpack.c.l.b16 %v35
  %v234 = vunpack.c.h.b16 %v35
  %v235 = vunpack.c.l.b16 %v36
  %v236 = vunpack.c.h.b16 %v36
  %v237 = vunpack.c.l.b16 %v37
  %v238 = vpack.c.b16 %v211, %v202
  %v239 = vpack.c.b16 %v212, %v203
  %v240 = vpack.c.b16 %v213, %v204
  %v241 = vpack.c.b16 %v214, %v205
  %v242 = vpack.c.b16 %v215, %v206
  %v243 = vpack.c.b16 %v216, %v207
  %v244 = vpack.c.b16 %v217, %v208
  %v245 = vpack.c.b16 %v218, %v209
  %v246 = vpack.c.b16 %v219, %v210
  %v247 = vpack.c.b16 %v229, %v220
  %v248 = vpack.c.b16 %v230, %v221
  %v249 = vpack.c.b16 %v231, %v222
  %v250 = vpack.c.b16 %v232, %v223
  %v251 = vpack.c.b16 %v233, %v224
  %v252 = vpack.c.b16 %v234, %v225
  %v253 = vpack.c.b16 %v235, %v226
  %v254 = vpack.c.b16 %v236, %v227
  %v255 = vpack.c.b16 %v237, %v228
  %v418 = vunpack.c.l.b16 %v38
  %v419 = vunpack.c.l.b16 %v39
  %v420 = vunpack.c.l.b16 %v40
  %v421 = vunpack.c.l.b16 %v41
  %v422 = vunpack.c.l.b16 %v42
  %v423 = vunpack.c.l.b16 %v43
  %v424 = vunpack.c.l.b16 %v44
  %v425 = vunpack.c.l.b16 %v45
  %v426 = vunpack.c.l.b16 %v46
  %v427 = vunpack.c.l.b16 %v47
  %v428 = vunpack.c.l.b16 %v48
  %v429 = vunpack.c.l.b16 %v49
  %v430 = vunpack.c.l.b16 %v50
  %v431 = vunpack.c.l.b16 %v51
  %v432 = vunpack.c.l.b16 %v52
  %v433 = vunpack.c.l.b16 %v53
  %v434 = vunpack.c.l.b16 %v54
  %v435 = vunpack.c.l.b16 %v55
  %v436 = vunpack.c.l.b16 %v56
  %v437 = vunpack.c.l.b16 %v57
  %v438 = vunpack.c.l.b16 %v58
  %v439 = vunpack.c.l.b16 %v59
  %v440 = vunpack.c.l.b16 %v60
  %v441 = vunpack.c.l.b16 %v61
  %v442 = vunpack.c.l.b16 %v62
  %v443 = vunpack.c.l.b16 %v63
  %v444 = vunpack.c.l.b16 %v64
  %v445 = vunpack.c.l.b16 %v65
  %v446 = vunpack.c.l.b16 %v66
  %v447 = vunpack.c.l.b16 %v67
  %v448 = vunpack.c.l.b16 %v68
  %v449 = vunpack.c.l.b16 %v69
  %v450 = vunpack.c.l.b16 %v70
  %v451 = vunpack.c.l.b16 %v71
  %v452 = vunpack.c.l.b16 %v72
  %v453 = vunpack.c.l.b16 %v73
  %v454 = vunpack.c.l.b16 %v74
  %v455 = vunpack.c.l.b16 %v75
  %v456 = vunpack.c.l.b16 %v76
  %v457 = vunpack.c.l.b16 %v77
  %v458 = vunpack.c.l.b16 %v78
  %v459 = vunpack.c.l.b16 %v79
  %v460 = vunpack.c.l.b16 %v80
  %v461 = vunpack.c.l.b16 %v81
  %v462 = vunpack.c.l.b16 %v82
  %v463 = vunpack.c.l.b16 %v83
  %v464 = vunpack.c.l.b16 %v84
  %v465 = vunpack.c.l.b16 %v85
  %v466 = vunpack.c.l.b16 %v86
  %v467 = vunpack.c.l.b16 %v87
  %v468 = vunpack.c.l.b16 %v88
  %v469 = vunpack.c.l.b16 %v89
  %v470 = vunpack.c.l.b16 %v90
  %v471 = vunpack.c.l.b16 %v91
  %v472 = vunpack.c.l.b16 %v92
  %v473 = vunpack.c.l.b16 %v93
  %v474 = vunpack.c.l.b16 %v94
  %v475 = vunpack.c.l.b16 %v95
  %v476 = vunpack.c.l.b16 %v96
  %v477 = vunpack.c.l.b16 %v97
  %v478 = vunpack.c.l.b16 %v98
  %v479 = vunpack.c.l.b16 %v99
  %v480 = vunpack.c.l.b16 %v100
  %v481 = vunpack.c.l.b16 %v101
  %v482 = vunpack.c.l.b16 %v102
  %v483 = vunpack.c.l.b16 %v103
  %v484 = vunpack.c.l.b16 %v104
  %v485 = vunpack.c.l.b16 %v105
  %v486 = vunpack.c.l.b16 %v106
  %v487 = vunpack.c.l.b16 %v107
  %v488 = vunpack.c.l.b16 %v108
  %v489 = vunpack.c.l.b16 %v109
  %v490 = vunpack.c.l.b16 %v110
  %v491 = vunpack.c.l.b16 %v111
  %v492 = vunpack.c.l.b16 %v112
  %v493 = vunpack.c.l.b16 %v113
  %v494 = vunpack.c.l.b16 %v114
  %v495 = vunpack.c.l.b16 %v115
  %v496 = vunpack.c.l.b16 %v116
  %v497 = vunpack.c.l.b16 %v117
  %v498 = vunpack.c.l.b16 %v118
  %v499 = vunpack.c.l.b16 %v119
  %v500 = vunpack.c.l.b16 %v120
  %v501 = vunpack.c.l.b16 %v121
  %v502 = vunpack.c.l.b16 %v122
  %v503 = vunpack.c.l.b16 %v123
  %v504 = vunpack.c.l.b16 %v124
  %v505 = vunpack.c.l.b16 %v125
  %v506 = vunpack.c.l.b16 %v126
  %v507 = vunpack.c.l.b16 %v127
  %v508 = vunpack.c.l.b16 %v128
  %v509 = vunpack.c.l.b16 %v129
  %v510 = vunpack.c.l.b16 %v130
  %v511 = vunpack.c.l.b16 %v131
  %v512 = vunpack.c.l.b16 %v132
  %v513 = vunpack.c.l.b16 %v133
  %v514 = vunpack.c.l.b16 %v134
  %v515 = vunpack.c.l.b16 %v135
  %v516 = vunpack.c.l.b16 %v136
  %v517 = vunpack.c.l.b16 %v137
  %v518 = vunpack.c.l.b16 %v138
  %v519 = vunpack.c.l.b16 %v139
  %v520 = vunpack.c.l.b16 %v140
  %v521 = vunpack.c.l.b16 %v141
  %v522 = vunpack.c.l.b16 %v142
  %v523 = vunpack.c.l.b16 %v143
  %v524 = vunpack.c.l.b16 %v144
  %v525 = vunpack.c.l.b16 %v145
  %v526 = vunpack.c.l.b16 %v146
  %v527 = vunpack.c.l.b16 %v147
  %v528 = vunpack.c.l.b16 %v148
  %v529 = vunpack.c.l.b16 %v149
  %v530 = vunpack.c.l.b16 %v150
  %v531 = vunpack.c.l.b16 %v151
  %v532 = vunpack.c.l.b16 %v152
  %v533 = vunpack.c.l.b16 %v153
  %v534 = vunpack.c.l.b16 %v154
  %v535 = vunpack.c.l.b16 %v155
  %v536 = vunpack.c.l.b16 %v156
  %v537 = vunpack.c.l.b16 %v157
  %v538 = vunpack.c.l.b16 %v158
  %v539 = vunpack.c.l.b16 %v159
  %v540 = vunpack.c.l.b16 %v160
  %v541 = vunpack.c.l.b16 %v161
  %v542 = vunpack.c.l.b16 %v162
  %v543 = vunpack.c.l.b16 %v163
  %v544 = vunpack.c.l.b16 %v164
  %v545 = vunpack.c.l.b16 %v165
  %v546 = vunpack.c.l.b16 %v166
  %v547 = vunpack.c.l.b16 %v167
  %v548 = vunpack.c.l.b16 %v168
  %v549 = vunpack.c.l.b16 %v169
  %v550 = vunpack.c.l.b16 %v170
  %v551 = vunpack.c.l.b16 %v171
  %v552 = vunpack.c.l.b16 %v172
  %v553 = vunpack.c.l.b16 %v173
  %v554 = vunpack.c.l.b16 %v174
  %v555 = vunpack.c.l.b16 %v175
  %v556 = vunpack.c.l.b16 %v176
  %v557 = vunpack.c.l.b16 %v177
  %v558 = vunpack.c.l.b16 %v178
  %v559 = vunpack.c.l.b16 %v179
  %v560 = vunpack.c.l.b16 %v180
  %v561 = vunpack.c.l.b16 %v181
  %v562 = vpack.c.b16 %v419, %v418
  %v563 = vpack.c.b16 %v421, %v420
  %v564 = vpack.c.b16 %v423, %v422
  %v565 = vpack.c.b16 %v425, %v424
  %v566 = vpack.c.b16 %v427, %v426
  %v567 = vpack.c.b16 %v429, %v428
  %v568 = vpack.c.b16 %v431, %v430
  %v569 = vpack.c.b16 %v433, %v432
  %v570 = vpack.c.b16 %v435, %v434
  %v571 = vpack.c.b16 %v437, %v436
  %v572 = vpack.c.b16 %v439, %v438
  %v573 = vpack.c.b16 %v441, %v440
  %v574 = vpack.c.b16 %v443, %v442
  %v575 = vpack.c.b16 %v445, %v444
  %v576 = vpack.c.b16 %v447, %v446
  %v577 = vpack.c.b16 %v449, %v448
  %v578 = vpack.c.b16 %v451, %v450
  %v579 = vpack.c.b16 %v453, %v452
  %v580 = vpack.c.b16 %v455, %v454
  %v581 = vpack.c.b16 %v457, %v456
  %v582 = vpack.c.b16 %v459, %v458
  %v583 = vpack.c.b16 %v461, %v460
  %v584 = vpack.c.b16 %v463, %v462
  %v585 = vpack.c.b16 %v465, %v464
  %v586 = vpack.c.b16 %v467, %v466
  %v587 = vpack.c.b16 %v469, %v468
  %v588 = vpack.c.b16 %v471, %v470
  %v589 = vpack.c.b16 %v473, %v472
  %v590 = vpack.c.b16 %v475, %v474
  %v591 = vpack.c.b16 %v477, %v476
  %v592 = vpack.c.b16 %v479, %v478
  %v593 = vpack.c.b16 %v481, %v480
  %v594 = vpack.c.b16 %v483, %v482
  %v595 = vpack.c.b16 %v485, %v484
  %v596 = vpack.c.b16 %v487, %v486
  %v597 = vpack.c.b16 %v489, %v488
  %v598 = vpack.c.b16 %v491, %v490
  %v599 = vpack.c.b16 %v493, %v492
  %v600 = vpack.c.b16 %v495, %v494
  %v601 = vpack.c.b16 %v497, %v496
  %v602 = vpack.c.b16 %v499, %v498
  %v603 = vpack.c.b16 %v501, %v500
  %v604 = vpack.c.b16 %v503, %v502
  %v605 = vpack.c.b16 %v505, %v504
  %v606 = vpack.c.b16 %v507, %v506
  %v607 = vpack.c.b16 %v509, %v508
  %v608 = vpack.c.b16 %v511, %v510
  %v609 = vpack.c.b16 %v513, %v512
  %v610 = vpack.c.b16 %v515, %v514
  %v611 = vpack.c.b16 %v517, %v516
  %v612 = vpack.c.b16 %v519, %v518
  %v613 = vpack.c.b16 %v521, %v520
  %v614 = vpack.c.b16 %v523, %v522
  %v615 = vpack.c.b16 %v525, %v524
  %v616 = vpack.c.b16 %v527, %v526
  %v617 = vpack.c.b16 %v529, %v528
  %v618 = vpack.c.b16 %v531, %v530
  %v619 = vpack.c.b16 %v533, %v532
  %v620 = vpack.c.b16 %v535, %v534
  %v621 = vpack.c.b16 %v537, %v536
  %v622 = vpack.c.b16 %v539, %v538
  %v623 = vpack.c.b16 %v541, %v540
  %v624 = vpack.c.b16 %v543, %v542
  %v625 = vpack.c.b16 %v545, %v544
  %v626 = vpack.c.b16 %v547, %v546
  %v627 = vpack.c.b16 %v549, %v548
  %v628 = vpack.c.b16 %v551, %v550
  %v629 = vpack.c.b16 %v553, %v552
  %v630 = vpack.c.b16 %v555, %v554
  %v631 = vpack.c.b16 %v557, %v556
  %v632 = vpack.c.b16 %v559, %v558
  %v633 = vpack.c.b16 %v561, %v560
  %706 = vmatprep.subr.bf16.mxu0 0
  %707 = vmatpush1.bf16.msra.mxu0 %v562
  %708 = vmatprep.subr.bf16.mxu0 0
  %709 = vmatpush1.bf16.msra.mxu0 %v563
  %710 = vmatprep.subr.bf16.mxu0 0
  %711 = vmatpush1.bf16.msra.mxu0 %v564
  %712 = vmatprep.subr.bf16.mxu0 0
  %713 = vmatpush1.bf16.msra.mxu0 %v565
  %714 = vmatprep.subr.bf16.mxu0 0
  %715 = vmatpush1.bf16.msra.mxu0 %v566
  %716 = vmatprep.subr.bf16.mxu0 0
  %717 = vmatpush1.bf16.msra.mxu0 %v567
  %718 = vmatprep.subr.bf16.mxu0 0
  %719 = vmatpush1.bf16.msra.mxu0 %v568
  %720 = vmatprep.subr.bf16.mxu0 0
  %721 = vmatpush1.bf16.msra.mxu0 %v569
  %722 = vmatprep.subr.bf16.mxu0 0
  %723 = vmatpush1.bf16.msra.mxu0 %v570
  %724 = vmatprep.subr.bf16.mxu0 0
  %725 = vmatpush1.bf16.msra.mxu0 %v571
  %726 = vmatprep.subr.bf16.mxu0 0
  %727 = vmatpush1.bf16.msra.mxu0 %v572
  %728 = vmatprep.subr.bf16.mxu0 0
  %729 = vmatpush1.bf16.msra.mxu0 %v573
  %730 = vmatprep.subr.bf16.mxu0 0
  %731 = vmatpush1.bf16.msra.mxu0 %v574
  %732 = vmatprep.subr.bf16.mxu0 0
  %733 = vmatpush1.bf16.msra.mxu0 %v575
  %734 = vmatprep.subr.bf16.mxu0 0
  %735 = vmatpush1.bf16.msra.mxu0 %v576
  %736 = vmatprep.subr.bf16.mxu0 0
  %737 = vmatpush1.bf16.msra.mxu0 %v577
  %738 = vmatprep.mubr.bf16.mxu0 %v239
  %739 = vmatmul.mubr.bf16.gmra.mrb[0].mxu0 %v238
  %v740 = vpop.f32.mrb[0].mxu0
  %v741 = vadd.f32 0.0, %v740
  %v742 = vpop.f32.mrb[0].mxu0
  %v743 = vpop.f32.mrb[0].mxu0
  %v744 = vadd.f32 0.0, %v743
  %v745 = vpop.f32.mrb[0].mxu0
  %746 = vmatprep.mubr.bf16.mxu0 %v248
  %747 = vmatmul.mubr.bf16.gmra.mrb[0].mxu0 %v247
  %v748 = vpop.f32.mrb[0].mxu0
  %v749 = vadd.f32 0.0, %v748
  %v750 = vpop.f32.mrb[0].mxu0
  %v751 = vpop.f32.mrb[0].mxu0
  %v752 = vadd.f32 0.0, %v751
  %v753 = vpop.f32.mrb[0].mxu0
  %754 = vdwg.mxu0
  %755 = vmatprep.subr.bf16.mxu0 0
  %756 = vmatpush1.bf16.msra.mxu0 %v578
  %757 = vmatprep.subr.bf16.mxu0 0
  %758 = vmatpush1.bf16.msra.mxu0 %v579
  %759 = vmatprep.subr.bf16.mxu0 0
  %760 = vmatpush1.bf16.msra.mxu0 %v580
  %761 = vmatprep.subr.bf16.mxu0 0
  %762 = vmatpush1.bf16.msra.mxu0 %v581
  %763 = vmatprep.subr.bf16.mxu0 0
  %764 = vmatpush1.bf16.msra.mxu0 %v582
  %765 = vmatprep.subr.bf16.mxu0 0
  %766 = vmatpush1.bf16.msra.mxu0 %v583
  %767 = vmatprep.subr.bf16.mxu0 0
  %768 = vmatpush1.bf16.msra.mxu0 %v584
  %769 = vmatprep.subr.bf16.mxu0 0
  %770 = vmatpush1.bf16.msra.mxu0 %v585
  %771 = vmatprep.subr.bf16.mxu0 0
  %772 = vmatpush1.bf16.msra.mxu0 %v586
  %773 = vmatprep.subr.bf16.mxu0 0
  %774 = vmatpush1.bf16.msra.mxu0 %v587
  %775 = vmatprep.subr.bf16.mxu0 0
  %776 = vmatpush1.bf16.msra.mxu0 %v588
  %777 = vmatprep.subr.bf16.mxu0 0
  %778 = vmatpush1.bf16.msra.mxu0 %v589
  %779 = vmatprep.subr.bf16.mxu0 0
  %780 = vmatpush1.bf16.msra.mxu0 %v590
  %781 = vmatprep.subr.bf16.mxu0 0
  %782 = vmatpush1.bf16.msra.mxu0 %v591
  %783 = vmatprep.subr.bf16.mxu0 0
  %784 = vmatpush1.bf16.msra.mxu0 %v592
  %785 = vmatprep.subr.bf16.mxu0 0
  %786 = vmatpush1.bf16.msra.mxu0 %v593
  %787 = vmatprep.mubr.bf16.mxu0 %v241
  %788 = vmatmul.mubr.bf16.gmra.mrb[0].mxu0 %v240
  %v789 = vpop.f32.mrb[0].mxu0
  %v790 = vadd.f32 %v741, %v789
  %v791 = vpop.f32.mrb[0].mxu0
  %v792 = vpop.f32.mrb[0].mxu0
  %v793 = vadd.f32 %v744, %v792
  %v794 = vpop.f32.mrb[0].mxu0
  %795 = vmatprep.mubr.bf16.mxu0 %v250
  %796 = vmatmul.mubr.bf16.gmra.mrb[0].mxu0 %v249
  %v797 = vpop.f32.mrb[0].mxu0
  %v798 = vadd.f32 %v749, %v797
  %v799 = vpop.f32.mrb[0].mxu0
  %v800 = vpop.f32.mrb[0].mxu0
  %v801 = vadd.f32 %v752, %v800
  %v802 = vpop.f32.mrb[0].mxu0
  %803 = vdwg.mxu0
  %804 = vmatprep.subr.bf16.mxu0 0
  %805 = vmatpush1.bf16.msra.mxu0 %v594
  %806 = vmatprep.subr.bf16.mxu0 0
  %807 = vmatpush1.bf16.msra.mxu0 %v595
  %808 = vmatprep.subr.bf16.mxu0 0
  %809 = vmatpush1.bf16.msra.mxu0 %v596
  %810 = vmatprep.subr.bf16.mxu0 0
  %811 = vmatpush1.bf16.msra.mxu0 %v597
  %812 = vmatprep.subr.bf16.mxu0 0
  %813 = vmatpush1.bf16.msra.mxu0 %v598
  %814 = vmatprep.subr.bf16.mxu0 0
  %815 = vmatpush1.bf16.msra.mxu0 %v599
  %816 = vmatprep.subr.bf16.mxu0 0
  %817 = vmatpush1.bf16.msra.mxu0 %v600
  %818 = vmatprep.subr.bf16.mxu0 0
  %819 = vmatpush1.bf16.msra.mxu0 %v601
  %820 = vmatprep.subr.bf16.mxu0 0
  %821 = vmatpush1.bf16.msra.mxu0 %v602
  %822 = vmatprep.subr.bf16.mxu0 0
  %823 = vmatpush1.bf16.msra.mxu0 %v603
  %824 = vmatprep.subr.bf16.mxu0 0
  %825 = vmatpush1.bf16.msra.mxu0 %v604
  %826 = vmatprep.subr.bf16.mxu0 0
  %827 = vmatpush1.bf16.msra.mxu0 %v605
  %828 = vmatprep.subr.bf16.mxu0 0
  %829 = vmatpush1.bf16.msra.mxu0 %v606
  %830 = vmatprep.subr.bf16.mxu0 0
  %831 = vmatpush1.bf16.msra.mxu0 %v607
  %832 = vmatprep.subr.bf16.mxu0 0
  %833 = vmatpush1.bf16.msra.mxu0 %v608
  %834 = vmatprep.subr.bf16.mxu0 0
  %835 = vmatpush1.bf16.msra.mxu0 %v609
  %836 = vmatprep.mubr.bf16.mxu0 %v243
  %837 = vmatmul.mubr.bf16.gmra.mrb[0].mxu0 %v242
  %v838 = vpop.f32.mrb[0].mxu0
  %v839 = vadd.f32 %v790, %v838
  %v840 = vpop.f32.mrb[0].mxu0
  %v841 = vpop.f32.mrb[0].mxu0
  %v842 = vadd.f32 %v793, %v841
  %v843 = vpop.f32.mrb[0].mxu0
  %844 = vmatprep.mubr.bf16.mxu0 %v252
  %845 = vmatmul.mubr.bf16.gmra.mrb[0].mxu0 %v251
  %v846 = vpop.f32.mrb[0].mxu0
  %v847 = vadd.f32 %v798, %v846
  %v848 = vpop.f32.mrb[0].mxu0
  %v849 = vpop.f32.mrb[0].mxu0
  %v850 = vadd.f32 %v801, %v849
  %v851 = vpop.f32.mrb[0].mxu0
  %852 = vdwg.mxu0
  %853 = vmatprep.subr.bf16.mxu0 0
  %854 = vmatpush1.bf16.msra.mxu0 %v610
  %855 = vmatprep.subr.bf16.mxu0 0
  %856 = vmatpush1.bf16.msra.mxu0 %v611
  %857 = vmatprep.subr.bf16.mxu0 0
  %858 = vmatpush1.bf16.msra.mxu0 %v612
  %859 = vmatprep.subr.bf16.mxu0 0
  %860 = vmatpush1.bf16.msra.mxu0 %v613
  %861 = vmatprep.subr.bf16.mxu0 0
  %862 = vmatpush1.bf16.msra.mxu0 %v614
  %863 = vmatprep.subr.bf16.mxu0 0
  %864 = vmatpush1.bf16.msra.mxu0 %v615
  %865 = vmatprep.subr.bf16.mxu0 0
  %866 = vmatpush1.bf16.msra.mxu0 %v616
  %867 = vmatprep.subr.bf16.mxu0 0
  %868 = vmatpush1.bf16.msra.mxu0 %v617
  %869 = vmatprep.subr.bf16.mxu0 0
  %870 = vmatpush1.bf16.msra.mxu0 %v618
  %871 = vmatprep.subr.bf16.mxu0 0
  %872 = vmatpush1.bf16.msra.mxu0 %v619
  %873 = vmatprep.subr.bf16.mxu0 0
  %874 = vmatpush1.bf16.msra.mxu0 %v620
  %875 = vmatprep.subr.bf16.mxu0 0
  %876 = vmatpush1.bf16.msra.mxu0 %v621
  %877 = vmatprep.subr.bf16.mxu0 0
  %878 = vmatpush1.bf16.msra.mxu0 %v622
  %879 = vmatprep.subr.bf16.mxu0 0
  %880 = vmatpush1.bf16.msra.mxu0 %v623
  %881 = vmatprep.subr.bf16.mxu0 0
  %882 = vmatpush1.bf16.msra.mxu0 %v624
  %883 = vmatprep.subr.bf16.mxu0 0
  %884 = vmatpush1.bf16.msra.mxu0 %v625
  %885 = vmatprep.mubr.bf16.mxu0 %v245
  %886 = vmatmul.mubr.bf16.gmra.mrb[0].mxu0 %v244
  %v887 = vpop.f32.mrb[0].mxu0
  %v888 = vadd.f32 %v839, %v887
  %v889 = vpop.f32.mrb[0].mxu0
  %v890 = vpop.f32.mrb[0].mxu0
  %v891 = vadd.f32 %v842, %v890
  %v892 = vpop.f32.mrb[0].mxu0
  %893 = vmatprep.mubr.bf16.mxu0 %v254
  %894 = vmatmul.mubr.bf16.gmra.mrb[0].mxu0 %v253
  %v895 = vpop.f32.mrb[0].mxu0
  %v896 = vadd.f32 %v847, %v895
  %v897 = vpop.f32.mrb[0].mxu0
  %v898 = vpop.f32.mrb[0].mxu0
  %v899 = vadd.f32 %v850, %v898
  %v900 = vpop.f32.mrb[0].mxu0
  %901 = vdwg.mxu0
  %902 = vmatprep.subr.bf16.mxu0 0
  %903 = vmatpush1.bf16.msra.mxu0 %v626
  %904 = vmatprep.subr.bf16.mxu0 0
  %905 = vmatpush1.bf16.msra.mxu0 %v627
  %906 = vmatprep.subr.bf16.mxu0 0
  %907 = vmatpush1.bf16.msra.mxu0 %v628
  %908 = vmatprep.subr.bf16.mxu0 0
  %909 = vmatpush1.bf16.msra.mxu0 %v629
  %910 = vmatprep.subr.bf16.mxu0 0
  %911 = vmatpush1.bf16.msra.mxu0 %v630
  %912 = vmatprep.subr.bf16.mxu0 0
  %913 = vmatpush1.bf16.msra.mxu0 %v631
  %914 = vmatprep.subr.bf16.mxu0 0
  %915 = vmatpush1.bf16.msra.mxu0 %v632
  %916 = vmatprep.subr.bf16.mxu0 0
  %917 = vmatpush1.bf16.msra.mxu0 %v633
  %918 = vmatprep.subr.bf16.mxu0 0
  %919 = vmatpush1.bf16.msra.mxu0 0
  %920 = vmatprep.subr.bf16.mxu0 0
  %921 = vmatpush1.bf16.msra.mxu0 0
  %922 = vmatprep.subr.bf16.mxu0 0
  %923 = vmatpush1.bf16.msra.mxu0 0
  %924 = vmatprep.subr.bf16.mxu0 0
  %925 = vmatpush1.bf16.msra.mxu0 0
  %926 = vmatprep.subr.bf16.mxu0 0
  %927 = vmatpush1.bf16.msra.mxu0 0
  %928 = vmatprep.subr.bf16.mxu0 0
  %929 = vmatpush1.bf16.msra.mxu0 0
  %930 = vmatprep.subr.bf16.mxu0 0
  %931 = vmatpush1.bf16.msra.mxu0 0
  %932 = vmatprep.subr.bf16.mxu0 0
  %933 = vmatpush1.bf16.msra.mxu0 0
  %934 = vmatprep.mubr.bf16.mxu0 0
  %935 = vmatmul.mubr.bf16.gmra.mrb[0].mxu0 %v246
  %v936 = vpop.f32.mrb[0].mxu0
  %v937 = vadd.f32 %v888, %v936
  %v938 = vpop.f32.mrb[0].mxu0
  %v939 = vpop.f32.mrb[0].mxu0
  %v940 = vadd.f32 %v891, %v939
  %v941 = vpop.f32.mrb[0].mxu0
  %942 = vmatprep.mubr.bf16.mxu0 0
  %943 = vmatmul.mubr.bf16.gmra.mrb[0].mxu0 %v255
  %v944 = vpop.f32.mrb[0].mxu0
  %v945 = vadd.f32 %v896, %v944
  %v946 = vpop.f32.mrb[0].mxu0
  %v947 = vpop.f32.mrb[0].mxu0
  %v948 = vadd.f32 %v899, %v947
  %v949 = vpop.f32.mrb[0].mxu0
  %950 = vdwg.mxu0
  %v951 = vld [vmem:[%s2] sm:$0x1]
  %v953 = vlaneseq
  %v954 = vshrl.u32 %v953, 7
  %v955 = vsub.s32 0, %v954
  %v956 = vrot.slane %v951, %v955
  %v958 = vmul.f32 %v937, %v956
  %v959 = vmul.f32 %v940, %v956
  %v960 = vmul.f32 %v945, %v956
  %v961 = vmul.f32 %v948, %v956
  %v962 = vld [vmem:[%s3] sm:$0x1]
  %v964 = vlaneseq
  %v965 = vshrl.u32 %v964, 7
  %v966 = vsub.s32 0, %v965
  %v967 = vrot.slane %v962, %v966
  %v969 = vadd.f32 %v958, %v967
  %v970 = vadd.f32 %v959, %v967
  %v971 = vadd.f32 %v960, %v967
  %v972 = vadd.f32 %v961, %v967
  %v973 = vmax.f32 %v969, 0.0
  %v974 = vmax.f32 %v970, 0.0
  %v975 = vmax.f32 %v971, 0.0
  %v976 = vmax.f32 %v972, 0.0
  %977 = vst [vmem:[%s4] sm:$0xff] %v973
  %978 = vst [vmem:[%s4 + $0x8] sm:$0xff] %v974
  %979 = vst [vmem:[%s4 + $0x10] sm:$0xff] %v975
  %980 = vst [vmem:[%s4 + $0x18] sm:$0xff] %v976
  // Predicated region
  $region18: #{_lambda_.16} parent=0 // pred_check
    _
  $region19: #{_lambda_.16} parent=0 // pred_check_branch
    %982 = sbr.rel (0) target = $region21
  $region20: #{_lambda_.16} parent=0 // pred_region
    _
  $region21: #{_lambda_.16} parent=0 // pred_fallthru
    _
  // Predicated region
  $region22: #{_lambda_.16} parent=0 // pred_check
    _
  $region23: #{_lambda_.16} parent=0 // pred_check_branch
    %984 = sbr.rel (0) target = $region25
  $region24: #{_lambda_.16} parent=0 // pred_region
    _
  $region25: #{_lambda_.16} parent=0 // pred_fallthru
    _

</llo_original>
